<compile_context>
chip_gen: v6e
topology: v6e:2x2x1
jax: 0.10.0
libtpu: 0.0.40
codegen_flags: <defaults>
</compile_context>

<pallas_src>
import math

import jax
import jax.numpy as jnp
from jax import lax
from jax.experimental import pallas as pl
from jax.experimental.pallas import tpu as pltpu

# ----------------------- small synthetic RoBERTa config -----------------------
VOCAB = 64
HIDDEN = 128          # lane-dense hidden size (roberta-base uses 768)
N_HEADS = 4
HEAD_DIM = HIDDEN // N_HEADS
N_LAYERS = 2
FFN = 256             # lane-dense FFN width
MAX_POS = 16
N_CLS = 3
N_CLS_PAD = 128       # padded class dim for lane-dense stores
SEQ = 8
BATCH = 2
NEG_INF = -1e9

HEAD_WIDTHS_LOGICAL = (700, 500, 200)   # from the PyTorch module
HEAD_WIDTHS_PADDED = (768, 512, 256)    # lane-dense (multiple of 128 / 256)


def _const_spec(shape):
    """Full-array block whose index is constant across the layer grid (DMA'd once)."""
    return pl.BlockSpec(shape, lambda l: (0,) * len(shape))


def _layer_spec(shape):
    """Per-layer block: leading dim indexed by the layer grid position."""
    n_rest = len(shape) - 1
    return pl.BlockSpec(shape, lambda l: (l,) + (0,) * n_rest)


def _ln(x, g, b, eps=1e-5):
    mu = jnp.mean(x, axis=-1, keepdims=True)
    var = jnp.mean(jnp.square(x - mu), axis=-1, keepdims=True)
    return (x - mu) * lax.rsqrt(var + eps) * g + b


# ------------------- single fused forward kernel (grid over layers) -----------
def _fused_forward_kernel(
    x_emb_ref, mask_ref, emb_g_ref, emb_b_ref,
    wqkv_ref, bqkv_ref, wo_h_ref, bo_ref, ln1g_ref, ln1b_ref,
    w1_ref, b1_ref, w2_ref, b2_ref, ln2g_ref, ln2b_ref,
    pw_ref, pb_ref, c1w_ref, c1b_ref, c2w_ref, c2b_ref,
    c3w_ref, c3b_ref, ow_ref, ob_ref,
    o_ref,
    x_scr,
):
    l = pl.program_id(0)

    # ---- embedding LayerNorm, once, into the resident activation scratch ----
    @pl.when(l == 0)
    def _():
        x_scr[...] = _ln(x_emb_ref[...], emb_g_ref[...], emb_b_ref[...])

    x = x_scr[...]                              # (B*S, H) f32, resident across layers
    xb = x.astype(jnp.bfloat16)

    # ---- fused QKV projection (bf16 MXU, f32 accumulate); scale folded in Wq ----
    qkv = jnp.dot(xb, wqkv_ref[0], preferred_element_type=jnp.float32) + bqkv_ref[0]
    q = qkv[:, :HIDDEN]
    k = qkv[:, HIDDEN:2 * HIDDEN]
    v = qkv[:, 2 * HIDDEN:]

    # heads stacked along a new leading (major) axis — no lane-dim concat
    def heads(m):
        return jnp.stack(
            [m[:, h * HEAD_DIM:(h + 1) * HEAD_DIM] for h in range(N_HEADS)],
            axis=0).astype(jnp.bfloat16)        # (N_HEADS, B*S, HEAD_DIM)

    qh, kh, vh = heads(q), heads(k), heads(v)

    # head-batched attention; block-diagonal mask handles batch separation + padding
    s = jnp.einsum('hqd,hkd->hqk', qh, kh,
                   preferred_element_type=jnp.float32)        # (NH, BS, BS)
    s = s + mask_ref[...]                                     # (1, BS, BS) broadcast
    s = s - jnp.max(s, axis=-1, keepdims=True)
    e = jnp.exp(s)
    p_attn = e * pl.reciprocal(jnp.sum(e, axis=-1, keepdims=True), approx=True)
    ctx = jnp.einsum('hqk,hkd->hqd', p_attn.astype(jnp.bfloat16), vh,
                     preferred_element_type=jnp.float32)      # (NH, BS, HEAD_DIM)

    # head-merge folded into output projection: attn = sum_h ctx_h @ Wo[h*HD:(h+1)*HD, :]
    attn_h = jnp.einsum('hqd,hdo->hqo', ctx.astype(jnp.bfloat16), wo_h_ref[0],
                        preferred_element_type=jnp.float32)   # (NH, BS, H)
    attn = bo_ref[0]
    for hh in range(N_HEADS):                                 # unrolled major-axis sum
        attn = attn + attn_h[hh]

    x1 = _ln(attn + x, ln1g_ref[0], ln1b_ref[0])

    # ---- GELU FFN + residual LayerNorm ----
    # TODO(synk): jax.nn.gelu uses the tanh approximation; PyTorch nn.GELU default is exact erf.
    h1 = jax.nn.gelu(jnp.dot(x1.astype(jnp.bfloat16), w1_ref[0],
                             preferred_element_type=jnp.float32) + b1_ref[0])
    ffn = jnp.dot(h1.astype(jnp.bfloat16), w2_ref[0],
                  preferred_element_type=jnp.float32) + b2_ref[0]
    x_new = _ln(ffn + x1, ln2g_ref[0], ln2b_ref[0])
    x_scr[...] = x_new

    # ---- pooler + classifier + softmax, fused into the last layer's epilogue ----
    @pl.when(l == pl.num_programs(0) - 1)
    def _():
        xb2 = x_new.astype(jnp.bfloat16)        # full 16-row slab (CLS rows picked outside)
        pooled = jnp.tanh(jnp.dot(xb2, pw_ref[...],
                                  preferred_element_type=jnp.float32) + pb_ref[...])
        # Dropout(p=0.3) between layers is identity in eval mode.
        h = jnp.dot(pooled.astype(jnp.bfloat16), c1w_ref[...],
                    preferred_element_type=jnp.float32) + c1b_ref[...]
        h = jnp.dot(h.astype(jnp.bfloat16), c2w_ref[...],
                    preferred_element_type=jnp.float32) + c2b_ref[...]
        h = jnp.dot(h.astype(jnp.bfloat16), c3w_ref[...],
                    preferred_element_type=jnp.float32) + c3b_ref[...]
        logits = jnp.dot(h.astype(jnp.bfloat16), ow_ref[...],
                         preferred_element_type=jnp.float32) + ob_ref[...]
        # padded class logits are -1e9 (via out_b), so softmax over padded width is exact
        logits = logits - jnp.max(logits, axis=-1, keepdims=True)
        ez = jnp.exp(logits)
        o_ref[...] = (ez / jnp.sum(ez, axis=-1, keepdims=True)).astype(o_ref.dtype)  # exact divide


def fused_forward(x_emb, add_mask, params):
    BS, H = x_emb.shape
    L = params["layers"]
    p1, p2, p3 = HEAD_WIDTHS_PADDED
    return pl.pallas_call(
        _fused_forward_kernel,
        out_shape=jax.ShapeDtypeStruct((BS, N_CLS_PAD), jnp.float32),
        grid=(N_LAYERS,),
        in_specs=[
            _const_spec((BS, H)),                 # summed embeddings
            _const_spec((1, BS, BS)),             # block-diag additive attention mask
            _const_spec((1, H)), _const_spec((1, H)),        # embedding LN
            _layer_spec((1, H, 3 * H)), _layer_spec((1, 1, 3 * H)),      # QKV
            _layer_spec((1, N_HEADS, HEAD_DIM, H)), _layer_spec((1, 1, H)),  # Wo (per-head) / bo
            _layer_spec((1, 1, H)), _layer_spec((1, 1, H)),              # LN1
            _layer_spec((1, H, FFN)), _layer_spec((1, 1, FFN)),          # FFN up
            _layer_spec((1, FFN, H)), _layer_spec((1, 1, H)),            # FFN down
            _layer_spec((1, 1, H)), _layer_spec((1, 1, H)),              # LN2
            _const_spec((H, H)), _const_spec((1, H)),                    # pooler
            _const_spec((H, p1)), _const_spec((1, p1)),                  # l1
            _const_spec((p1, p2)), _const_spec((1, p2)),                 # l2
            _const_spec((p2, p3)), _const_spec((1, p3)),                 # l3
            _const_spec((p3, N_CLS_PAD)), _const_spec((1, N_CLS_PAD)),   # out
        ],
        out_specs=_const_spec((BS, N_CLS_PAD)),
        scratch_shapes=[pltpu.VMEM((BS, H), jnp.float32)],   # resident activation slab
        compiler_params=pltpu.CompilerParams(dimension_semantics=("arbitrary",)),
    )(x_emb, add_mask, params["emb_ln_g"], params["emb_ln_b"],
      L["wqkv"], L["bqkv"], L["wo_heads"], L["bo"], L["ln1_g"], L["ln1_b"],
      L["w1"], L["b1"], L["w2"], L["b2"], L["ln2_g"], L["ln2_b"],
      params["pool_w"], params["pool_b"], params["l1_w"], params["l1_b"],
      params["l2_w"], params["l2_b"], params["l3_w"], params["l3_b"],
      params["out_w"], params["out_b"])


# ----------------------------- parameter creation -----------------------------
def init_params(key):
    def nrm(k, shape, scale=0.02):
        return scale * jax.random.normal(k, shape, dtype=jnp.float32)

    def pad_to(w, shape):
        return jnp.zeros(shape, jnp.float32).at[:w.shape[0], :w.shape[1]].set(w)

    keys = iter(jax.random.split(key, 256))
    H = HIDDEN
    attn_scale = 1.0 / math.sqrt(HEAD_DIM)

    p = {
        "word_emb": nrm(next(keys), (VOCAB, H)),
        "pos_emb": nrm(next(keys), (MAX_POS, H)),
        "type_emb": nrm(next(keys), (1, H)),
        "emb_ln_g": jnp.ones((1, H), jnp.float32),
        "emb_ln_b": jnp.zeros((1, H), jnp.float32),
        "pool_w": nrm(next(keys), (H, H)).astype(jnp.bfloat16),
        "pool_b": jnp.zeros((1, H), jnp.float32),
    }
    # classifier head hidden->700->500->200->n_cls, zero-padded to 768/512/256/128
    d1, d2, d3 = HEAD_WIDTHS_LOGICAL
    p1, p2, p3 = HEAD_WIDTHS_PADDED
    p["l1_w"] = pad_to(nrm(next(keys), (H, d1)), (H, p1)).astype(jnp.bfloat16)
    p["l1_b"] = jnp.zeros((1, p1), jnp.float32)
    p["l2_w"] = pad_to(nrm(next(keys), (d1, d2)), (p1, p2)).astype(jnp.bfloat16)
    p["l2_b"] = jnp.zeros((1, p2), jnp.float32)
    p["l3_w"] = pad_to(nrm(next(keys), (d2, d3)), (p2, p3)).astype(jnp.bfloat16)
    p["l3_b"] = jnp.zeros((1, p3), jnp.float32)
    p["out_w"] = pad_to(nrm(next(keys), (d3, N_CLS)), (p3, N_CLS_PAD)).astype(jnp.bfloat16)
    p["out_b"] = jnp.full((1, N_CLS_PAD), NEG_INF, jnp.float32).at[0, :N_CLS].set(0.0)

    # encoder layers, stacked along a leading [L, ...] axis for the layer grid
    wqkv, bqkv, wo_h, bo, ln1g, ln1b, w1, b1, w2, b2, ln2g, ln2b = ([] for _ in range(12))
    for _ in range(N_LAYERS):
        wq, wk, wv = (nrm(next(keys), (H, H)) for _ in range(3))
        bq, bk, bv = (jnp.zeros((1, H), jnp.float32) for _ in range(3))
        # 1/sqrt(head_dim) folded into the Q columns (weight AND bias)
        wqkv.append(jnp.concatenate([wq * attn_scale, wk, wv], axis=1).astype(jnp.bfloat16))
        bqkv.append(jnp.concatenate([bq * attn_scale, bk, bv], axis=1))
        wo_h.append(nrm(next(keys), (H, H)).reshape(N_HEADS, HEAD_DIM, H).astype(jnp.bfloat16))
        bo.append(jnp.zeros((1, H), jnp.float32))
        ln1g.append(jnp.ones((1, H), jnp.float32)); ln1b.append(jnp.zeros((1, H), jnp.float32))
        w1.append(nrm(next(keys), (H, FFN)).astype(jnp.bfloat16))
        b1.append(jnp.zeros((1, FFN), jnp.float32))
        w2.append(nrm(next(keys), (FFN, H)).astype(jnp.bfloat16))
        b2.append(jnp.zeros((1, H), jnp.float32))
        ln2g.append(jnp.ones((1, H), jnp.float32)); ln2b.append(jnp.zeros((1, H), jnp.float32))

    p["layers"] = {
        "wqkv": jnp.stack(wqkv), "bqkv": jnp.stack(bqkv),
        "wo_heads": jnp.stack(wo_h), "bo": jnp.stack(bo),
        "ln1_g": jnp.stack(ln1g), "ln1_b": jnp.stack(ln1b),
        "w1": jnp.stack(w1), "b1": jnp.stack(b1),
        "w2": jnp.stack(w2), "b2": jnp.stack(b2),
        "ln2_g": jnp.stack(ln2g), "ln2_b": jnp.stack(ln2b),
    }
    return p


# --------------------------------- forward ------------------------------------
def sentiment_classifier_forward(params, input_ids, attention_mask):
    B, S = input_ids.shape
    H = HIDDEN

    # embeddings (gather = glue in JAX); LayerNorm happens inside the fused kernel
    # TODO(synk): real RoBERTa offsets position ids by padding_idx; synthetic weights use raw arange.
    positions = jnp.arange(S, dtype=jnp.int32)
    emb = (params["word_emb"][input_ids]
           + params["pos_emb"][positions][None, :, :]
           + params["type_emb"][0][None, None, :])
    x_emb = emb.reshape(B * S, H).astype(jnp.float32)

    # block-diagonal additive mask: cross-batch attention and padded keys get -1e9
    batch_ids = jnp.repeat(jnp.arange(B, dtype=jnp.int32), S)         # (B*S,)
    key_ok = attention_mask.reshape(-1) > 0                           # (B*S,)
    allowed = (batch_ids[:, None] == batch_ids[None, :]) & key_ok[None, :]
    add_mask = jnp.where(allowed, 0.0, NEG_INF).astype(jnp.float32)[None]  # (1, B*S, B*S)

    probs_all = fused_forward(x_emb, add_mask, params)                # (B*S, 128)
    # pooler/classifier were computed on every row; keep only the CLS rows & real classes
    probs = probs_all.reshape(B, S, N_CLS_PAD)[:, 0, :N_CLS]          # softmax over dim=1
    return probs


# ----------------------------------- main --------------------------------------
if __name__ == "__main__":
    key = jax.random.PRNGKey(0)
    pkey, ikey = jax.random.split(key)
    params = init_params(pkey)

    input_ids = jax.random.randint(ikey, (BATCH, SEQ), 0, VOCAB, dtype=jnp.int32)
    attention_mask = jnp.ones((BATCH, SEQ), dtype=jnp.int32).at[1, 6:].set(0)

    probs = jax.jit(sentiment_classifier_forward)(params, input_ids, attention_mask)
    probs = jax.block_until_ready(probs)

    assert probs.shape == (BATCH, N_CLS)
    assert bool(jnp.all(jnp.isfinite(probs)))
    assert bool(jnp.allclose(jnp.sum(probs, axis=1), 1.0, atol=1e-5))
    print("KERNEL_OK")
</pallas_src>

<mosaic_0001>
module attributes {stable_mosaic.version = 11 : i64} {
  func.func @_fused_forward_kernel(%arg0: i32, %arg1: memref<16x128xf32, #tpu.memory_space<vmem>>, %arg2: memref<1x16x16xf32, #tpu.memory_space<vmem>>, %arg3: memref<1x128xf32, #tpu.memory_space<vmem>>, %arg4: memref<1x128xf32, #tpu.memory_space<vmem>>, %arg5: memref<1x128x384xbf16, #tpu.memory_space<vmem>>, %arg6: memref<1x1x384xf32, #tpu.memory_space<vmem>>, %arg7: memref<1x4x32x128xbf16, #tpu.memory_space<vmem>>, %arg8: memref<1x1x128xf32, #tpu.memory_space<vmem>>, %arg9: memref<1x1x128xf32, #tpu.memory_space<vmem>>, %arg10: memref<1x1x128xf32, #tpu.memory_space<vmem>>, %arg11: memref<1x128x256xbf16, #tpu.memory_space<vmem>>, %arg12: memref<1x1x256xf32, #tpu.memory_space<vmem>>, %arg13: memref<1x256x128xbf16, #tpu.memory_space<vmem>>, %arg14: memref<1x1x128xf32, #tpu.memory_space<vmem>>, %arg15: memref<1x1x128xf32, #tpu.memory_space<vmem>>, %arg16: memref<1x1x128xf32, #tpu.memory_space<vmem>>, %arg17: memref<128x128xbf16, #tpu.memory_space<vmem>>, %arg18: memref<1x128xf32, #tpu.memory_space<vmem>>, %arg19: memref<128x768xbf16, #tpu.memory_space<vmem>>, %arg20: memref<1x768xf32, #tpu.memory_space<vmem>>, %arg21: memref<768x512xbf16, #tpu.memory_space<vmem>>, %arg22: memref<1x512xf32, #tpu.memory_space<vmem>>, %arg23: memref<512x256xbf16, #tpu.memory_space<vmem>>, %arg24: memref<1x256xf32, #tpu.memory_space<vmem>>, %arg25: memref<256x128xbf16, #tpu.memory_space<vmem>>, %arg26: memref<1x128xf32, #tpu.memory_space<vmem>>, %arg27: memref<16x128xf32, #tpu.memory_space<vmem>>, %arg28: memref<16x128xf32, #tpu.memory_space<vmem>>) attributes {dimension_semantics = [#tpu.dimension_semantics<arbitrary>], iteration_bounds = array<i64: 2>, scalar_prefetch = 0 : i64, scratch_operands = 1 : i64, tpu.core_type = #tpu.core_type<tc>, window_params = [{pipeline_mode = #tpu.pipeline_mode<synchronous>, transform_indices = @transform_0, window_bounds = array<i64: 16, 128>}, {pipeline_mode = #tpu.pipeline_mode<synchronous>, transform_indices = @transform_1, window_bounds = array<i64: 1, 16, 16>}, {pipeline_mode = #tpu.pipeline_mode<synchronous>, transform_indices = @transform_2, window_bounds = array<i64: 1, 128>}, {pipeline_mode = #tpu.pipeline_mode<synchronous>, transform_indices = @transform_3, window_bounds = array<i64: 1, 128>}, {transform_indices = @transform_4, window_bounds = array<i64: 1, 128, 384>}, {transform_indices = @transform_5, window_bounds = array<i64: 1, 1, 384>}, {transform_indices = @transform_6, window_bounds = array<i64: 1, 4, 32, 128>}, {transform_indices = @transform_7, window_bounds = array<i64: 1, 1, 128>}, {transform_indices = @transform_8, window_bounds = array<i64: 1, 1, 128>}, {transform_indices = @transform_9, window_bounds = array<i64: 1, 1, 128>}, {transform_indices = @transform_10, window_bounds = array<i64: 1, 128, 256>}, {transform_indices = @transform_11, window_bounds = array<i64: 1, 1, 256>}, {transform_indices = @transform_12, window_bounds = array<i64: 1, 256, 128>}, {transform_indices = @transform_13, window_bounds = array<i64: 1, 1, 128>}, {transform_indices = @transform_14, window_bounds = array<i64: 1, 1, 128>}, {transform_indices = @transform_15, window_bounds = array<i64: 1, 1, 128>}, {pipeline_mode = #tpu.pipeline_mode<synchronous>, transform_indices = @transform_16, window_bounds = array<i64: 128, 128>}, {pipeline_mode = #tpu.pipeline_mode<synchronous>, transform_indices = @transform_17, window_bounds = array<i64: 1, 128>}, {pipeline_mode = #tpu.pipeline_mode<synchronous>, transform_indices = @transform_18, window_bounds = array<i64: 128, 768>}, {pipeline_mode = #tpu.pipeline_mode<synchronous>, transform_indices = @transform_19, window_bounds = array<i64: 1, 768>}, {pipeline_mode = #tpu.pipeline_mode<synchronous>, transform_indices = @transform_20, window_bounds = array<i64: 768, 512>}, {pipeline_mode = #tpu.pipeline_mode<synchronous>, transform_indices = @transform_21, window_bounds = array<i64: 1, 512>}, {pipeline_mode = #tpu.pipeline_mode<synchronous>, transform_indices = @transform_22, window_bounds = array<i64: 512, 256>}, {pipeline_mode = #tpu.pipeline_mode<synchronous>, transform_indices = @transform_23, window_bounds = array<i64: 1, 256>}, {pipeline_mode = #tpu.pipeline_mode<synchronous>, transform_indices = @transform_24, window_bounds = array<i64: 256, 128>}, {pipeline_mode = #tpu.pipeline_mode<synchronous>, transform_indices = @transform_25, window_bounds = array<i64: 1, 128>}, {pipeline_mode = #tpu.pipeline_mode<synchronous>, transform_indices = @transform_26, window_bounds = array<i64: 16, 128>}]} {
    %c0_i32 = arith.constant 0 : i32
    %0 = arith.cmpi eq, %arg0, %c0_i32 : i32
    %1 = arith.extui %0 : i1 to i32
    %c0_i32_0 = arith.constant 0 : i32
    %2 = arith.cmpi ne, %1, %c0_i32_0 : i32
    scf.if %2 {
      %c0_66 = arith.constant 0 : index
      %c0_67 = arith.constant 0 : index
      %167 = vector.load %arg1[%c0_66, %c0_67] : memref<16x128xf32, #tpu.memory_space<vmem>>, vector<16x128xf32>
      %c0_68 = arith.constant 0 : index
      %c0_69 = arith.constant 0 : index
      %168 = vector.load %arg3[%c0_68, %c0_69] : memref<1x128xf32, #tpu.memory_space<vmem>>, vector<1x128xf32>
      %c0_70 = arith.constant 0 : index
      %c0_71 = arith.constant 0 : index
      %169 = vector.load %arg4[%c0_70, %c0_71] : memref<1x128xf32, #tpu.memory_space<vmem>>, vector<1x128xf32>
      %cst_72 = arith.constant dense<0.000000e+00> : vector<16xf32>
      %170 = vector.multi_reduction <add>, %167, %cst_72 [1] : vector<16x128xf32> to vector<16xf32>
      %171 = vector.shape_cast %170 : vector<16xf32> to vector<16x1xf32>
      %cst_73 = arith.constant 1.280000e+02 : f32
      %172 = vector.broadcast %cst_73 : f32 to vector<16x1xf32>
      %173 = arith.divf %171, %172 : vector<16x1xf32>
      %174 = vector.broadcast %173 : vector<16x1xf32> to vector<16x128xf32>
      %175 = arith.subf %167, %174 : vector<16x128xf32>
      %176 = arith.mulf %175, %175 : vector<16x128xf32>
      %cst_74 = arith.constant dense<0.000000e+00> : vector<16xf32>
      %177 = vector.multi_reduction <add>, %176, %cst_74 [1] : vector<16x128xf32> to vector<16xf32>
      %178 = vector.shape_cast %177 : vector<16xf32> to vector<16x1xf32>
      %cst_75 = arith.constant 1.280000e+02 : f32
      %179 = vector.broadcast %cst_75 : f32 to vector<16x1xf32>
      %180 = arith.divf %178, %179 : vector<16x1xf32>
      %181 = vector.broadcast %173 : vector<16x1xf32> to vector<16x128xf32>
      %182 = arith.subf %167, %181 : vector<16x128xf32>
      %cst_76 = arith.constant 9.99999974E-6 : f32
      %183 = vector.broadcast %cst_76 : f32 to vector<16x1xf32>
      %184 = arith.addf %180, %183 : vector<16x1xf32>
      %185 = math.rsqrt %184 : vector<16x1xf32>
      %186 = vector.broadcast %185 : vector<16x1xf32> to vector<16x128xf32>
      %187 = arith.mulf %182, %186 : vector<16x128xf32>
      %188 = vector.broadcast %168 : vector<1x128xf32> to vector<16x128xf32>
      %189 = arith.mulf %187, %188 : vector<16x128xf32>
      %190 = vector.broadcast %169 : vector<1x128xf32> to vector<16x128xf32>
      %191 = arith.addf %189, %190 : vector<16x128xf32>
      %c0_77 = arith.constant 0 : index
      %c0_78 = arith.constant 0 : index
      %192 = vector.load %arg28[%c0_77, %c0_78] : memref<16x128xf32, #tpu.memory_space<vmem>>, vector<16x128xf32>
      tpu.vector_store %arg28[%c0_77, %c0_78], %191 {strides = array<i32>} : memref<16x128xf32, #tpu.memory_space<vmem>>, vector<16x128xf32>,
    } else {
    }
    %c0 = arith.constant 0 : index
    %c0_1 = arith.constant 0 : index
    %3 = vector.load %arg28[%c0, %c0_1] : memref<16x128xf32, #tpu.memory_space<vmem>>, vector<16x128xf32>
    %4 = arith.truncf %3 : vector<16x128xf32> to vector<16x128xbf16>
    %c0_2 = arith.constant 0 : index
    %c0_3 = arith.constant 0 : index
    %c0_4 = arith.constant 0 : index
    %5 = vector.load %arg5[%c0_2, %c0_3, %c0_4] : memref<1x128x384xbf16, #tpu.memory_space<vmem>>, vector<1x128x384xbf16>
    %6 = vector.shape_cast %5 : vector<1x128x384xbf16> to vector<128x384xbf16>
    %cst = arith.constant dense<0.000000e+00> : vector<16x384xf32>
    %7 = tpu.matmul %4, %6, %cst {dimension_numbers = #tpu.dot_dimension_numbers<[1], [0], [0], [1], [0, 0, 1, 1], [], []>} : vector<16x128xbf16>, vector<128x384xbf16>, vector<16x384xf32> -> vector<16x384xf32>
    %c0_5 = arith.constant 0 : index
    %c0_6 = arith.constant 0 : index
    %c0_7 = arith.constant 0 : index
    %8 = vector.load %arg6[%c0_5, %c0_6, %c0_7] : memref<1x1x384xf32, #tpu.memory_space<vmem>>, vector<1x1x384xf32>
    %9 = vector.shape_cast %8 : vector<1x1x384xf32> to vector<1x384xf32>
    %10 = vector.broadcast %9 : vector<1x384xf32> to vector<16x384xf32>
    %11 = arith.addf %7, %10 : vector<16x384xf32>
    %12 = vector.extract_strided_slice %11 {offsets = [0, 0], sizes = [16, 128], strides = [1, 1]} : vector<16x384xf32> to vector<16x128xf32>
    %13 = vector.extract_strided_slice %11 {offsets = [0, 128], sizes = [16, 128], strides = [1, 1]} : vector<16x384xf32> to vector<16x128xf32>
    %14 = vector.extract_strided_slice %11 {offsets = [0, 256], sizes = [16, 128], strides = [1, 1]} : vector<16x384xf32> to vector<16x128xf32>
    %15 = vector.extract_strided_slice %12 {offsets = [0, 0], sizes = [16, 32], strides = [1, 1]} : vector<16x128xf32> to vector<16x32xf32>
    %16 = vector.extract_strided_slice %12 {offsets = [0, 32], sizes = [16, 32], strides = [1, 1]} : vector<16x128xf32> to vector<16x32xf32>
    %17 = vector.extract_strided_slice %12 {offsets = [0, 64], sizes = [16, 32], strides = [1, 1]} : vector<16x128xf32> to vector<16x32xf32>
    %18 = vector.extract_strided_slice %12 {offsets = [0, 96], sizes = [16, 32], strides = [1, 1]} : vector<16x128xf32> to vector<16x32xf32>
    %19 = vector.shape_cast %15 : vector<16x32xf32> to vector<1x16x32xf32>
    %20 = vector.shape_cast %16 : vector<16x32xf32> to vector<1x16x32xf32>
    %21 = vector.shape_cast %17 : vector<16x32xf32> to vector<1x16x32xf32>
    %22 = vector.shape_cast %18 : vector<16x32xf32> to vector<1x16x32xf32>
    %23 = tpu.concatenate %19, %20, %21, %22 in 0 : vector<1x16x32xf32>, vector<1x16x32xf32>, vector<1x16x32xf32>, vector<1x16x32xf32> -> vector<4x16x32xf32>
    %24 = arith.truncf %23 : vector<4x16x32xf32> to vector<4x16x32xbf16>
    %25 = vector.extract_strided_slice %13 {offsets = [0, 0], sizes = [16, 32], strides = [1, 1]} : vector<16x128xf32> to vector<16x32xf32>
    %26 = vector.extract_strided_slice %13 {offsets = [0, 32], sizes = [16, 32], strides = [1, 1]} : vector<16x128xf32> to vector<16x32xf32>
    %27 = vector.extract_strided_slice %13 {offsets = [0, 64], sizes = [16, 32], strides = [1, 1]} : vector<16x128xf32> to vector<16x32xf32>
    %28 = vector.extract_strided_slice %13 {offsets = [0, 96], sizes = [16, 32], strides = [1, 1]} : vector<16x128xf32> to vector<16x32xf32>
    %29 = vector.shape_cast %25 : vector<16x32xf32> to vector<1x16x32xf32>
    %30 = vector.shape_cast %26 : vector<16x32xf32> to vector<1x16x32xf32>
    %31 = vector.shape_cast %27 : vector<16x32xf32> to vector<1x16x32xf32>
    %32 = vector.shape_cast %28 : vector<16x32xf32> to vector<1x16x32xf32>
    %33 = tpu.concatenate %29, %30, %31, %32 in 0 : vector<1x16x32xf32>, vector<1x16x32xf32>, vector<1x16x32xf32>, vector<1x16x32xf32> -> vector<4x16x32xf32>
    %34 = arith.truncf %33 : vector<4x16x32xf32> to vector<4x16x32xbf16>
    %35 = vector.extract_strided_slice %14 {offsets = [0, 0], sizes = [16, 32], strides = [1, 1]} : vector<16x128xf32> to vector<16x32xf32>
    %36 = vector.extract_strided_slice %14 {offsets = [0, 32], sizes = [16, 32], strides = [1, 1]} : vector<16x128xf32> to vector<16x32xf32>
    %37 = vector.extract_strided_slice %14 {offsets = [0, 64], sizes = [16, 32], strides = [1, 1]} : vector<16x128xf32> to vector<16x32xf32>
    %38 = vector.extract_strided_slice %14 {offsets = [0, 96], sizes = [16, 32], strides = [1, 1]} : vector<16x128xf32> to vector<16x32xf32>
    %39 = vector.shape_cast %35 : vector<16x32xf32> to vector<1x16x32xf32>
    %40 = vector.shape_cast %36 : vector<16x32xf32> to vector<1x16x32xf32>
    %41 = vector.shape_cast %37 : vector<16x32xf32> to vector<1x16x32xf32>
    %42 = vector.shape_cast %38 : vector<16x32xf32> to vector<1x16x32xf32>
    %43 = tpu.concatenate %39, %40, %41, %42 in 0 : vector<1x16x32xf32>, vector<1x16x32xf32>, vector<1x16x32xf32>, vector<1x16x32xf32> -> vector<4x16x32xf32>
    %44 = arith.truncf %43 : vector<4x16x32xf32> to vector<4x16x32xbf16>
    "tpu.trace_start"() <{level = 10 : i32, message = "hqd,hkd->hqk"}> : () -> ()
    %cst_8 = arith.constant dense<0.000000e+00> : vector<4x16x16xf32>
    %45 = tpu.matmul %24, %34, %cst_8 {dimension_numbers = #tpu.dot_dimension_numbers<[2], [2], [1], [1], [0, 0, 0, 1, 1, 1], [0], [0]>} : vector<4x16x32xbf16>, vector<4x16x32xbf16>, vector<4x16x16xf32> -> vector<4x16x16xf32>
    "tpu.trace_stop"() : () -> ()
    %c0_9 = arith.constant 0 : index
    %c0_10 = arith.constant 0 : index
    %c0_11 = arith.constant 0 : index
    %46 = vector.load %arg2[%c0_9, %c0_10, %c0_11] : memref<1x16x16xf32, #tpu.memory_space<vmem>>, vector<1x16x16xf32>
    %47 = vector.broadcast %46 : vector<1x16x16xf32> to vector<4x16x16xf32>
    %48 = arith.addf %45, %47 : vector<4x16x16xf32>
    %cst_12 = arith.constant dense<0xFF800000> : vector<4x16xf32>
    %49 = vector.multi_reduction <maximumf>, %48, %cst_12 [2] : vector<4x16x16xf32> to vector<4x16xf32>
    %50 = vector.shape_cast %49 : vector<4x16xf32> to vector<4x16x1xf32>
    %51 = vector.broadcast %50 : vector<4x16x1xf32> to vector<4x16x16xf32>
    %52 = arith.subf %48, %51 : vector<4x16x16xf32>
    %53 = math.exp %52 : vector<4x16x16xf32>
    %cst_13 = arith.constant dense<0.000000e+00> : vector<4x16xf32>
    %54 = vector.multi_reduction <add>, %53, %cst_13 [2] : vector<4x16x16xf32> to vector<4x16xf32>
    %55 = vector.shape_cast %54 : vector<4x16xf32> to vector<4x16x1xf32>
    %56 = tpu.reciprocal %55 {approx = true} : vector<4x16x1xf32> -> vector<4x16x1xf32>
    %57 = vector.broadcast %56 : vector<4x16x1xf32> to vector<4x16x16xf32>
    %58 = arith.mulf %53, %57 : vector<4x16x16xf32>
    %59 = arith.truncf %58 : vector<4x16x16xf32> to vector<4x16x16xbf16>
    "tpu.trace_start"() <{level = 10 : i32, message = "hqk,hkd->hqd"}> : () -> ()
    %cst_14 = arith.constant dense<0.000000e+00> : vector<4x16x32xf32>
    %60 = tpu.matmul %59, %44, %cst_14 {dimension_numbers = #tpu.dot_dimension_numbers<[2], [1], [1], [2], [0, 0, 0, 1, 1, 2], [0], [0]>} : vector<4x16x16xbf16>, vector<4x16x32xbf16>, vector<4x16x32xf32> -> vector<4x16x32xf32>
    "tpu.trace_stop"() : () -> ()
    %61 = arith.truncf %60 : vector<4x16x32xf32> to vector<4x16x32xbf16>
    %c0_15 = arith.constant 0 : index
    %c0_16 = arith.constant 0 : index
    %c0_17 = arith.constant 0 : index
    %c0_18 = arith.constant 0 : index
    %62 = vector.load %arg7[%c0_15, %c0_16, %c0_17, %c0_18] : memref<1x4x32x128xbf16, #tpu.memory_space<vmem>>, vector<1x4x32x128xbf16>
    %63 = vector.shape_cast %62 : vector<1x4x32x128xbf16> to vector<4x32x128xbf16>
    "tpu.trace_start"() <{level = 10 : i32, message = "hqd,hdo->hqo"}> : () -> ()
    %cst_19 = arith.constant dense<0.000000e+00> : vector<4x16x128xf32>
    %64 = tpu.matmul %61, %63, %cst_19 {dimension_numbers = #tpu.dot_dimension_numbers<[2], [1], [1], [2], [0, 0, 0, 1, 1, 2], [0], [0]>} : vector<4x16x32xbf16>, vector<4x32x128xbf16>, vector<4x16x128xf32> -> vector<4x16x128xf32>
    "tpu.trace_stop"() : () -> ()
    %c0_20 = arith.constant 0 : index
    %c0_21 = arith.constant 0 : index
    %c0_22 = arith.constant 0 : index
    %65 = vector.load %arg8[%c0_20, %c0_21, %c0_22] : memref<1x1x128xf32, #tpu.memory_space<vmem>>, vector<1x1x128xf32>
    %66 = vector.shape_cast %65 : vector<1x1x128xf32> to vector<1x128xf32>
    %67 = vector.extract_strided_slice %64 {offsets = [0, 0, 0], sizes = [1, 16, 128], strides = [1, 1, 1]} : vector<4x16x128xf32> to vector<1x16x128xf32>
    %68 = vector.shape_cast %67 : vector<1x16x128xf32> to vector<16x128xf32>
    %69 = vector.broadcast %66 : vector<1x128xf32> to vector<16x128xf32>
    %70 = arith.addf %69, %68 : vector<16x128xf32>
    %71 = vector.extract_strided_slice %64 {offsets = [1, 0, 0], sizes = [1, 16, 128], strides = [1, 1, 1]} : vector<4x16x128xf32> to vector<1x16x128xf32>
    %72 = vector.shape_cast %71 : vector<1x16x128xf32> to vector<16x128xf32>
    %73 = arith.addf %70, %72 : vector<16x128xf32>
    %74 = vector.extract_strided_slice %64 {offsets = [2, 0, 0], sizes = [1, 16, 128], strides = [1, 1, 1]} : vector<4x16x128xf32> to vector<1x16x128xf32>
    %75 = vector.shape_cast %74 : vector<1x16x128xf32> to vector<16x128xf32>
    %76 = arith.addf %73, %75 : vector<16x128xf32>
    %77 = vector.extract_strided_slice %64 {offsets = [3, 0, 0], sizes = [1, 16, 128], strides = [1, 1, 1]} : vector<4x16x128xf32> to vector<1x16x128xf32>
    %78 = vector.shape_cast %77 : vector<1x16x128xf32> to vector<16x128xf32>
    %79 = arith.addf %76, %78 : vector<16x128xf32>
    %80 = arith.addf %79, %3 : vector<16x128xf32>
    %c0_23 = arith.constant 0 : index
    %c0_24 = arith.constant 0 : index
    %c0_25 = arith.constant 0 : index
    %81 = vector.load %arg9[%c0_23, %c0_24, %c0_25] : memref<1x1x128xf32, #tpu.memory_space<vmem>>, vector<1x1x128xf32>
    %82 = vector.shape_cast %81 : vector<1x1x128xf32> to vector<1x128xf32>
    %c0_26 = arith.constant 0 : index
    %c0_27 = arith.constant 0 : index
    %c0_28 = arith.constant 0 : index
    %83 = vector.load %arg10[%c0_26, %c0_27, %c0_28] : memref<1x1x128xf32, #tpu.memory_space<vmem>>, vector<1x1x128xf32>
    %84 = vector.shape_cast %83 : vector<1x1x128xf32> to vector<1x128xf32>
    %cst_29 = arith.constant dense<0.000000e+00> : vector<16xf32>
    %85 = vector.multi_reduction <add>, %80, %cst_29 [1] : vector<16x128xf32> to vector<16xf32>
    %86 = vector.shape_cast %85 : vector<16xf32> to vector<16x1xf32>
    %cst_30 = arith.constant 1.280000e+02 : f32
    %87 = vector.broadcast %cst_30 : f32 to vector<16x1xf32>
    %88 = arith.divf %86, %87 : vector<16x1xf32>
    %89 = vector.broadcast %88 : vector<16x1xf32> to vector<16x128xf32>
    %90 = arith.subf %80, %89 : vector<16x128xf32>
    %91 = arith.mulf %90, %90 : vector<16x128xf32>
    %cst_31 = arith.constant dense<0.000000e+00> : vector<16xf32>
    %92 = vector.multi_reduction <add>, %91, %cst_31 [1] : vector<16x128xf32> to vector<16xf32>
    %93 = vector.shape_cast %92 : vector<16xf32> to vector<16x1xf32>
    %cst_32 = arith.constant 1.280000e+02 : f32
    %94 = vector.broadcast %cst_32 : f32 to vector<16x1xf32>
    %95 = arith.divf %93, %94 : vector<16x1xf32>
    %96 = vector.broadcast %88 : vector<16x1xf32> to vector<16x128xf32>
    %97 = arith.subf %80, %96 : vector<16x128xf32>
    %cst_33 = arith.constant 9.99999974E-6 : f32
    %98 = vector.broadcast %cst_33 : f32 to vector<16x1xf32>
    %99 = arith.addf %95, %98 : vector<16x1xf32>
    %100 = math.rsqrt %99 : vector<16x1xf32>
    %101 = vector.broadcast %100 : vector<16x1xf32> to vector<16x128xf32>
    %102 = arith.mulf %97, %101 : vector<16x128xf32>
    %103 = vector.broadcast %82 : vector<1x128xf32> to vector<16x128xf32>
    %104 = arith.mulf %102, %103 : vector<16x128xf32>
    %105 = vector.broadcast %84 : vector<1x128xf32> to vector<16x128xf32>
    %106 = arith.addf %104, %105 : vector<16x128xf32>
    %107 = arith.truncf %106 : vector<16x128xf32> to vector<16x128xbf16>
    %c0_34 = arith.constant 0 : index
    %c0_35 = arith.constant 0 : index
    %c0_36 = arith.constant 0 : index
    %108 = vector.load %arg11[%c0_34, %c0_35, %c0_36] : memref<1x128x256xbf16, #tpu.memory_space<vmem>>, vector<1x128x256xbf16>
    %109 = vector.shape_cast %108 : vector<1x128x256xbf16> to vector<128x256xbf16>
    %cst_37 = arith.constant dense<0.000000e+00> : vector<16x256xf32>
    %110 = tpu.matmul %107, %109, %cst_37 {dimension_numbers = #tpu.dot_dimension_numbers<[1], [0], [0], [1], [0, 0, 1, 1], [], []>} : vector<16x128xbf16>, vector<128x256xbf16>, vector<16x256xf32> -> vector<16x256xf32>
    %c0_38 = arith.constant 0 : index
    %c0_39 = arith.constant 0 : index
    %c0_40 = arith.constant 0 : index
    %111 = vector.load %arg12[%c0_38, %c0_39, %c0_40] : memref<1x1x256xf32, #tpu.memory_space<vmem>>, vector<1x1x256xf32>
    %112 = vector.shape_cast %111 : vector<1x1x256xf32> to vector<1x256xf32>
    %113 = vector.broadcast %112 : vector<1x256xf32> to vector<16x256xf32>
    %114 = arith.addf %110, %113 : vector<16x256xf32>
    %115 = arith.mulf %114, %114 : vector<16x256xf32>
    %116 = arith.mulf %114, %115 : vector<16x256xf32>
    %cst_41 = arith.constant 4.471500e-02 : f32
    %117 = vector.broadcast %cst_41 : f32 to vector<16x256xf32>
    %118 = arith.mulf %117, %116 : vector<16x256xf32>
    %119 = arith.addf %114, %118 : vector<16x256xf32>
    %cst_42 = arith.constant 0.797884583 : f32
    %120 = vector.broadcast %cst_42 : f32 to vector<16x256xf32>
    %121 = arith.mulf %120, %119 : vector<16x256xf32>
    %122 = math.tanh %121 : vector<16x256xf32>
    %cst_43 = arith.constant 1.000000e+00 : f32
    %123 = vector.broadcast %cst_43 : f32 to vector<16x256xf32>
    %124 = arith.addf %123, %122 : vector<16x256xf32>
    %cst_44 = arith.constant 5.000000e-01 : f32
    %125 = vector.broadcast %cst_44 : f32 to vector<16x256xf32>
    %126 = arith.mulf %125, %124 : vector<16x256xf32>
    %127 = arith.mulf %114, %126 : vector<16x256xf32>
    %128 = arith.truncf %127 : vector<16x256xf32> to vector<16x256xbf16>
    %c0_45 = arith.constant 0 : index
    %c0_46 = arith.constant 0 : index
    %c0_47 = arith.constant 0 : index
    %129 = vector.load %arg13[%c0_45, %c0_46, %c0_47] : memref<1x256x128xbf16, #tpu.memory_space<vmem>>, vector<1x256x128xbf16>
    %130 = vector.shape_cast %129 : vector<1x256x128xbf16> to vector<256x128xbf16>
    %cst_48 = arith.constant dense<0.000000e+00> : vector<16x128xf32>
    %131 = tpu.matmul %128, %130, %cst_48 {dimension_numbers = #tpu.dot_dimension_numbers<[1], [0], [0], [1], [0, 0, 1, 1], [], []>} : vector<16x256xbf16>, vector<256x128xbf16>, vector<16x128xf32> -> vector<16x128xf32>
    %c0_49 = arith.constant 0 : index
    %c0_50 = arith.constant 0 : index
    %c0_51 = arith.constant 0 : index
    %132 = vector.load %arg14[%c0_49, %c0_50, %c0_51] : memref<1x1x128xf32, #tpu.memory_space<vmem>>, vector<1x1x128xf32>
    %133 = vector.shape_cast %132 : vector<1x1x128xf32> to vector<1x128xf32>
    %134 = vector.broadcast %133 : vector<1x128xf32> to vector<16x128xf32>
    %135 = arith.addf %131, %134 : vector<16x128xf32>
    %136 = arith.addf %135, %106 : vector<16x128xf32>
    %c0_52 = arith.constant 0 : index
    %c0_53 = arith.constant 0 : index
    %c0_54 = arith.constant 0 : index
    %137 = vector.load %arg15[%c0_52, %c0_53, %c0_54] : memref<1x1x128xf32, #tpu.memory_space<vmem>>, vector<1x1x128xf32>
    %138 = vector.shape_cast %137 : vector<1x1x128xf32> to vector<1x128xf32>
    %c0_55 = arith.constant 0 : index
    %c0_56 = arith.constant 0 : index
    %c0_57 = arith.constant 0 : index
    %139 = vector.load %arg16[%c0_55, %c0_56, %c0_57] : memref<1x1x128xf32, #tpu.memory_space<vmem>>, vector<1x1x128xf32>
    %140 = vector.shape_cast %139 : vector<1x1x128xf32> to vector<1x128xf32>
    %cst_58 = arith.constant dense<0.000000e+00> : vector<16xf32>
    %141 = vector.multi_reduction <add>, %136, %cst_58 [1] : vector<16x128xf32> to vector<16xf32>
    %142 = vector.shape_cast %141 : vector<16xf32> to vector<16x1xf32>
    %cst_59 = arith.constant 1.280000e+02 : f32
    %143 = vector.broadcast %cst_59 : f32 to vector<16x1xf32>
    %144 = arith.divf %142, %143 : vector<16x1xf32>
    %145 = vector.broadcast %144 : vector<16x1xf32> to vector<16x128xf32>
    %146 = arith.subf %136, %145 : vector<16x128xf32>
    %147 = arith.mulf %146, %146 : vector<16x128xf32>
    %cst_60 = arith.constant dense<0.000000e+00> : vector<16xf32>
    %148 = vector.multi_reduction <add>, %147, %cst_60 [1] : vector<16x128xf32> to vector<16xf32>
    %149 = vector.shape_cast %148 : vector<16xf32> to vector<16x1xf32>
    %cst_61 = arith.constant 1.280000e+02 : f32
    %150 = vector.broadcast %cst_61 : f32 to vector<16x1xf32>
    %151 = arith.divf %149, %150 : vector<16x1xf32>
    %152 = vector.broadcast %144 : vector<16x1xf32> to vector<16x128xf32>
    %153 = arith.subf %136, %152 : vector<16x128xf32>
    %cst_62 = arith.constant 9.99999974E-6 : f32
    %154 = vector.broadcast %cst_62 : f32 to vector<16x1xf32>
    %155 = arith.addf %151, %154 : vector<16x1xf32>
    %156 = math.rsqrt %155 : vector<16x1xf32>
    %157 = vector.broadcast %156 : vector<16x1xf32> to vector<16x128xf32>
    %158 = arith.mulf %153, %157 : vector<16x128xf32>
    %159 = vector.broadcast %138 : vector<1x128xf32> to vector<16x128xf32>
    %160 = arith.mulf %158, %159 : vector<16x128xf32>
    %161 = vector.broadcast %140 : vector<1x128xf32> to vector<16x128xf32>
    %162 = arith.addf %160, %161 : vector<16x128xf32>
    %c0_63 = arith.constant 0 : index
    %c0_64 = arith.constant 0 : index
    %163 = vector.load %arg28[%c0_63, %c0_64] : memref<16x128xf32, #tpu.memory_space<vmem>>, vector<16x128xf32>
    tpu.vector_store %arg28[%c0_63, %c0_64], %162 {strides = array<i32>} : memref<16x128xf32, #tpu.memory_space<vmem>>, vector<16x128xf32>,
    %c1_i32 = arith.constant 1 : i32
    %164 = arith.cmpi eq, %arg0, %c1_i32 : i32
    %165 = arith.extui %164 : i1 to i32
    %c0_i32_65 = arith.constant 0 : i32
    %166 = arith.cmpi ne, %165, %c0_i32_65 : i32
    scf.if %166 {
      %167 = arith.truncf %162 : vector<16x128xf32> to vector<16x128xbf16>
      %c0_66 = arith.constant 0 : index
      %c0_67 = arith.constant 0 : index
      %168 = vector.load %arg17[%c0_66, %c0_67] : memref<128x128xbf16, #tpu.memory_space<vmem>>, vector<128x128xbf16>
      %cst_68 = arith.constant dense<0.000000e+00> : vector<16x128xf32>
      %169 = tpu.matmul %167, %168, %cst_68 {dimension_numbers = #tpu.dot_dimension_numbers<[1], [0], [0], [1], [0, 0, 1, 1], [], []>} : vector<16x128xbf16>, vector<128x128xbf16>, vector<16x128xf32> -> vector<16x128xf32>
      %c0_69 = arith.constant 0 : index
      %c0_70 = arith.constant 0 : index
      %170 = vector.load %arg18[%c0_69, %c0_70] : memref<1x128xf32, #tpu.memory_space<vmem>>, vector<1x128xf32>
      %171 = vector.broadcast %170 : vector<1x128xf32> to vector<16x128xf32>
      %172 = arith.addf %169, %171 : vector<16x128xf32>
      %173 = math.tanh %172 : vector<16x128xf32>
      %174 = arith.truncf %173 : vector<16x128xf32> to vector<16x128xbf16>
      %c0_71 = arith.constant 0 : index
      %c0_72 = arith.constant 0 : index
      %175 = vector.load %arg19[%c0_71, %c0_72] : memref<128x768xbf16, #tpu.memory_space<vmem>>, vector<128x768xbf16>
      %cst_73 = arith.constant dense<0.000000e+00> : vector<16x768xf32>
      %176 = tpu.matmul %174, %175, %cst_73 {dimension_numbers = #tpu.dot_dimension_numbers<[1], [0], [0], [1], [0, 0, 1, 1], [], []>} : vector<16x128xbf16>, vector<128x768xbf16>, vector<16x768xf32> -> vector<16x768xf32>
      %c0_74 = arith.constant 0 : index
      %c0_75 = arith.constant 0 : index
      %177 = vector.load %arg20[%c0_74, %c0_75] : memref<1x768xf32, #tpu.memory_space<vmem>>, vector<1x768xf32>
      %178 = vector.broadcast %177 : vector<1x768xf32> to vector<16x768xf32>
      %179 = arith.addf %176, %178 : vector<16x768xf32>
      %180 = arith.truncf %179 : vector<16x768xf32> to vector<16x768xbf16>
      %c0_76 = arith.constant 0 : index
      %c0_77 = arith.constant 0 : index
      %181 = vector.load %arg21[%c0_76, %c0_77] : memref<768x512xbf16, #tpu.memory_space<vmem>>, vector<768x512xbf16>
      %cst_78 = arith.constant dense<0.000000e+00> : vector<16x512xf32>
      %182 = tpu.matmul %180, %181, %cst_78 {dimension_numbers = #tpu.dot_dimension_numbers<[1], [0], [0], [1], [0, 0, 1, 1], [], []>} : vector<16x768xbf16>, vector<768x512xbf16>, vector<16x512xf32> -> vector<16x512xf32>
      %c0_79 = arith.constant 0 : index
      %c0_80 = arith.constant 0 : index
      %183 = vector.load %arg22[%c0_79, %c0_80] : memref<1x512xf32, #tpu.memory_space<vmem>>, vector<1x512xf32>
      %184 = vector.broadcast %183 : vector<1x512xf32> to vector<16x512xf32>
      %185 = arith.addf %182, %184 : vector<16x512xf32>
      %186 = arith.truncf %185 : vector<16x512xf32> to vector<16x512xbf16>
      %c0_81 = arith.constant 0 : index
      %c0_82 = arith.constant 0 : index
      %187 = vector.load %arg23[%c0_81, %c0_82] : memref<512x256xbf16, #tpu.memory_space<vmem>>, vector<512x256xbf16>
      %cst_83 = arith.constant dense<0.000000e+00> : vector<16x256xf32>
      %188 = tpu.matmul %186, %187, %cst_83 {dimension_numbers = #tpu.dot_dimension_numbers<[1], [0], [0], [1], [0, 0, 1, 1], [], []>} : vector<16x512xbf16>, vector<512x256xbf16>, vector<16x256xf32> -> vector<16x256xf32>
      %c0_84 = arith.constant 0 : index
      %c0_85 = arith.constant 0 : index
      %189 = vector.load %arg24[%c0_84, %c0_85] : memref<1x256xf32, #tpu.memory_space<vmem>>, vector<1x256xf32>
      %190 = vector.broadcast %189 : vector<1x256xf32> to vector<16x256xf32>
      %191 = arith.addf %188, %190 : vector<16x256xf32>
      %192 = arith.truncf %191 : vector<16x256xf32> to vector<16x256xbf16>
      %c0_86 = arith.constant 0 : index
      %c0_87 = arith.constant 0 : index
      %193 = vector.load %arg25[%c0_86, %c0_87] : memref<256x128xbf16, #tpu.memory_space<vmem>>, vector<256x128xbf16>
      %cst_88 = arith.constant dense<0.000000e+00> : vector<16x128xf32>
      %194 = tpu.matmul %192, %193, %cst_88 {dimension_numbers = #tpu.dot_dimension_numbers<[1], [0], [0], [1], [0, 0, 1, 1], [], []>} : vector<16x256xbf16>, vector<256x128xbf16>, vector<16x128xf32> -> vector<16x128xf32>
      %c0_89 = arith.constant 0 : index
      %c0_90 = arith.constant 0 : index
      %195 = vector.load %arg26[%c0_89, %c0_90] : memref<1x128xf32, #tpu.memory_space<vmem>>, vector<1x128xf32>
      %196 = vector.broadcast %195 : vector<1x128xf32> to vector<16x128xf32>
      %197 = arith.addf %194, %196 : vector<16x128xf32>
      %cst_91 = arith.constant dense<0xFF800000> : vector<16xf32>
      %198 = vector.multi_reduction <maximumf>, %197, %cst_91 [1] : vector<16x128xf32> to vector<16xf32>
      %199 = vector.shape_cast %198 : vector<16xf32> to vector<16x1xf32>
      %200 = vector.broadcast %199 : vector<16x1xf32> to vector<16x128xf32>
      %201 = arith.subf %197, %200 : vector<16x128xf32>
      %202 = math.exp %201 : vector<16x128xf32>
      %cst_92 = arith.constant dense<0.000000e+00> : vector<16xf32>
      %203 = vector.multi_reduction <add>, %202, %cst_92 [1] : vector<16x128xf32> to vector<16xf32>
      %204 = vector.shape_cast %203 : vector<16xf32> to vector<16x1xf32>
      %205 = vector.broadcast %204 : vector<16x1xf32> to vector<16x128xf32>
      %206 = arith.divf %202, %205 : vector<16x128xf32>
      %c0_93 = arith.constant 0 : index
      %c0_94 = arith.constant 0 : index
      %207 = vector.load %arg27[%c0_93, %c0_94] : memref<16x128xf32, #tpu.memory_space<vmem>>, vector<16x128xf32>
      tpu.vector_store %arg27[%c0_93, %c0_94], %206 {strides = array<i32>} : memref<16x128xf32, #tpu.memory_space<vmem>>, vector<16x128xf32>,
    } else {
    }
    return
  }
  func.func @transform_0(%arg0: i32) -> (i32, i32) {
    %c0_i32 = arith.constant 0 : i32
    %c0_i32_0 = arith.constant 0 : i32
    %c0_i32_1 = arith.constant 0 : i32
    return %c0_i32, %c0_i32_0 : i32, i32
  }
  func.func @transform_1(%arg0: i32) -> (i32, i32, i32) {
    %c0_i32 = arith.constant 0 : i32
    %c0_i32_0 = arith.constant 0 : i32
    %c0_i32_1 = arith.constant 0 : i32
    %c0_i32_2 = arith.constant 0 : i32
    return %c0_i32, %c0_i32_0, %c0_i32_1 : i32, i32, i32
  }
  func.func @transform_2(%arg0: i32) -> (i32, i32) {
    %c0_i32 = arith.constant 0 : i32
    %c0_i32_0 = arith.constant 0 : i32
    %c0_i32_1 = arith.constant 0 : i32
    return %c0_i32, %c0_i32_0 : i32, i32
  }
  func.func @transform_3(%arg0: i32) -> (i32, i32) {
    %c0_i32 = arith.constant 0 : i32
    %c0_i32_0 = arith.constant 0 : i32
    %c0_i32_1 = arith.constant 0 : i32
    return %c0_i32, %c0_i32_0 : i32, i32
  }
  func.func @transform_4(%arg0: i32) -> (i32, i32, i32) {
    %c0_i32 = arith.constant 0 : i32
    %c0_i32_0 = arith.constant 0 : i32
    %c0_i32_1 = arith.constant 0 : i32
    return %arg0, %c0_i32, %c0_i32_0 : i32, i32, i32
  }
  func.func @transform_5(%arg0: i32) -> (i32, i32, i32) {
    %c0_i32 = arith.constant 0 : i32
    %c0_i32_0 = arith.constant 0 : i32
    %c0_i32_1 = arith.constant 0 : i32
    return %arg0, %c0_i32, %c0_i32_0 : i32, i32, i32
  }
  func.func @transform_6(%arg0: i32) -> (i32, i32, i32, i32) {
    %c0_i32 = arith.constant 0 : i32
    %c0_i32_0 = arith.constant 0 : i32
    %c0_i32_1 = arith.constant 0 : i32
    %c0_i32_2 = arith.constant 0 : i32
    return %arg0, %c0_i32, %c0_i32_0, %c0_i32_1 : i32, i32, i32, i32
  }
  func.func @transform_7(%arg0: i32) -> (i32, i32, i32) {
    %c0_i32 = arith.constant 0 : i32
    %c0_i32_0 = arith.constant 0 : i32
    %c0_i32_1 = arith.constant 0 : i32
    return %arg0, %c0_i32, %c0_i32_0 : i32, i32, i32
  }
  func.func @transform_8(%arg0: i32) -> (i32, i32, i32) {
    %c0_i32 = arith.constant 0 : i32
    %c0_i32_0 = arith.constant 0 : i32
    %c0_i32_1 = arith.constant 0 : i32
    return %arg0, %c0_i32, %c0_i32_0 : i32, i32, i32
  }
  func.func @transform_9(%arg0: i32) -> (i32, i32, i32) {
    %c0_i32 = arith.constant 0 : i32
    %c0_i32_0 = arith.constant 0 : i32
    %c0_i32_1 = arith.constant 0 : i32
    return %arg0, %c0_i32, %c0_i32_0 : i32, i32, i32
  }
  func.func @transform_10(%arg0: i32) -> (i32, i32, i32) {
    %c0_i32 = arith.constant 0 : i32
    %c0_i32_0 = arith.constant 0 : i32
    %c0_i32_1 = arith.constant 0 : i32
    return %arg0, %c0_i32, %c0_i32_0 : i32, i32, i32
  }
  func.func @transform_11(%arg0: i32) -> (i32, i32, i32) {
    %c0_i32 = arith.constant 0 : i32
    %c0_i32_0 = arith.constant 0 : i32
    %c0_i32_1 = arith.constant 0 : i32
    return %arg0, %c0_i32, %c0_i32_0 : i32, i32, i32
  }
  func.func @transform_12(%arg0: i32) -> (i32, i32, i32) {
    %c0_i32 = arith.constant 0 : i32
    %c0_i32_0 = arith.constant 0 : i32
    %c0_i32_1 = arith.constant 0 : i32
    return %arg0, %c0_i32, %c0_i32_0 : i32, i32, i32
  }
  func.func @transform_13(%arg0: i32) -> (i32, i32, i32) {
    %c0_i32 = arith.constant 0 : i32
    %c0_i32_0 = arith.constant 0 : i32
    %c0_i32_1 = arith.constant 0 : i32
    return %arg0, %c0_i32, %c0_i32_0 : i32, i32, i32
  }
  func.func @transform_14(%arg0: i32) -> (i32, i32, i32) {
    %c0_i32 = arith.constant 0 : i32
    %c0_i32_0 = arith.constant 0 : i32
    %c0_i32_1 = arith.constant 0 : i32
    return %arg0, %c0_i32, %c0_i32_0 : i32, i32, i32
  }
  func.func @transform_15(%arg0: i32) -> (i32, i32, i32) {
    %c0_i32 = arith.constant 0 : i32
    %c0_i32_0 = arith.constant 0 : i32
    %c0_i32_1 = arith.constant 0 : i32
    return %arg0, %c0_i32, %c0_i32_0 : i32, i32, i32
  }
  func.func @transform_16(%arg0: i32) -> (i32, i32) {
    %c0_i32 = arith.constant 0 : i32
    %c0_i32_0 = arith.constant 0 : i32
    %c0_i32_1 = arith.constant 0 : i32
    return %c0_i32, %c0_i32_0 : i32, i32
  }
  func.func @transform_17(%arg0: i32) -> (i32, i32) {
    %c0_i32 = arith.constant 0 : i32
    %c0_i32_0 = arith.constant 0 : i32
    %c0_i32_1 = arith.constant 0 : i32
    return %c0_i32, %c0_i32_0 : i32, i32
  }
  func.func @transform_18(%arg0: i32) -> (i32, i32) {
    %c0_i32 = arith.constant 0 : i32
    %c0_i32_0 = arith.constant 0 : i32
    %c0_i32_1 = arith.constant 0 : i32
    return %c0_i32, %c0_i32_0 : i32, i32
  }
  func.func @transform_19(%arg0: i32) -> (i32, i32) {
    %c0_i32 = arith.constant 0 : i32
    %c0_i32_0 = arith.constant 0 : i32
    %c0_i32_1 = arith.constant 0 : i32
    return %c0_i32, %c0_i32_0 : i32, i32
  }
  func.func @transform_20(%arg0: i32) -> (i32, i32) {
    %c0_i32 = arith.constant 0 : i32
    %c0_i32_0 = arith.constant 0 : i32
    %c0_i32_1 = arith.constant 0 : i32
    return %c0_i32, %c0_i32_0 : i32, i32
  }
  func.func @transform_21(%arg0: i32) -> (i32, i32) {
    %c0_i32 = arith.constant 0 : i32
    %c0_i32_0 = arith.constant 0 : i32
    %c0_i32_1 = arith.constant 0 : i32
    return %c0_i32, %c0_i32_0 : i32, i32
  }
  func.func @transform_22(%arg0: i32) -> (i32, i32) {
    %c0_i32 = arith.constant 0 : i32
    %c0_i32_0 = arith.constant 0 : i32
    %c0_i32_1 = arith.constant 0 : i32
    return %c0_i32, %c0_i32_0 : i32, i32
  }
  func.func @transform_23(%arg0: i32) -> (i32, i32) {
    %c0_i32 = arith.constant 0 : i32
    %c0_i32_0 = arith.constant 0 : i32
    %c0_i32_1 = arith.constant 0 : i32
    return %c0_i32, %c0_i32_0 : i32, i32
  }
  func.func @transform_24(%arg0: i32) -> (i32, i32) {
    %c0_i32 = arith.constant 0 : i32
    %c0_i32_0 = arith.constant 0 : i32
    %c0_i32_1 = arith.constant 0 : i32
    return %c0_i32, %c0_i32_0 : i32, i32
  }
  func.func @transform_25(%arg0: i32) -> (i32, i32) {
    %c0_i32 = arith.constant 0 : i32
    %c0_i32_0 = arith.constant 0 : i32
    %c0_i32_1 = arith.constant 0 : i32
    return %c0_i32, %c0_i32_0 : i32, i32
  }
  func.func @transform_26(%arg0: i32) -> (i32, i32) {
    %c0_i32 = arith.constant 0 : i32
    %c0_i32_0 = arith.constant 0 : i32
    %c0_i32_1 = arith.constant 0 : i32
    return %c0_i32, %c0_i32_0 : i32, i32
  }
}

</mosaic_0001>

<llo_original>
// kernel: sentiment_classifier_forward.1
$region0: #{sentiment_classifier_forward.1}
  #allocation0 [shape = 'u32[]', space=smem, size = 0x4, offset = 0x4, fixed_abs, tag = 'smem constant byte address 0x4 - core index']
  #allocation1 [shape = 'u32[144,128]{1,0:T(1,128)}', space=vmem, size = 0x12000, scoped, tag = 'internal scratch']
  #allocation2 [shape = 'f32[16,128]{1,0:T(8,128)}', space=vmem, size = 0x2000, scoped, tag = 'scratch operand']
  %s0 = inlined_call_operand.vmem [shape: f32[16,128], index: 0, kind: input, shape index: {}]
  %s1 = inlined_call_operand.vmem [shape: f32[1,16,16], index: 1, kind: input, shape index: {}]
  %s2 = inlined_call_operand.hbm [shape: f32[1,128], index: 2, kind: input, shape index: {}]
  %s3 = inlined_call_operand.hbm [shape: f32[1,128], index: 3, kind: input, shape index: {}]
  %s4 = inlined_call_operand.hbm [shape: bf16[2,128,384], index: 4, kind: input, shape index: {}]
  %s5 = inlined_call_operand.vmem [shape: f32[2,1,384], index: 5, kind: input, shape index: {}]
  %s6 = inlined_call_operand.hbm [shape: bf16[2,4,32,128], index: 6, kind: input, shape index: {}]
  %s7 = inlined_call_operand.hbm [shape: f32[2,1,128], index: 7, kind: input, shape index: {}]
  %s8 = inlined_call_operand.hbm [shape: f32[2,1,128], index: 8, kind: input, shape index: {}]
  %s9 = inlined_call_operand.hbm [shape: f32[2,1,128], index: 9, kind: input, shape index: {}]
  %s10 = inlined_call_operand.vmem [shape: bf16[2,128,256], index: 10, kind: input, shape index: {}]
  %s11 = inlined_call_operand.hbm [shape: f32[2,1,256], index: 11, kind: input, shape index: {}]
  %s12 = inlined_call_operand.hbm [shape: bf16[2,256,128], index: 12, kind: input, shape index: {}]
  %s13 = inlined_call_operand.hbm [shape: f32[2,1,128], index: 13, kind: input, shape index: {}]
  %s14 = inlined_call_operand.hbm [shape: f32[2,1,128], index: 14, kind: input, shape index: {}]
  %s15 = inlined_call_operand.hbm [shape: f32[2,1,128], index: 15, kind: input, shape index: {}]
  %s16 = inlined_call_operand.vmem [shape: bf16[128,128], index: 16, kind: input, shape index: {}]
  %s17 = inlined_call_operand.vmem [shape: f32[1,128], index: 17, kind: input, shape index: {}]
  %s18 = inlined_call_operand.hbm [shape: bf16[128,768], index: 18, kind: input, shape index: {}]
  %s19 = inlined_call_operand.vmem [shape: f32[1,768], index: 19, kind: input, shape index: {}]
  %s20 = inlined_call_operand.hbm [shape: bf16[768,512], index: 20, kind: input, shape index: {}]
  %s21 = inlined_call_operand.hbm [shape: f32[1,512], index: 21, kind: input, shape index: {}]
  %s22 = inlined_call_operand.hbm [shape: bf16[512,256], index: 22, kind: input, shape index: {}]
  %s23 = inlined_call_operand.hbm [shape: f32[1,256], index: 23, kind: input, shape index: {}]
  %s24 = inlined_call_operand.hbm [shape: bf16[256,128], index: 24, kind: input, shape index: {}]
  %s25 = inlined_call_operand.vmem [shape: f32[1,128], index: 25, kind: input, shape index: {}]
  %s26 = inlined_call_operand.vmem [shape: f32[16,128], index: 26, kind: output, shape index: {}]
  %s27 = sld [smem:[#allocation0]]
  $region217: #{sentiment_classifier_forward.1} parent=0
    _
  %s29 = ssub.s32 1, %s27
  %s30 = scalar_select 0, %s29, %s27
  $region1: #{sentiment_classifier_forward.1} parent=0
    #allocation3 [shape = 'u8[512]{0}', space=vmem, size = 0x400, scoped, tag = 'input window, operand 2, single buffered']
    #allocation4 [shape = 's32[2]{0}', space=sflag, size = 0x8, scoped, tag = 'scoped memory for sentiment_classifier_forward.1']
    #allocation5 [shape = 'u8[512]{0}', space=vmem, size = 0x400, scoped, tag = 'input window, operand 3, single buffered']
    #allocation6 [shape = 's32[1]{0}', space=sflag, size = 0x4, scoped, tag = 'scoped memory for sentiment_classifier_forward.1']
    #allocation7 [shape = 'u8[196608]{0}', space=vmem, size = 0x30000, scoped, tag = 'input window, operand 4']
    #allocation8 [shape = 'u8[65536]{0}', space=vmem, size = 0x10000, scoped, tag = 'input window, operand 6']
    #allocation9 [shape = 'u8[1024]{0}', space=vmem, size = 0x400, scoped, tag = 'input window, operand 7']
    #allocation10 [shape = 'u8[1024]{0}', space=vmem, size = 0x400, scoped, tag = 'input window, operand 8']
    #allocation11 [shape = 'u8[1024]{0}', space=vmem, size = 0x400, scoped, tag = 'input window, operand 9']
    #allocation12 [shape = 'u8[2048]{0}', space=vmem, size = 0x800, scoped, tag = 'input window, operand 11']
    #allocation13 [shape = 'u8[131072]{0}', space=vmem, size = 0x20000, scoped, tag = 'input window, operand 12']
    #allocation14 [shape = 'u8[1024]{0}', space=vmem, size = 0x400, scoped, tag = 'input window, operand 13']
    #allocation15 [shape = 'u8[1024]{0}', space=vmem, size = 0x400, scoped, tag = 'input window, operand 14']
    #allocation16 [shape = 'u8[1024]{0}', space=vmem, size = 0x400, scoped, tag = 'input window, operand 15']
    #allocation17 [shape = 'u8[196608]{0}', space=vmem, size = 0x30000, scoped, tag = 'input window, operand 18, single buffered']
    #allocation18 [shape = 'u8[786432]{0}', space=vmem, size = 0xc0000, scoped, tag = 'input window, operand 20, single buffered']
    #allocation19 [shape = 's32[1]{0}', space=sflag, size = 0x4, scoped, tag = 'scoped memory for sentiment_classifier_forward.1']
    #allocation20 [shape = 'u8[2048]{0}', space=vmem, size = 0x800, scoped, tag = 'input window, operand 21, single buffered']
    #allocation21 [shape = 'u8[262144]{0}', space=vmem, size = 0x40000, scoped, tag = 'input window, operand 22, single buffered']
    #allocation22 [shape = 's32[1]{0}', space=sflag, size = 0x4, scoped, tag = 'scoped memory for sentiment_classifier_forward.1']
    #allocation23 [shape = 'u8[1024]{0}', space=vmem, size = 0x400, scoped, tag = 'input window, operand 23, single buffered']
    #allocation24 [shape = 'u8[65536]{0}', space=vmem, size = 0x10000, scoped, tag = 'input window, operand 24, single buffered']
    #allocation25 [shape = 's32[1]{0}', space=sflag, size = 0x4, scoped, tag = 'scoped memory for sentiment_classifier_forward.1']
    %31 = vsyncpa [#allocation4], 0
    %32 = vsyncpa [#allocation6], 0
    %33 = vsyncpa [#allocation19], 0
    %34 = vsyncpa [#allocation22], 0
    %35 = vsyncpa [#allocation25], 0
    loop: start=0, step=1, limit=4
    $region2: #{sentiment_classifier_forward.1} parent=1 // loop_pre_header
      _
    $region3: #{sentiment_classifier_forward.1} parent=1 // loop_header
      %s37 = sphi 0, %s41
      %p38 = scmp.ge.s32.totalorder %s37, 4
      %s45 = sphi 0, %s45
      %s47 = sphi 0, %s45
      %s48 = sphi 0, %s47
      %s62 = sphi 0, %s48
      %s66 = sphi 0, %s66
      %s68 = sphi 0, %s66
      %s69 = sphi 0, %s68
      %s83 = sphi 0, %s69
      %s87 = sphi 0, %s87
      %s89 = sphi 0, %s87
      %s90 = sphi 0, %s89
      %s104 = sphi 0, %s90
      %s108 = sphi 0, %s108
      %s110 = sphi 0, %s108
      %s111 = sphi 0, %s110
      %s125 = sphi 0, %s111
      %s131 = sphi 0, %s133
      %s134 = sphi 0, %s131
      %s135 = sphi 0, %s134
      %s151 = sphi 0, %s135
      %s157 = sphi 0, %s159
      %s160 = sphi 0, %s157
      %s161 = sphi 0, %s160
      %s177 = sphi 0, %s161
      %s183 = sphi 0, %s185
      %s186 = sphi 0, %s183
      %s187 = sphi 0, %s186
      %s203 = sphi 0, %s187
      %s209 = sphi 0, %s211
      %s212 = sphi 0, %s209
      %s213 = sphi 0, %s212
      %s229 = sphi 0, %s213
      %s235 = sphi 0, %s237
      %s238 = sphi 0, %s235
      %s239 = sphi 0, %s238
      %s255 = sphi 0, %s239
      %s261 = sphi 0, %s263
      %s264 = sphi 0, %s261
      %s265 = sphi 0, %s264
      %s281 = sphi 0, %s265
      %s287 = sphi 0, %s289
      %s290 = sphi 0, %s287
      %s291 = sphi 0, %s290
      %s307 = sphi 0, %s291
      %s313 = sphi 0, %s315
      %s316 = sphi 0, %s313
      %s317 = sphi 0, %s316
      %s333 = sphi 0, %s317
      %s339 = sphi 0, %s341
      %s342 = sphi 0, %s339
      %s343 = sphi 0, %s342
      %s359 = sphi 0, %s343
      %s365 = sphi 0, %s367
      %s368 = sphi 0, %s365
      %s369 = sphi 0, %s368
      %s385 = sphi 0, %s369
      %s391 = sphi 0, %s393
      %s394 = sphi 0, %s391
      %s395 = sphi 0, %s394
      %s411 = sphi 0, %s395
      %s417 = sphi 0, %s419
      %s420 = sphi 0, %s417
      %s421 = sphi 0, %s420
      %s437 = sphi 0, %s421
      %s441 = sphi 0, %s441
      %s443 = sphi 0, %s441
      %s444 = sphi 0, %s443
      %s458 = sphi 0, %s444
      %s462 = sphi 0, %s462
      %s464 = sphi 0, %s462
      %s465 = sphi 0, %s464
      %s479 = sphi 0, %s465
      %s483 = sphi 0, %s483
      %s485 = sphi 0, %s483
      %s486 = sphi 0, %s485
      %s500 = sphi 0, %s486
      %s504 = sphi 0, %s504
      %s506 = sphi 0, %s504
      %s507 = sphi 0, %s506
      %s521 = sphi 0, %s507
      %s525 = sphi 0, %s525
      %s527 = sphi 0, %s525
      %s528 = sphi 0, %s527
      %s542 = sphi 0, %s528
      %s546 = sphi 0, %s546
      %s548 = sphi 0, %s546
      %s549 = sphi 0, %s548
      %s563 = sphi 0, %s549
      %s567 = sphi 0, %s567
      %s569 = sphi 0, %s567
      %s570 = sphi 0, %s569
      %s584 = sphi 0, %s570
      %s588 = sphi 0, %s588
      %s590 = sphi 0, %s588
      %s591 = sphi 0, %s590
      %s605 = sphi 0, %s591
      %s609 = sphi 0, %s609
      %s611 = sphi 0, %s609
      %s612 = sphi 0, %s611
      %s626 = sphi 0, %s612
      %s630 = sphi 0, %s630
      %s632 = sphi 0, %s630
      %s633 = sphi 0, %s632
      %s647 = sphi 0, %s633
      %s651 = sphi 0, %s651
      %s653 = sphi 0, %s651
      %s654 = sphi 0, %s653
      %s668 = sphi 0, %s654
    $region4: #{sentiment_classifier_forward.1} parent=1 // loop_header_branch
      %40 = sbr.rel (%p38) target = $region8
    $region5: #{sentiment_classifier_forward.1} parent=1 // loop_body
      %s42 = ssub.s32 %s37, 1
      %s43 = ssub.s32 %s37, 2
      %s44 = sadd.s32 %s37, 1
      %s46 = sadd.s32 %s45, 1
      %p49 = scmp.eq.s32.totalorder %s37, 1
      %p50 = scmp.ne.s32.totalorder %s45, %s47
      %p51 = scmp.eq.s32.totalorder %s37, 0
      %p52 = por %p50, %p51
      %p53 = scmp.ne.s32.totalorder %s45, %s47
      %p54 = scmp.eq.s32.totalorder %s42, 1
      %p55 = por %p53, %p54
      %p56 = scmp.ne.s32.totalorder %s47, %s48
      %p57 = scmp.eq.s32.totalorder %s42, 0
      %p58 = por %p56, %p57
      %p59 = scmp.ne.s32.totalorder %s47, %s48
      %p60 = scmp.eq.s32.totalorder %s43, 1
      %p61 = por %p59, %p60
      %p63 = scmp.ne.s32.totalorder %s48, %s62
      %p64 = scmp.eq.s32.totalorder %s43, 0
      %p65 = por %p63, %p64
      %s67 = sadd.s32 %s66, 1
      %p70 = scmp.eq.s32.totalorder %s37, 1
      %p71 = scmp.ne.s32.totalorder %s66, %s68
      %p72 = scmp.eq.s32.totalorder %s37, 0
      %p73 = por %p71, %p72
      %p74 = scmp.ne.s32.totalorder %s66, %s68
      %p75 = scmp.eq.s32.totalorder %s42, 1
      %p76 = por %p74, %p75
      %p77 = scmp.ne.s32.totalorder %s68, %s69
      %p78 = scmp.eq.s32.totalorder %s42, 0
      %p79 = por %p77, %p78
      %p80 = scmp.ne.s32.totalorder %s68, %s69
      %p81 = scmp.eq.s32.totalorder %s43, 1
      %p82 = por %p80, %p81
      %p84 = scmp.ne.s32.totalorder %s69, %s83
      %p85 = scmp.eq.s32.totalorder %s43, 0
      %p86 = por %p84, %p85
      %s88 = sadd.s32 %s87, 1
      %p91 = scmp.eq.s32.totalorder %s37, 1
      %p92 = scmp.ne.s32.totalorder %s87, %s89
      %p93 = scmp.eq.s32.totalorder %s37, 0
      %p94 = por %p92, %p93
      %p95 = scmp.ne.s32.totalorder %s87, %s89
      %p96 = scmp.eq.s32.totalorder %s42, 1
      %p97 = por %p95, %p96
      %p98 = scmp.ne.s32.totalorder %s89, %s90
      %p99 = scmp.eq.s32.totalorder %s42, 0
      %p100 = por %p98, %p99
      %p101 = scmp.ne.s32.totalorder %s89, %s90
      %p102 = scmp.eq.s32.totalorder %s43, 1
      %p103 = por %p101, %p102
      %p105 = scmp.ne.s32.totalorder %s90, %s104
      %p106 = scmp.eq.s32.totalorder %s43, 0
      %p107 = por %p105, %p106
      %s109 = sadd.s32 %s108, 1
      %p112 = scmp.eq.s32.totalorder %s37, 1
      %p113 = scmp.ne.s32.totalorder %s108, %s110
      %p114 = scmp.eq.s32.totalorder %s37, 0
      %p115 = por %p113, %p114
      %p116 = scmp.ne.s32.totalorder %s108, %s110
      %p117 = scmp.eq.s32.totalorder %s42, 1
      %p118 = por %p116, %p117
      %p119 = scmp.ne.s32.totalorder %s110, %s111
      %p120 = scmp.eq.s32.totalorder %s42, 0
      %p121 = por %p119, %p120
      %p122 = scmp.ne.s32.totalorder %s110, %s111
      %p123 = scmp.eq.s32.totalorder %s43, 1
      %p124 = por %p122, %p123
      %p126 = scmp.ne.s32.totalorder %s111, %s125
      %p127 = scmp.eq.s32.totalorder %s43, 0
      %p128 = por %p126, %p127
      %s129 = ssub.s32 %s37, %s44
      %p130 = scmp.eq.s32.totalorder %s129, 0
      %s132 = sadd.s32 %s131, 1
      %s133 = scalar_select %p130, %s131, %s132
      %p136 = pneg %p130
      %p137 = scmp.eq.s32.totalorder %s37, 1
      %p138 = por %p136, %p137
      %p139 = scmp.ne.s32.totalorder %s131, %s134
      %p140 = scmp.eq.s32.totalorder %s37, 0
      %p141 = por %p139, %p140
      %p142 = scmp.ne.s32.totalorder %s131, %s134
      %p143 = scmp.eq.s32.totalorder %s42, 1
      %p144 = por %p142, %p143
      %p145 = scmp.ne.s32.totalorder %s134, %s135
      %p146 = scmp.eq.s32.totalorder %s42, 0
      %p147 = por %p145, %p146
      %p148 = scmp.ne.s32.totalorder %s134, %s135
      %p149 = scmp.eq.s32.totalorder %s43, 1
      %p150 = por %p148, %p149
      %p152 = scmp.ne.s32.totalorder %s135, %s151
      %p153 = scmp.eq.s32.totalorder %s43, 0
      %p154 = por %p152, %p153
      %s155 = ssub.s32 %s37, %s44
      %p156 = scmp.eq.s32.totalorder %s155, 0
      %s158 = sadd.s32 %s157, 1
      %s159 = scalar_select %p156, %s157, %s158
      %p162 = pneg %p156
      %p163 = scmp.eq.s32.totalorder %s37, 1
      %p164 = por %p162, %p163
      %p165 = scmp.ne.s32.totalorder %s157, %s160
      %p166 = scmp.eq.s32.totalorder %s37, 0
      %p167 = por %p165, %p166
      %p168 = scmp.ne.s32.totalorder %s157, %s160
      %p169 = scmp.eq.s32.totalorder %s42, 1
      %p170 = por %p168, %p169
      %p171 = scmp.ne.s32.totalorder %s160, %s161
      %p172 = scmp.eq.s32.totalorder %s42, 0
      %p173 = por %p171, %p172
      %p174 = scmp.ne.s32.totalorder %s160, %s161
      %p175 = scmp.eq.s32.totalorder %s43, 1
      %p176 = por %p174, %p175
      %p178 = scmp.ne.s32.totalorder %s161, %s177
      %p179 = scmp.eq.s32.totalorder %s43, 0
      %p180 = por %p178, %p179
      %s181 = ssub.s32 %s37, %s44
      %p182 = scmp.eq.s32.totalorder %s181, 0
      %s184 = sadd.s32 %s183, 1
      %s185 = scalar_select %p182, %s183, %s184
      %p188 = pneg %p182
      %p189 = scmp.eq.s32.totalorder %s37, 1
      %p190 = por %p188, %p189
      %p191 = scmp.ne.s32.totalorder %s183, %s186
      %p192 = scmp.eq.s32.totalorder %s37, 0
      %p193 = por %p191, %p192
      %p194 = scmp.ne.s32.totalorder %s183, %s186
      %p195 = scmp.eq.s32.totalorder %s42, 1
      %p196 = por %p194, %p195
      %p197 = scmp.ne.s32.totalorder %s186, %s187
      %p198 = scmp.eq.s32.totalorder %s42, 0
      %p199 = por %p197, %p198
      %p200 = scmp.ne.s32.totalorder %s186, %s187
      %p201 = scmp.eq.s32.totalorder %s43, 1
      %p202 = por %p200, %p201
      %p204 = scmp.ne.s32.totalorder %s187, %s203
      %p205 = scmp.eq.s32.totalorder %s43, 0
      %p206 = por %p204, %p205
      %s207 = ssub.s32 %s37, %s44
      %p208 = scmp.eq.s32.totalorder %s207, 0
      %s210 = sadd.s32 %s209, 1
      %s211 = scalar_select %p208, %s209, %s210
      %p214 = pneg %p208
      %p215 = scmp.eq.s32.totalorder %s37, 1
      %p216 = por %p214, %p215
      %p217 = scmp.ne.s32.totalorder %s209, %s212
      %p218 = scmp.eq.s32.totalorder %s37, 0
      %p219 = por %p217, %p218
      %p220 = scmp.ne.s32.totalorder %s209, %s212
      %p221 = scmp.eq.s32.totalorder %s42, 1
      %p222 = por %p220, %p221
      %p223 = scmp.ne.s32.totalorder %s212, %s213
      %p224 = scmp.eq.s32.totalorder %s42, 0
      %p225 = por %p223, %p224
      %p226 = scmp.ne.s32.totalorder %s212, %s213
      %p227 = scmp.eq.s32.totalorder %s43, 1
      %p228 = por %p226, %p227
      %p230 = scmp.ne.s32.totalorder %s213, %s229
      %p231 = scmp.eq.s32.totalorder %s43, 0
      %p232 = por %p230, %p231
      %s233 = ssub.s32 %s37, %s44
      %p234 = scmp.eq.s32.totalorder %s233, 0
      %s236 = sadd.s32 %s235, 1
      %s237 = scalar_select %p234, %s235, %s236
      %p240 = pneg %p234
      %p241 = scmp.eq.s32.totalorder %s37, 1
      %p242 = por %p240, %p241
      %p243 = scmp.ne.s32.totalorder %s235, %s238
      %p244 = scmp.eq.s32.totalorder %s37, 0
      %p245 = por %p243, %p244
      %p246 = scmp.ne.s32.totalorder %s235, %s238
      %p247 = scmp.eq.s32.totalorder %s42, 1
      %p248 = por %p246, %p247
      %p249 = scmp.ne.s32.totalorder %s238, %s239
      %p250 = scmp.eq.s32.totalorder %s42, 0
      %p251 = por %p249, %p250
      %p252 = scmp.ne.s32.totalorder %s238, %s239
      %p253 = scmp.eq.s32.totalorder %s43, 1
      %p254 = por %p252, %p253
      %p256 = scmp.ne.s32.totalorder %s239, %s255
      %p257 = scmp.eq.s32.totalorder %s43, 0
      %p258 = por %p256, %p257
      %s259 = ssub.s32 %s37, %s44
      %p260 = scmp.eq.s32.totalorder %s259, 0
      %s262 = sadd.s32 %s261, 1
      %s263 = scalar_select %p260, %s261, %s262
      %p266 = pneg %p260
      %p267 = scmp.eq.s32.totalorder %s37, 1
      %p268 = por %p266, %p267
      %p269 = scmp.ne.s32.totalorder %s261, %s264
      %p270 = scmp.eq.s32.totalorder %s37, 0
      %p271 = por %p269, %p270
      %p272 = scmp.ne.s32.totalorder %s261, %s264
      %p273 = scmp.eq.s32.totalorder %s42, 1
      %p274 = por %p272, %p273
      %p275 = scmp.ne.s32.totalorder %s264, %s265
      %p276 = scmp.eq.s32.totalorder %s42, 0
      %p277 = por %p275, %p276
      %p278 = scmp.ne.s32.totalorder %s264, %s265
      %p279 = scmp.eq.s32.totalorder %s43, 1
      %p280 = por %p278, %p279
      %p282 = scmp.ne.s32.totalorder %s265, %s281
      %p283 = scmp.eq.s32.totalorder %s43, 0
      %p284 = por %p282, %p283
      %s285 = ssub.s32 %s37, %s44
      %p286 = scmp.eq.s32.totalorder %s285, 0
      %s288 = sadd.s32 %s287, 1
      %s289 = scalar_select %p286, %s287, %s288
      %p292 = pneg %p286
      %p293 = scmp.eq.s32.totalorder %s37, 1
      %p294 = por %p292, %p293
      %p295 = scmp.ne.s32.totalorder %s287, %s290
      %p296 = scmp.eq.s32.totalorder %s37, 0
      %p297 = por %p295, %p296
      %p298 = scmp.ne.s32.totalorder %s287, %s290
      %p299 = scmp.eq.s32.totalorder %s42, 1
      %p300 = por %p298, %p299
      %p301 = scmp.ne.s32.totalorder %s290, %s291
      %p302 = scmp.eq.s32.totalorder %s42, 0
      %p303 = por %p301, %p302
      %p304 = scmp.ne.s32.totalorder %s290, %s291
      %p305 = scmp.eq.s32.totalorder %s43, 1
      %p306 = por %p304, %p305
      %p308 = scmp.ne.s32.totalorder %s291, %s307
      %p309 = scmp.eq.s32.totalorder %s43, 0
      %p310 = por %p308, %p309
      %s311 = ssub.s32 %s37, %s44
      %p312 = scmp.eq.s32.totalorder %s311, 0
      %s314 = sadd.s32 %s313, 1
      %s315 = scalar_select %p312, %s313, %s314
      %p318 = pneg %p312
      %p319 = scmp.eq.s32.totalorder %s37, 1
      %p320 = por %p318, %p319
      %p321 = scmp.ne.s32.totalorder %s313, %s316
      %p322 = scmp.eq.s32.totalorder %s37, 0
      %p323 = por %p321, %p322
      %p324 = scmp.ne.s32.totalorder %s313, %s316
      %p325 = scmp.eq.s32.totalorder %s42, 1
      %p326 = por %p324, %p325
      %p327 = scmp.ne.s32.totalorder %s316, %s317
      %p328 = scmp.eq.s32.totalorder %s42, 0
      %p329 = por %p327, %p328
      %p330 = scmp.ne.s32.totalorder %s316, %s317
      %p331 = scmp.eq.s32.totalorder %s43, 1
      %p332 = por %p330, %p331
      %p334 = scmp.ne.s32.totalorder %s317, %s333
      %p335 = scmp.eq.s32.totalorder %s43, 0
      %p336 = por %p334, %p335
      %s337 = ssub.s32 %s37, %s44
      %p338 = scmp.eq.s32.totalorder %s337, 0
      %s340 = sadd.s32 %s339, 1
      %s341 = scalar_select %p338, %s339, %s340
      %p344 = pneg %p338
      %p345 = scmp.eq.s32.totalorder %s37, 1
      %p346 = por %p344, %p345
      %p347 = scmp.ne.s32.totalorder %s339, %s342
      %p348 = scmp.eq.s32.totalorder %s37, 0
      %p349 = por %p347, %p348
      %p350 = scmp.ne.s32.totalorder %s339, %s342
      %p351 = scmp.eq.s32.totalorder %s42, 1
      %p352 = por %p350, %p351
      %p353 = scmp.ne.s32.totalorder %s342, %s343
      %p354 = scmp.eq.s32.totalorder %s42, 0
      %p355 = por %p353, %p354
      %p356 = scmp.ne.s32.totalorder %s342, %s343
      %p357 = scmp.eq.s32.totalorder %s43, 1
      %p358 = por %p356, %p357
      %p360 = scmp.ne.s32.totalorder %s343, %s359
      %p361 = scmp.eq.s32.totalorder %s43, 0
      %p362 = por %p360, %p361
      %s363 = ssub.s32 %s37, %s44
      %p364 = scmp.eq.s32.totalorder %s363, 0
      %s366 = sadd.s32 %s365, 1
      %s367 = scalar_select %p364, %s365, %s366
      %p370 = pneg %p364
      %p371 = scmp.eq.s32.totalorder %s37, 1
      %p372 = por %p370, %p371
      %p373 = scmp.ne.s32.totalorder %s365, %s368
      %p374 = scmp.eq.s32.totalorder %s37, 0
      %p375 = por %p373, %p374
      %p376 = scmp.ne.s32.totalorder %s365, %s368
      %p377 = scmp.eq.s32.totalorder %s42, 1
      %p378 = por %p376, %p377
      %p379 = scmp.ne.s32.totalorder %s368, %s369
      %p380 = scmp.eq.s32.totalorder %s42, 0
      %p381 = por %p379, %p380
      %p382 = scmp.ne.s32.totalorder %s368, %s369
      %p383 = scmp.eq.s32.totalorder %s43, 1
      %p384 = por %p382, %p383
      %p386 = scmp.ne.s32.totalorder %s369, %s385
      %p387 = scmp.eq.s32.totalorder %s43, 0
      %p388 = por %p386, %p387
      %s389 = ssub.s32 %s37, %s44
      %p390 = scmp.eq.s32.totalorder %s389, 0
      %s392 = sadd.s32 %s391, 1
      %s393 = scalar_select %p390, %s391, %s392
      %p396 = pneg %p390
      %p397 = scmp.eq.s32.totalorder %s37, 1
      %p398 = por %p396, %p397
      %p399 = scmp.ne.s32.totalorder %s391, %s394
      %p400 = scmp.eq.s32.totalorder %s37, 0
      %p401 = por %p399, %p400
      %p402 = scmp.ne.s32.totalorder %s391, %s394
      %p403 = scmp.eq.s32.totalorder %s42, 1
      %p404 = por %p402, %p403
      %p405 = scmp.ne.s32.totalorder %s394, %s395
      %p406 = scmp.eq.s32.totalorder %s42, 0
      %p407 = por %p405, %p406
      %p408 = scmp.ne.s32.totalorder %s394, %s395
      %p409 = scmp.eq.s32.totalorder %s43, 1
      %p410 = por %p408, %p409
      %p412 = scmp.ne.s32.totalorder %s395, %s411
      %p413 = scmp.eq.s32.totalorder %s43, 0
      %p414 = por %p412, %p413
      %s415 = ssub.s32 %s37, %s44
      %p416 = scmp.eq.s32.totalorder %s415, 0
      %s418 = sadd.s32 %s417, 1
      %s419 = scalar_select %p416, %s417, %s418
      %p422 = pneg %p416
      %p423 = scmp.eq.s32.totalorder %s37, 1
      %p424 = por %p422, %p423
      %p425 = scmp.ne.s32.totalorder %s417, %s420
      %p426 = scmp.eq.s32.totalorder %s37, 0
      %p427 = por %p425, %p426
      %p428 = scmp.ne.s32.totalorder %s417, %s420
      %p429 = scmp.eq.s32.totalorder %s42, 1
      %p430 = por %p428, %p429
      %p431 = scmp.ne.s32.totalorder %s420, %s421
      %p432 = scmp.eq.s32.totalorder %s42, 0
      %p433 = por %p431, %p432
      %p434 = scmp.ne.s32.totalorder %s420, %s421
      %p435 = scmp.eq.s32.totalorder %s43, 1
      %p436 = por %p434, %p435
      %p438 = scmp.ne.s32.totalorder %s421, %s437
      %p439 = scmp.eq.s32.totalorder %s43, 0
      %p440 = por %p438, %p439
      %s442 = sadd.s32 %s441, 1
      %p445 = scmp.eq.s32.totalorder %s37, 1
      %p446 = scmp.ne.s32.totalorder %s441, %s443
      %p447 = scmp.eq.s32.totalorder %s37, 0
      %p448 = por %p446, %p447
      %p449 = scmp.ne.s32.totalorder %s441, %s443
      %p450 = scmp.eq.s32.totalorder %s42, 1
      %p451 = por %p449, %p450
      %p452 = scmp.ne.s32.totalorder %s443, %s444
      %p453 = scmp.eq.s32.totalorder %s42, 0
      %p454 = por %p452, %p453
      %p455 = scmp.ne.s32.totalorder %s443, %s444
      %p456 = scmp.eq.s32.totalorder %s43, 1
      %p457 = por %p455, %p456
      %p459 = scmp.ne.s32.totalorder %s444, %s458
      %p460 = scmp.eq.s32.totalorder %s43, 0
      %p461 = por %p459, %p460
      %s463 = sadd.s32 %s462, 1
      %p466 = scmp.eq.s32.totalorder %s37, 1
      %p467 = scmp.ne.s32.totalorder %s462, %s464
      %p468 = scmp.eq.s32.totalorder %s37, 0
      %p469 = por %p467, %p468
      %p470 = scmp.ne.s32.totalorder %s462, %s464
      %p471 = scmp.eq.s32.totalorder %s42, 1
      %p472 = por %p470, %p471
      %p473 = scmp.ne.s32.totalorder %s464, %s465
      %p474 = scmp.eq.s32.totalorder %s42, 0
      %p475 = por %p473, %p474
      %p476 = scmp.ne.s32.totalorder %s464, %s465
      %p477 = scmp.eq.s32.totalorder %s43, 1
      %p478 = por %p476, %p477
      %p480 = scmp.ne.s32.totalorder %s465, %s479
      %p481 = scmp.eq.s32.totalorder %s43, 0
      %p482 = por %p480, %p481
      %s484 = sadd.s32 %s483, 1
      %p487 = scmp.eq.s32.totalorder %s37, 1
      %p488 = scmp.ne.s32.totalorder %s483, %s485
      %p489 = scmp.eq.s32.totalorder %s37, 0
      %p490 = por %p488, %p489
      %p491 = scmp.ne.s32.totalorder %s483, %s485
      %p492 = scmp.eq.s32.totalorder %s42, 1
      %p493 = por %p491, %p492
      %p494 = scmp.ne.s32.totalorder %s485, %s486
      %p495 = scmp.eq.s32.totalorder %s42, 0
      %p496 = por %p494, %p495
      %p497 = scmp.ne.s32.totalorder %s485, %s486
      %p498 = scmp.eq.s32.totalorder %s43, 1
      %p499 = por %p497, %p498
      %p501 = scmp.ne.s32.totalorder %s486, %s500
      %p502 = scmp.eq.s32.totalorder %s43, 0
      %p503 = por %p501, %p502
      %s505 = sadd.s32 %s504, 1
      %p508 = scmp.eq.s32.totalorder %s37, 1
      %p509 = scmp.ne.s32.totalorder %s504, %s506
      %p510 = scmp.eq.s32.totalorder %s37, 0
      %p511 = por %p509, %p510
      %p512 = scmp.ne.s32.totalorder %s504, %s506
      %p513 = scmp.eq.s32.totalorder %s42, 1
      %p514 = por %p512, %p513
      %p515 = scmp.ne.s32.totalorder %s506, %s507
      %p516 = scmp.eq.s32.totalorder %s42, 0
      %p517 = por %p515, %p516
      %p518 = scmp.ne.s32.totalorder %s506, %s507
      %p519 = scmp.eq.s32.totalorder %s43, 1
      %p520 = por %p518, %p519
      %p522 = scmp.ne.s32.totalorder %s507, %s521
      %p523 = scmp.eq.s32.totalorder %s43, 0
      %p524 = por %p522, %p523
      %s526 = sadd.s32 %s525, 1
      %p529 = scmp.eq.s32.totalorder %s37, 1
      %p530 = scmp.ne.s32.totalorder %s525, %s527
      %p531 = scmp.eq.s32.totalorder %s37, 0
      %p532 = por %p530, %p531
      %p533 = scmp.ne.s32.totalorder %s525, %s527
      %p534 = scmp.eq.s32.totalorder %s42, 1
      %p535 = por %p533, %p534
      %p536 = scmp.ne.s32.totalorder %s527, %s528
      %p537 = scmp.eq.s32.totalorder %s42, 0
      %p538 = por %p536, %p537
      %p539 = scmp.ne.s32.totalorder %s527, %s528
      %p540 = scmp.eq.s32.totalorder %s43, 1
      %p541 = por %p539, %p540
      %p543 = scmp.ne.s32.totalorder %s528, %s542
      %p544 = scmp.eq.s32.totalorder %s43, 0
      %p545 = por %p543, %p544
      %s547 = sadd.s32 %s546, 1
      %p550 = scmp.eq.s32.totalorder %s37, 1
      %p551 = scmp.ne.s32.totalorder %s546, %s548
      %p552 = scmp.eq.s32.totalorder %s37, 0
      %p553 = por %p551, %p552
      %p554 = scmp.ne.s32.totalorder %s546, %s548
      %p555 = scmp.eq.s32.totalorder %s42, 1
      %p556 = por %p554, %p555
      %p557 = scmp.ne.s32.totalorder %s548, %s549
      %p558 = scmp.eq.s32.totalorder %s42, 0
      %p559 = por %p557, %p558
      %p560 = scmp.ne.s32.totalorder %s548, %s549
      %p561 = scmp.eq.s32.totalorder %s43, 1
      %p562 = por %p560, %p561
      %p564 = scmp.ne.s32.totalorder %s549, %s563
      %p565 = scmp.eq.s32.totalorder %s43, 0
      %p566 = por %p564, %p565
      %s568 = sadd.s32 %s567, 1
      %p571 = scmp.eq.s32.totalorder %s37, 1
      %p572 = scmp.ne.s32.totalorder %s567, %s569
      %p573 = scmp.eq.s32.totalorder %s37, 0
      %p574 = por %p572, %p573
      %p575 = scmp.ne.s32.totalorder %s567, %s569
      %p576 = scmp.eq.s32.totalorder %s42, 1
      %p577 = por %p575, %p576
      %p578 = scmp.ne.s32.totalorder %s569, %s570
      %p579 = scmp.eq.s32.totalorder %s42, 0
      %p580 = por %p578, %p579
      %p581 = scmp.ne.s32.totalorder %s569, %s570
      %p582 = scmp.eq.s32.totalorder %s43, 1
      %p583 = por %p581, %p582
      %p585 = scmp.ne.s32.totalorder %s570, %s584
      %p586 = scmp.eq.s32.totalorder %s43, 0
      %p587 = por %p585, %p586
      %s589 = sadd.s32 %s588, 1
      %p592 = scmp.eq.s32.totalorder %s37, 1
      %p593 = scmp.ne.s32.totalorder %s588, %s590
      %p594 = scmp.eq.s32.totalorder %s37, 0
      %p595 = por %p593, %p594
      %p596 = scmp.ne.s32.totalorder %s588, %s590
      %p597 = scmp.eq.s32.totalorder %s42, 1
      %p598 = por %p596, %p597
      %p599 = scmp.ne.s32.totalorder %s590, %s591
      %p600 = scmp.eq.s32.totalorder %s42, 0
      %p601 = por %p599, %p600
      %p602 = scmp.ne.s32.totalorder %s590, %s591
      %p603 = scmp.eq.s32.totalorder %s43, 1
      %p604 = por %p602, %p603
      %p606 = scmp.ne.s32.totalorder %s591, %s605
      %p607 = scmp.eq.s32.totalorder %s43, 0
      %p608 = por %p606, %p607
      %s610 = sadd.s32 %s609, 1
      %p613 = scmp.eq.s32.totalorder %s37, 1
      %p614 = scmp.ne.s32.totalorder %s609, %s611
      %p615 = scmp.eq.s32.totalorder %s37, 0
      %p616 = por %p614, %p615
      %p617 = scmp.ne.s32.totalorder %s609, %s611
      %p618 = scmp.eq.s32.totalorder %s42, 1
      %p619 = por %p617, %p618
      %p620 = scmp.ne.s32.totalorder %s611, %s612
      %p621 = scmp.eq.s32.totalorder %s42, 0
      %p622 = por %p620, %p621
      %p623 = scmp.ne.s32.totalorder %s611, %s612
      %p624 = scmp.eq.s32.totalorder %s43, 1
      %p625 = por %p623, %p624
      %p627 = scmp.ne.s32.totalorder %s612, %s626
      %p628 = scmp.eq.s32.totalorder %s43, 0
      %p629 = por %p627, %p628
      %s631 = sadd.s32 %s630, 1
      %p634 = scmp.eq.s32.totalorder %s37, 1
      %p635 = scmp.ne.s32.totalorder %s630, %s632
      %p636 = scmp.eq.s32.totalorder %s37, 0
      %p637 = por %p635, %p636
      %p638 = scmp.ne.s32.totalorder %s630, %s632
      %p639 = scmp.eq.s32.totalorder %s42, 1
      %p640 = por %p638, %p639
      %p641 = scmp.ne.s32.totalorder %s632, %s633
      %p642 = scmp.eq.s32.totalorder %s42, 0
      %p643 = por %p641, %p642
      %p644 = scmp.ne.s32.totalorder %s632, %s633
      %p645 = scmp.eq.s32.totalorder %s43, 1
      %p646 = por %p644, %p645
      %p648 = scmp.ne.s32.totalorder %s633, %s647
      %p649 = scmp.eq.s32.totalorder %s43, 0
      %p650 = por %p648, %p649
      %s652 = sadd.s32 %s651, 1
      %p655 = scmp.eq.s32.totalorder %s37, 1
      %p656 = scmp.ne.s32.totalorder %s651, %s653
      %p657 = scmp.eq.s32.totalorder %s37, 0
      %p658 = por %p656, %p657
      %p659 = scmp.ne.s32.totalorder %s651, %s653
      %p660 = scmp.eq.s32.totalorder %s42, 1
      %p661 = por %p659, %p660
      %p662 = scmp.ne.s32.totalorder %s653, %s654
      %p663 = scmp.eq.s32.totalorder %s42, 0
      %p664 = por %p662, %p663
      %p665 = scmp.ne.s32.totalorder %s653, %s654
      %p666 = scmp.eq.s32.totalorder %s43, 1
      %p667 = por %p665, %p666
      %p669 = scmp.ne.s32.totalorder %s654, %s668
      %p670 = scmp.eq.s32.totalorder %s43, 0
      %p671 = por %p669, %p670
      %p672 = scmp.le.s32.totalorder 1, %s37
      %p673 = scmp.lt.s32.totalorder %s37, 3
      %p674 = pnand %p672, %p673
      %p675 = pneg %p674
      // Predicated region
      $region9: #{sentiment_classifier_forward.1} parent=5 // pred_check
        _
      $region10: #{sentiment_classifier_forward.1} parent=5 // pred_check_branch
        %677 = sbr.rel (%p674) target = $region12
      $region11: #{sentiment_classifier_forward.1} parent=5 // pred_region
        %s678 = ssub.s32 %s37, 1
        // Predicated region
        $region13: #{sentiment_classifier_forward.1} parent=11 // pred_check
          %p679 = pneg %p58
        $region14: #{sentiment_classifier_forward.1} parent=11 // pred_check_branch
          %681 = sbr.rel (%p679) target = $region16
        $region15: #{sentiment_classifier_forward.1} parent=11 // pred_region
          _
        $region16: #{sentiment_classifier_forward.1} parent=11 // pred_fallthru
          _
        // Predicated region
        $region17: #{sentiment_classifier_forward.1} parent=11 // pred_check
          %p682 = pneg %p79
        $region18: #{sentiment_classifier_forward.1} parent=11 // pred_check_branch
          %684 = sbr.rel (%p682) target = $region20
        $region19: #{sentiment_classifier_forward.1} parent=11 // pred_region
          _
        $region20: #{sentiment_classifier_forward.1} parent=11 // pred_fallthru
          _
        // Predicated region
        $region21: #{sentiment_classifier_forward.1} parent=11 // pred_check
          %p685 = pneg %p100
        $region22: #{sentiment_classifier_forward.1} parent=11 // pred_check_branch
          %687 = sbr.rel (%p685) target = $region24
        $region23: #{sentiment_classifier_forward.1} parent=11 // pred_region
          %s689 = ssub.s32 16, 16
          %690 = vsyncadd [#allocation4], %s689
          %s692 = sshll.u32 [#allocation3], 4
          %s693 = int_to_ptr.vmem [resolvable:$true] %s692
          %695 = dma.hbm_to_vmem [thread:$0]  %s2, 16, %s693, [#allocation4]
        $region24: #{sentiment_classifier_forward.1} parent=11 // pred_fallthru
          _
        // Predicated region
        $region25: #{sentiment_classifier_forward.1} parent=11 // pred_check
          %p696 = pneg %p121
        $region26: #{sentiment_classifier_forward.1} parent=11 // pred_check_branch
          %698 = sbr.rel (%p696) target = $region28
        $region27: #{sentiment_classifier_forward.1} parent=11 // pred_region
          %s700 = ssub.s32 16, 16
          %701 = vsyncadd [#allocation6], %s700
          %s703 = sshll.u32 [#allocation5], 4
          %s704 = int_to_ptr.vmem [resolvable:$true] %s703
          %706 = dma.hbm_to_vmem [thread:$0]  %s3, 16, %s704, [#allocation6]
        $region28: #{sentiment_classifier_forward.1} parent=11 // pred_fallthru
          _
        // Predicated region
        $region29: #{sentiment_classifier_forward.1} parent=11 // pred_check
          %p707 = pneg %p454
        $region30: #{sentiment_classifier_forward.1} parent=11 // pred_check_branch
          %709 = sbr.rel (%p707) target = $region32
        $region31: #{sentiment_classifier_forward.1} parent=11 // pred_region
          _
        $region32: #{sentiment_classifier_forward.1} parent=11 // pred_fallthru
          _
        // Predicated region
        $region33: #{sentiment_classifier_forward.1} parent=11 // pred_check
          %p710 = pneg %p475
        $region34: #{sentiment_classifier_forward.1} parent=11 // pred_check_branch
          %712 = sbr.rel (%p710) target = $region36
        $region35: #{sentiment_classifier_forward.1} parent=11 // pred_region
          _
        $region36: #{sentiment_classifier_forward.1} parent=11 // pred_fallthru
          _
        // Predicated region
        $region37: #{sentiment_classifier_forward.1} parent=11 // pred_check
          %p713 = pneg %p496
        $region38: #{sentiment_classifier_forward.1} parent=11 // pred_check_branch
          %715 = sbr.rel (%p713) target = $region40
        $region39: #{sentiment_classifier_forward.1} parent=11 // pred_region
          %s717 = ssub.s32 6144, 6144
          %718 = vsyncadd [#allocation6], %s717
          %s719 = sshll.u32 [#allocation17], 4
          %s720 = int_to_ptr.vmem [resolvable:$true] %s719
          %725 = dma.hbm_to_vmem [thread:$0]  %s18, 6144, %s720, [#allocation6], 384, 384, 24
        $region40: #{sentiment_classifier_forward.1} parent=11 // pred_fallthru
          _
        // Predicated region
        $region41: #{sentiment_classifier_forward.1} parent=11 // pred_check
          %p726 = pneg %p517
        $region42: #{sentiment_classifier_forward.1} parent=11 // pred_check_branch
          %728 = sbr.rel (%p726) target = $region44
        $region43: #{sentiment_classifier_forward.1} parent=11 // pred_region
          _
        $region44: #{sentiment_classifier_forward.1} parent=11 // pred_fallthru
          _
        // Predicated region
        $region45: #{sentiment_classifier_forward.1} parent=11 // pred_check
          %p729 = pneg %p538
        $region46: #{sentiment_classifier_forward.1} parent=11 // pred_check_branch
          %731 = sbr.rel (%p729) target = $region48
        $region47: #{sentiment_classifier_forward.1} parent=11 // pred_region
          %s733 = ssub.s32 24576, 24576
          %734 = vsyncadd [#allocation19], %s733
          %s735 = sshll.u32 [#allocation18], 4
          %s736 = int_to_ptr.vmem [resolvable:$true] %s735
          %741 = dma.hbm_to_vmem [thread:$0]  %s20, 24576, %s736, [#allocation19], 256, 256, 16
        $region48: #{sentiment_classifier_forward.1} parent=11 // pred_fallthru
          _
        // Predicated region
        $region49: #{sentiment_classifier_forward.1} parent=11 // pred_check
          %p742 = pneg %p559
        $region50: #{sentiment_classifier_forward.1} parent=11 // pred_check_branch
          %744 = sbr.rel (%p742) target = $region52
        $region51: #{sentiment_classifier_forward.1} parent=11 // pred_region
          %s746 = ssub.s32 64, 64
          %747 = vsyncadd [#allocation19], %s746
          %s749 = sshll.u32 [#allocation20], 4
          %s750 = int_to_ptr.vmem [resolvable:$true] %s749
          %752 = dma.hbm_to_vmem [thread:$0]  %s21, 64, %s750, [#allocation19]
        $region52: #{sentiment_classifier_forward.1} parent=11 // pred_fallthru
          _
        // Predicated region
        $region53: #{sentiment_classifier_forward.1} parent=11 // pred_check
          %p753 = pneg %p580
        $region54: #{sentiment_classifier_forward.1} parent=11 // pred_check_branch
          %755 = sbr.rel (%p753) target = $region56
        $region55: #{sentiment_classifier_forward.1} parent=11 // pred_region
          %s757 = ssub.s32 8192, 8192
          %758 = vsyncadd [#allocation22], %s757
          %s759 = sshll.u32 [#allocation21], 4
          %s760 = int_to_ptr.vmem [resolvable:$true] %s759
          %765 = dma.hbm_to_vmem [thread:$0]  %s22, 8192, %s760, [#allocation22], 128, 128, 8
        $region56: #{sentiment_classifier_forward.1} parent=11 // pred_fallthru
          _
        // Predicated region
        $region57: #{sentiment_classifier_forward.1} parent=11 // pred_check
          %p766 = pneg %p601
        $region58: #{sentiment_classifier_forward.1} parent=11 // pred_check_branch
          %768 = sbr.rel (%p766) target = $region60
        $region59: #{sentiment_classifier_forward.1} parent=11 // pred_region
          %s770 = ssub.s32 32, 32
          %771 = vsyncadd [#allocation22], %s770
          %s773 = sshll.u32 [#allocation23], 4
          %s774 = int_to_ptr.vmem [resolvable:$true] %s773
          %776 = dma.hbm_to_vmem [thread:$0]  %s23, 32, %s774, [#allocation22]
        $region60: #{sentiment_classifier_forward.1} parent=11 // pred_fallthru
          _
        // Predicated region
        $region61: #{sentiment_classifier_forward.1} parent=11 // pred_check
          %p777 = pneg %p622
        $region62: #{sentiment_classifier_forward.1} parent=11 // pred_check_branch
          %779 = sbr.rel (%p777) target = $region64
        $region63: #{sentiment_classifier_forward.1} parent=11 // pred_region
          %s781 = ssub.s32 2048, 2048
          %782 = vsyncadd [#allocation25], %s781
          %s783 = sshll.u32 [#allocation24], 4
          %s784 = int_to_ptr.vmem [resolvable:$true] %s783
          %789 = dma.hbm_to_vmem [thread:$0]  %s24, 2048, %s784, [#allocation25], 64, 64, 4
        $region64: #{sentiment_classifier_forward.1} parent=11 // pred_fallthru
          _
        // Predicated region
        $region65: #{sentiment_classifier_forward.1} parent=11 // pred_check
          %p790 = pneg %p643
        $region66: #{sentiment_classifier_forward.1} parent=11 // pred_check_branch
          %792 = sbr.rel (%p790) target = $region68
        $region67: #{sentiment_classifier_forward.1} parent=11 // pred_region
          _
        $region68: #{sentiment_classifier_forward.1} parent=11 // pred_fallthru
          _
      $region12: #{sentiment_classifier_forward.1} parent=5 // pred_fallthru
        _
      %p793 = scmp.lt.s32.totalorder %s37, 2
      // Predicated region
      $region69: #{sentiment_classifier_forward.1} parent=5 // pred_check
        %p794 = pneg %p793
      $region70: #{sentiment_classifier_forward.1} parent=5 // pred_check_branch
        %796 = sbr.rel (%p794) target = $region72
      $region71: #{sentiment_classifier_forward.1} parent=5 // pred_region
        // Predicated region
        $region73: #{sentiment_classifier_forward.1} parent=71 // pred_check
          %p797 = pneg %p141
        $region74: #{sentiment_classifier_forward.1} parent=71 // pred_check_branch
          %799 = sbr.rel (%p797) target = $region76
        $region75: #{sentiment_classifier_forward.1} parent=71 // pred_region
          %s800 = sand.u32 %s37, 1
          %s801 = scalar_lea.sflag [#allocation4], %s800
          %s802 = sand.u32 %s131, 1
          %s803 = smul.addr %s802, 192
          %s804 = scalar_lea.vmem [#allocation7], %s803
          %s806 = ssub.s32 3072, 3072
          %807 = vsyncadd %s801, %s806
          %s808 = smul.addr %s37, 48
          %s809 = smul.addr %s808, 64
          %s810 = scalar_lea.hbm %s4, %s809
          %s811 = sshll.u32 %s804, 4
          %s812 = int_to_ptr.vmem [resolvable:$true] %s811
          %817 = dma.hbm_to_vmem [thread:$0]  %s810, 3072, %s812, %s801, 192, 192, 12
        $region76: #{sentiment_classifier_forward.1} parent=71 // pred_fallthru
          _
        // Predicated region
        $region77: #{sentiment_classifier_forward.1} parent=71 // pred_check
          %p818 = pneg %p167
        $region78: #{sentiment_classifier_forward.1} parent=71 // pred_check_branch
          %820 = sbr.rel (%p818) target = $region80
        $region79: #{sentiment_classifier_forward.1} parent=71 // pred_region
          %p821 = scmp.lt.s32.totalorder %s37, 1
          %s822 = scalar_select %p821, %s37, 1
          %s823 = smul.addr %s822, 3
          %s824 = scalar_lea.vmem %s5, %s823
        $region80: #{sentiment_classifier_forward.1} parent=71 // pred_fallthru
          _
        // Predicated region
        $region81: #{sentiment_classifier_forward.1} parent=71 // pred_check
          %p825 = pneg %p193
        $region82: #{sentiment_classifier_forward.1} parent=71 // pred_check_branch
          %827 = sbr.rel (%p825) target = $region84
        $region83: #{sentiment_classifier_forward.1} parent=71 // pred_region
          %s828 = sand.u32 %s37, 1
          %s829 = scalar_lea.sflag [#allocation4], %s828
          %s830 = sand.u32 %s183, 1
          %s831 = smul.addr %s830, 64
          %s832 = scalar_lea.vmem [#allocation8], %s831
          %s834 = ssub.s32 1024, 1024
          %835 = vsyncadd %s829, %s834
          %s836 = smul.addr %s37, 16
          %s837 = smul.addr %s836, 64
          %s838 = scalar_lea.hbm %s6, %s837
          %s839 = sshll.u32 %s832, 4
          %s840 = int_to_ptr.vmem [resolvable:$true] %s839
          %845 = dma.hbm_to_vmem [thread:$0]  %s838, 1024, %s840, %s829, 64, 64, 4
        $region84: #{sentiment_classifier_forward.1} parent=71 // pred_fallthru
          _
        // Predicated region
        $region85: #{sentiment_classifier_forward.1} parent=71 // pred_check
          %p846 = pneg %p219
        $region86: #{sentiment_classifier_forward.1} parent=71 // pred_check_branch
          %848 = sbr.rel (%p846) target = $region88
        $region87: #{sentiment_classifier_forward.1} parent=71 // pred_region
          %s849 = sand.u32 %s37, 1
          %s850 = scalar_lea.sflag [#allocation4], %s849
          %s851 = sand.u32 %s209, 1
          %s852 = scalar_lea.vmem [#allocation9], %s851
          %s854 = ssub.s32 16, 16
          %855 = vsyncadd %s850, %s854
          %s856 = smul.addr %s37, 16
          %s857 = scalar_lea.hbm %s7, %s856
          %s859 = sshll.u32 %s852, 4
          %s860 = int_to_ptr.vmem [resolvable:$true] %s859
          %862 = dma.hbm_to_vmem [thread:$0]  %s857, 16, %s860, %s850
        $region88: #{sentiment_classifier_forward.1} parent=71 // pred_fallthru
          _
        // Predicated region
        $region89: #{sentiment_classifier_forward.1} parent=71 // pred_check
          %p863 = pneg %p245
        $region90: #{sentiment_classifier_forward.1} parent=71 // pred_check_branch
          %865 = sbr.rel (%p863) target = $region92
        $region91: #{sentiment_classifier_forward.1} parent=71 // pred_region
          %s866 = sand.u32 %s37, 1
          %s867 = scalar_lea.sflag [#allocation4], %s866
          %s868 = sand.u32 %s235, 1
          %s869 = scalar_lea.vmem [#allocation10], %s868
          %s871 = ssub.s32 16, 16
          %872 = vsyncadd %s867, %s871
          %s873 = smul.addr %s37, 16
          %s874 = scalar_lea.hbm %s8, %s873
          %s876 = sshll.u32 %s869, 4
          %s877 = int_to_ptr.vmem [resolvable:$true] %s876
          %879 = dma.hbm_to_vmem [thread:$0]  %s874, 16, %s877, %s867
        $region92: #{sentiment_classifier_forward.1} parent=71 // pred_fallthru
          _
        // Predicated region
        $region93: #{sentiment_classifier_forward.1} parent=71 // pred_check
          %p880 = pneg %p271
        $region94: #{sentiment_classifier_forward.1} parent=71 // pred_check_branch
          %882 = sbr.rel (%p880) target = $region96
        $region95: #{sentiment_classifier_forward.1} parent=71 // pred_region
          %s883 = sand.u32 %s37, 1
          %s884 = scalar_lea.sflag [#allocation4], %s883
          %s885 = sand.u32 %s261, 1
          %s886 = scalar_lea.vmem [#allocation11], %s885
          %s888 = ssub.s32 16, 16
          %889 = vsyncadd %s884, %s888
          %s890 = smul.addr %s37, 16
          %s891 = scalar_lea.hbm %s9, %s890
          %s893 = sshll.u32 %s886, 4
          %s894 = int_to_ptr.vmem [resolvable:$true] %s893
          %896 = dma.hbm_to_vmem [thread:$0]  %s891, 16, %s894, %s884
        $region96: #{sentiment_classifier_forward.1} parent=71 // pred_fallthru
          _
        // Predicated region
        $region97: #{sentiment_classifier_forward.1} parent=71 // pred_check
          %p897 = pneg %p297
        $region98: #{sentiment_classifier_forward.1} parent=71 // pred_check_branch
          %899 = sbr.rel (%p897) target = $region100
        $region99: #{sentiment_classifier_forward.1} parent=71 // pred_region
          %p900 = scmp.lt.s32.totalorder %s37, 1
          %s901 = scalar_select %p900, %s37, 1
          %s902 = smul.addr %s901, 32
          %s903 = smul.addr %s902, 4
          %s904 = scalar_lea.vmem %s10, %s903
        $region100: #{sentiment_classifier_forward.1} parent=71 // pred_fallthru
          _
        // Predicated region
        $region101: #{sentiment_classifier_forward.1} parent=71 // pred_check
          %p905 = pneg %p323
        $region102: #{sentiment_classifier_forward.1} parent=71 // pred_check_branch
          %907 = sbr.rel (%p905) target = $region104
        $region103: #{sentiment_classifier_forward.1} parent=71 // pred_region
          %s908 = sand.u32 %s37, 1
          %s909 = scalar_lea.sflag [#allocation4], %s908
          %s910 = sand.u32 %s313, 1
          %s911 = smul.addr %s910, 2
          %s912 = scalar_lea.vmem [#allocation12], %s911
          %s914 = ssub.s32 32, 32
          %915 = vsyncadd %s909, %s914
          %s916 = smul.addr %s37, 2
          %s917 = smul.addr %s916, 16
          %s918 = scalar_lea.hbm %s11, %s917
          %s920 = sshll.u32 %s912, 4
          %s921 = int_to_ptr.vmem [resolvable:$true] %s920
          %923 = dma.hbm_to_vmem [thread:$0]  %s918, 32, %s921, %s909
        $region104: #{sentiment_classifier_forward.1} parent=71 // pred_fallthru
          _
        // Predicated region
        $region105: #{sentiment_classifier_forward.1} parent=71 // pred_check
          %p924 = pneg %p349
        $region106: #{sentiment_classifier_forward.1} parent=71 // pred_check_branch
          %926 = sbr.rel (%p924) target = $region108
        $region107: #{sentiment_classifier_forward.1} parent=71 // pred_region
          %s927 = sand.u32 %s37, 1
          %s928 = scalar_lea.sflag [#allocation4], %s927
          %s929 = sand.u32 %s339, 1
          %s930 = smul.addr %s929, 128
          %s931 = scalar_lea.vmem [#allocation13], %s930
          %s933 = ssub.s32 2048, 2048
          %934 = vsyncadd %s928, %s933
          %s935 = smul.addr %s37, 32
          %s936 = smul.addr %s935, 64
          %s937 = scalar_lea.hbm %s12, %s936
          %s938 = sshll.u32 %s931, 4
          %s939 = int_to_ptr.vmem [resolvable:$true] %s938
          %944 = dma.hbm_to_vmem [thread:$0]  %s937, 2048, %s939, %s928, 64, 64, 4
        $region108: #{sentiment_classifier_forward.1} parent=71 // pred_fallthru
          _
        // Predicated region
        $region109: #{sentiment_classifier_forward.1} parent=71 // pred_check
          %p945 = pneg %p375
        $region110: #{sentiment_classifier_forward.1} parent=71 // pred_check_branch
          %947 = sbr.rel (%p945) target = $region112
        $region111: #{sentiment_classifier_forward.1} parent=71 // pred_region
          %s948 = sand.u32 %s37, 1
          %s949 = scalar_lea.sflag [#allocation4], %s948
          %s950 = sand.u32 %s365, 1
          %s951 = scalar_lea.vmem [#allocation14], %s950
          %s953 = ssub.s32 16, 16
          %954 = vsyncadd %s949, %s953
          %s955 = smul.addr %s37, 16
          %s956 = scalar_lea.hbm %s13, %s955
          %s958 = sshll.u32 %s951, 4
          %s959 = int_to_ptr.vmem [resolvable:$true] %s958
          %961 = dma.hbm_to_vmem [thread:$0]  %s956, 16, %s959, %s949
        $region112: #{sentiment_classifier_forward.1} parent=71 // pred_fallthru
          _
        // Predicated region
        $region113: #{sentiment_classifier_forward.1} parent=71 // pred_check
          %p962 = pneg %p401
        $region114: #{sentiment_classifier_forward.1} parent=71 // pred_check_branch
          %964 = sbr.rel (%p962) target = $region116
        $region115: #{sentiment_classifier_forward.1} parent=71 // pred_region
          %s965 = sand.u32 %s37, 1
          %s966 = scalar_lea.sflag [#allocation4], %s965
          %s967 = sand.u32 %s391, 1
          %s968 = scalar_lea.vmem [#allocation15], %s967
          %s970 = ssub.s32 16, 16
          %971 = vsyncadd %s966, %s970
          %s972 = smul.addr %s37, 16
          %s973 = scalar_lea.hbm %s14, %s972
          %s975 = sshll.u32 %s968, 4
          %s976 = int_to_ptr.vmem [resolvable:$true] %s975
          %978 = dma.hbm_to_vmem [thread:$0]  %s973, 16, %s976, %s966
        $region116: #{sentiment_classifier_forward.1} parent=71 // pred_fallthru
          _
        // Predicated region
        $region117: #{sentiment_classifier_forward.1} parent=71 // pred_check
          %p979 = pneg %p427
        $region118: #{sentiment_classifier_forward.1} parent=71 // pred_check_branch
          %981 = sbr.rel (%p979) target = $region120
        $region119: #{sentiment_classifier_forward.1} parent=71 // pred_region
          %s982 = sand.u32 %s37, 1
          %s983 = scalar_lea.sflag [#allocation4], %s982
          %s984 = sand.u32 %s417, 1
          %s985 = scalar_lea.vmem [#allocation16], %s984
          %s987 = ssub.s32 16, 16
          %988 = vsyncadd %s983, %s987
          %s989 = smul.addr %s37, 16
          %s990 = scalar_lea.hbm %s15, %s989
          %s992 = sshll.u32 %s985, 4
          %s993 = int_to_ptr.vmem [resolvable:$true] %s992
          %995 = dma.hbm_to_vmem [thread:$0]  %s990, 16, %s993, %s983
        $region120: #{sentiment_classifier_forward.1} parent=71 // pred_fallthru
          _
      $region72: #{sentiment_classifier_forward.1} parent=5 // pred_fallthru
        _
      %p996 = scmp.le.s32.totalorder 1, %s37
      %p997 = scmp.lt.s32.totalorder %s37, 3
      %p998 = pnand %p996, %p997
      %p999 = pneg %p998
      // Predicated region
      $region121: #{sentiment_classifier_forward.1} parent=5 // pred_check
        _
      $region122: #{sentiment_classifier_forward.1} parent=5 // pred_check_branch
        %1001 = sbr.rel (%p998) target = $region124
      $region123: #{sentiment_classifier_forward.1} parent=5 // pred_region
        %s1002 = ssub.s32 %s37, 1
        // Predicated region
        $region125: #{sentiment_classifier_forward.1} parent=123 // pred_check
          %p1003 = pneg %p100
        $region126: #{sentiment_classifier_forward.1} parent=123 // pred_check_branch
          %1005 = sbr.rel (%p1003) target = $region128
        $region127: #{sentiment_classifier_forward.1} parent=123 // pred_region
          %1006 = dma.done [#allocation4], 16
        $region128: #{sentiment_classifier_forward.1} parent=123 // pred_fallthru
          _
        // Predicated region
        $region129: #{sentiment_classifier_forward.1} parent=123 // pred_check
          %p1007 = pneg %p121
        $region130: #{sentiment_classifier_forward.1} parent=123 // pred_check_branch
          %1009 = sbr.rel (%p1007) target = $region132
        $region131: #{sentiment_classifier_forward.1} parent=123 // pred_region
          %1010 = dma.done [#allocation6], 16
        $region132: #{sentiment_classifier_forward.1} parent=123 // pred_fallthru
          _
        %s1011 = sand.u32 %s42, 1
        %s1012 = scalar_lea.sflag [#allocation4], %s1011
        %s1013 = sand.u32 %s134, 1
        %s1014 = smul.addr %s1013, 192
        %s1015 = scalar_lea.vmem [#allocation7], %s1014
        // Predicated region
        $region133: #{sentiment_classifier_forward.1} parent=123 // pred_check
          %p1016 = pneg %p147
        $region134: #{sentiment_classifier_forward.1} parent=123 // pred_check_branch
          %1018 = sbr.rel (%p1016) target = $region136
        $region135: #{sentiment_classifier_forward.1} parent=123 // pred_region
          %1019 = dma.done %s1012, 3072
        $region136: #{sentiment_classifier_forward.1} parent=123 // pred_fallthru
          _
        %s1020 = sand.u32 %s42, 1
        %s1021 = scalar_lea.sflag [#allocation4], %s1020
        %s1022 = sand.u32 %s186, 1
        %s1023 = smul.addr %s1022, 64
        %s1024 = scalar_lea.vmem [#allocation8], %s1023
        // Predicated region
        $region137: #{sentiment_classifier_forward.1} parent=123 // pred_check
          %p1025 = pneg %p199
        $region138: #{sentiment_classifier_forward.1} parent=123 // pred_check_branch
          %1027 = sbr.rel (%p1025) target = $region140
        $region139: #{sentiment_classifier_forward.1} parent=123 // pred_region
          %1028 = dma.done %s1021, 1024
        $region140: #{sentiment_classifier_forward.1} parent=123 // pred_fallthru
          _
        %s1029 = sand.u32 %s42, 1
        %s1030 = scalar_lea.sflag [#allocation4], %s1029
        %s1031 = sand.u32 %s212, 1
        %s1032 = scalar_lea.vmem [#allocation9], %s1031
        // Predicated region
        $region141: #{sentiment_classifier_forward.1} parent=123 // pred_check
          %p1033 = pneg %p225
        $region142: #{sentiment_classifier_forward.1} parent=123 // pred_check_branch
          %1035 = sbr.rel (%p1033) target = $region144
        $region143: #{sentiment_classifier_forward.1} parent=123 // pred_region
          %1036 = dma.done %s1030, 16
        $region144: #{sentiment_classifier_forward.1} parent=123 // pred_fallthru
          _
        %s1037 = sand.u32 %s42, 1
        %s1038 = scalar_lea.sflag [#allocation4], %s1037
        %s1039 = sand.u32 %s238, 1
        %s1040 = scalar_lea.vmem [#allocation10], %s1039
        // Predicated region
        $region145: #{sentiment_classifier_forward.1} parent=123 // pred_check
          %p1041 = pneg %p251
        $region146: #{sentiment_classifier_forward.1} parent=123 // pred_check_branch
          %1043 = sbr.rel (%p1041) target = $region148
        $region147: #{sentiment_classifier_forward.1} parent=123 // pred_region
          %1044 = dma.done %s1038, 16
        $region148: #{sentiment_classifier_forward.1} parent=123 // pred_fallthru
          _
        %s1045 = sand.u32 %s42, 1
        %s1046 = scalar_lea.sflag [#allocation4], %s1045
        %s1047 = sand.u32 %s264, 1
        %s1048 = scalar_lea.vmem [#allocation11], %s1047
        // Predicated region
        $region149: #{sentiment_classifier_forward.1} parent=123 // pred_check
          %p1049 = pneg %p277
        $region150: #{sentiment_classifier_forward.1} parent=123 // pred_check_branch
          %1051 = sbr.rel (%p1049) target = $region152
        $region151: #{sentiment_classifier_forward.1} parent=123 // pred_region
          %1052 = dma.done %s1046, 16
        $region152: #{sentiment_classifier_forward.1} parent=123 // pred_fallthru
          _
        %s1053 = sand.u32 %s42, 1
        %s1054 = scalar_lea.sflag [#allocation4], %s1053
        %s1055 = sand.u32 %s316, 1
        %s1056 = smul.addr %s1055, 2
        %s1057 = scalar_lea.vmem [#allocation12], %s1056
        // Predicated region
        $region153: #{sentiment_classifier_forward.1} parent=123 // pred_check
          %p1058 = pneg %p329
        $region154: #{sentiment_classifier_forward.1} parent=123 // pred_check_branch
          %1060 = sbr.rel (%p1058) target = $region156
        $region155: #{sentiment_classifier_forward.1} parent=123 // pred_region
          %1061 = dma.done %s1054, 32
        $region156: #{sentiment_classifier_forward.1} parent=123 // pred_fallthru
          _
        %s1062 = sand.u32 %s42, 1
        %s1063 = scalar_lea.sflag [#allocation4], %s1062
        %s1064 = sand.u32 %s342, 1
        %s1065 = smul.addr %s1064, 128
        %s1066 = scalar_lea.vmem [#allocation13], %s1065
        // Predicated region
        $region157: #{sentiment_classifier_forward.1} parent=123 // pred_check
          %p1067 = pneg %p355
        $region158: #{sentiment_classifier_forward.1} parent=123 // pred_check_branch
          %1069 = sbr.rel (%p1067) target = $region160
        $region159: #{sentiment_classifier_forward.1} parent=123 // pred_region
          %1070 = dma.done %s1063, 2048
        $region160: #{sentiment_classifier_forward.1} parent=123 // pred_fallthru
          _
        %s1071 = sand.u32 %s42, 1
        %s1072 = scalar_lea.sflag [#allocation4], %s1071
        %s1073 = sand.u32 %s368, 1
        %s1074 = scalar_lea.vmem [#allocation14], %s1073
        // Predicated region
        $region161: #{sentiment_classifier_forward.1} parent=123 // pred_check
          %p1075 = pneg %p381
        $region162: #{sentiment_classifier_forward.1} parent=123 // pred_check_branch
          %1077 = sbr.rel (%p1075) target = $region164
        $region163: #{sentiment_classifier_forward.1} parent=123 // pred_region
          %1078 = dma.done %s1072, 16
        $region164: #{sentiment_classifier_forward.1} parent=123 // pred_fallthru
          _
        %s1079 = sand.u32 %s42, 1
        %s1080 = scalar_lea.sflag [#allocation4], %s1079
        %s1081 = sand.u32 %s394, 1
        %s1082 = scalar_lea.vmem [#allocation15], %s1081
        // Predicated region
        $region165: #{sentiment_classifier_forward.1} parent=123 // pred_check
          %p1083 = pneg %p407
        $region166: #{sentiment_classifier_forward.1} parent=123 // pred_check_branch
          %1085 = sbr.rel (%p1083) target = $region168
        $region167: #{sentiment_classifier_forward.1} parent=123 // pred_region
          %1086 = dma.done %s1080, 16
        $region168: #{sentiment_classifier_forward.1} parent=123 // pred_fallthru
          _
        %s1087 = sand.u32 %s42, 1
        %s1088 = scalar_lea.sflag [#allocation4], %s1087
        %s1089 = sand.u32 %s420, 1
        %s1090 = scalar_lea.vmem [#allocation16], %s1089
        // Predicated region
        $region169: #{sentiment_classifier_forward.1} parent=123 // pred_check
          %p1091 = pneg %p433
        $region170: #{sentiment_classifier_forward.1} parent=123 // pred_check_branch
          %1093 = sbr.rel (%p1091) target = $region172
        $region171: #{sentiment_classifier_forward.1} parent=123 // pred_region
          %1094 = dma.done %s1088, 16
        $region172: #{sentiment_classifier_forward.1} parent=123 // pred_fallthru
          _
        // Predicated region
        $region173: #{sentiment_classifier_forward.1} parent=123 // pred_check
          %p1095 = pneg %p496
        $region174: #{sentiment_classifier_forward.1} parent=123 // pred_check_branch
          %1097 = sbr.rel (%p1095) target = $region176
        $region175: #{sentiment_classifier_forward.1} parent=123 // pred_region
          %1098 = dma.done [#allocation6], 6144
        $region176: #{sentiment_classifier_forward.1} parent=123 // pred_fallthru
          _
        // Predicated region
        $region177: #{sentiment_classifier_forward.1} parent=123 // pred_check
          %p1099 = pneg %p538
        $region178: #{sentiment_classifier_forward.1} parent=123 // pred_check_branch
          %1101 = sbr.rel (%p1099) target = $region180
        $region179: #{sentiment_classifier_forward.1} parent=123 // pred_region
          %1102 = dma.done [#allocation19], 24576
        $region180: #{sentiment_classifier_forward.1} parent=123 // pred_fallthru
          _
        // Predicated region
        $region181: #{sentiment_classifier_forward.1} parent=123 // pred_check
          %p1103 = pneg %p559
        $region182: #{sentiment_classifier_forward.1} parent=123 // pred_check_branch
          %1105 = sbr.rel (%p1103) target = $region184
        $region183: #{sentiment_classifier_forward.1} parent=123 // pred_region
          %1106 = dma.done [#allocation19], 64
        $region184: #{sentiment_classifier_forward.1} parent=123 // pred_fallthru
          _
        // Predicated region
        $region185: #{sentiment_classifier_forward.1} parent=123 // pred_check
          %p1107 = pneg %p580
        $region186: #{sentiment_classifier_forward.1} parent=123 // pred_check_branch
          %1109 = sbr.rel (%p1107) target = $region188
        $region187: #{sentiment_classifier_forward.1} parent=123 // pred_region
          %1110 = dma.done [#allocation22], 8192
        $region188: #{sentiment_classifier_forward.1} parent=123 // pred_fallthru
          _
        // Predicated region
        $region189: #{sentiment_classifier_forward.1} parent=123 // pred_check
          %p1111 = pneg %p601
        $region190: #{sentiment_classifier_forward.1} parent=123 // pred_check_branch
          %1113 = sbr.rel (%p1111) target = $region192
        $region191: #{sentiment_classifier_forward.1} parent=123 // pred_region
          %1114 = dma.done [#allocation22], 32
        $region192: #{sentiment_classifier_forward.1} parent=123 // pred_fallthru
          _
        // Predicated region
        $region193: #{sentiment_classifier_forward.1} parent=123 // pred_check
          %p1115 = pneg %p622
        $region194: #{sentiment_classifier_forward.1} parent=123 // pred_check_branch
          %1117 = sbr.rel (%p1115) target = $region196
        $region195: #{sentiment_classifier_forward.1} parent=123 // pred_region
          %1118 = dma.done [#allocation25], 2048
        $region196: #{sentiment_classifier_forward.1} parent=123 // pred_fallthru
          _
        %p1119 = pneg %p58
        %p1120 = pneg %p55
        %p1121 = pneg %p79
        %p1122 = pneg %p76
        %p1123 = pneg %p100
        %p1124 = pneg %p97
        %p1125 = pneg %p121
        %p1126 = pneg %p118
        %s1127 = sand.u32 %s42, 1
        %s1128 = scalar_lea.sflag [#allocation4], %s1127
        %s1129 = sand.u32 %s134, 1
        %s1130 = smul.addr %s1129, 192
        %s1131 = scalar_lea.vmem [#allocation7], %s1130
        %p1132 = pneg %p147
        %p1133 = pneg %p144
        %p1134 = scmp.lt.s32.totalorder %s42, 1
        %s1135 = scalar_select %p1134, %s42, 1
        %s1136 = smul.addr %s1135, 3
        %s1137 = scalar_lea.vmem %s5, %s1136
        %p1138 = pneg %p173
        %p1139 = pneg %p170
        %s1140 = sand.u32 %s42, 1
        %s1141 = scalar_lea.sflag [#allocation4], %s1140
        %s1142 = sand.u32 %s186, 1
        %s1143 = smul.addr %s1142, 64
        %s1144 = scalar_lea.vmem [#allocation8], %s1143
        %p1145 = pneg %p199
        %p1146 = pneg %p196
        %s1147 = sand.u32 %s42, 1
        %s1148 = scalar_lea.sflag [#allocation4], %s1147
        %s1149 = sand.u32 %s212, 1
        %s1150 = scalar_lea.vmem [#allocation9], %s1149
        %p1151 = pneg %p225
        %p1152 = pneg %p222
        %s1153 = sand.u32 %s42, 1
        %s1154 = scalar_lea.sflag [#allocation4], %s1153
        %s1155 = sand.u32 %s238, 1
        %s1156 = scalar_lea.vmem [#allocation10], %s1155
        %p1157 = pneg %p251
        %p1158 = pneg %p248
        %s1159 = sand.u32 %s42, 1
        %s1160 = scalar_lea.sflag [#allocation4], %s1159
        %s1161 = sand.u32 %s264, 1
        %s1162 = scalar_lea.vmem [#allocation11], %s1161
        %p1163 = pneg %p277
        %p1164 = pneg %p274
        %p1165 = scmp.lt.s32.totalorder %s42, 1
        %s1166 = scalar_select %p1165, %s42, 1
        %s1167 = smul.addr %s1166, 32
        %s1168 = smul.addr %s1167, 4
        %s1169 = scalar_lea.vmem %s10, %s1168
        %p1170 = pneg %p303
        %p1171 = pneg %p300
        %s1172 = sand.u32 %s42, 1
        %s1173 = scalar_lea.sflag [#allocation4], %s1172
        %s1174 = sand.u32 %s316, 1
        %s1175 = smul.addr %s1174, 2
        %s1176 = scalar_lea.vmem [#allocation12], %s1175
        %p1177 = pneg %p329
        %p1178 = pneg %p326
        %s1179 = sand.u32 %s42, 1
        %s1180 = scalar_lea.sflag [#allocation4], %s1179
        %s1181 = sand.u32 %s342, 1
        %s1182 = smul.addr %s1181, 128
        %s1183 = scalar_lea.vmem [#allocation13], %s1182
        %p1184 = pneg %p355
        %p1185 = pneg %p352
        %s1186 = sand.u32 %s42, 1
        %s1187 = scalar_lea.sflag [#allocation4], %s1186
        %s1188 = sand.u32 %s368, 1
        %s1189 = scalar_lea.vmem [#allocation14], %s1188
        %p1190 = pneg %p381
        %p1191 = pneg %p378
        %s1192 = sand.u32 %s42, 1
        %s1193 = scalar_lea.sflag [#allocation4], %s1192
        %s1194 = sand.u32 %s394, 1
        %s1195 = scalar_lea.vmem [#allocation15], %s1194
        %p1196 = pneg %p407
        %p1197 = pneg %p404
        %s1198 = sand.u32 %s42, 1
        %s1199 = scalar_lea.sflag [#allocation4], %s1198
        %s1200 = sand.u32 %s420, 1
        %s1201 = scalar_lea.vmem [#allocation16], %s1200
        %p1202 = pneg %p433
        %p1203 = pneg %p430
        %p1204 = pneg %p454
        %p1205 = pneg %p451
        %p1206 = pneg %p475
        %p1207 = pneg %p472
        %p1208 = pneg %p496
        %p1209 = pneg %p493
        %p1210 = pneg %p517
        %p1211 = pneg %p514
        %p1212 = pneg %p538
        %p1213 = pneg %p535
        %p1214 = pneg %p559
        %p1215 = pneg %p556
        %p1216 = pneg %p580
        %p1217 = pneg %p577
        %p1218 = pneg %p601
        %p1219 = pneg %p598
        %p1220 = pneg %p622
        %p1221 = pneg %p619
        %p1222 = pneg %p643
        %p1223 = pneg %p640
        %p1224 = pneg %p664
        %p1225 = pneg %p661
        %p1226 = scmp.lt.s32.totalorder %s42, 1
        %s1227 = scalar_select %p1226, %s42, 1
        %s1228 = smul.addr %s1227, 3
        %s1229 = scalar_lea.vmem %s5, %s1228
        %p1230 = scmp.lt.s32.totalorder %s42, 1
        %s1231 = scalar_select %p1230, %s42, 1
        %s1232 = smul.addr %s1231, 32
        %s1233 = smul.addr %s1232, 4
        %s1234 = scalar_lea.vmem %s10, %s1233
        %p1236 = scmp.eq.s32.totalorder %s42, 0
        // Predicated region
        $region197: #{sentiment_classifier_forward.1} parent=123 // pred_check
          %p1237 = pneg %p1236
        $region198: #{sentiment_classifier_forward.1} parent=123 // pred_check_branch
          %1239 = sbr.rel (%p1237) target = $region200
        $region199: #{sentiment_classifier_forward.1} parent=123 // pred_region
          %v1240 = vld [vmem:[%s0] sm:$0xff]
          %v1241 = vld [vmem:[%s0 + $0x8] sm:$0xff]
          %v1242 = vld [vmem:[#allocation3] sm:$0x1]
          %v1243 = vld [vmem:[#allocation5] sm:$0x1]
          %1244 = vadd.xlane.f32.xlu0 %v1240
          %v1245 = vpop.xlane.xlu0 %1244
          %1246 = vadd.xlane.f32.xlu0 %v1241
          %v1247 = vpop.xlane.xlu0 %1246
          %v1248 = vrcp.pop 128.0
          %v1249 = vmul.f32 %v1245, %v1248
          %v1250 = vmul.f32 %v1247, %v1248
          %v1251 = vsub.f32 %v1240, %v1249
          %v1252 = vsub.f32 %v1241, %v1250
          %v1253 = vmul.f32 %v1251, %v1251
          %v1254 = vmul.f32 %v1252, %v1252
          %1255 = vadd.xlane.f32.xlu0 %v1253
          %v1256 = vpop.xlane.xlu0 %1255
          %1257 = vadd.xlane.f32.xlu0 %v1254
          %v1258 = vpop.xlane.xlu0 %1257
          %v1259 = vmul.f32 %v1256, %v1248
          %v1260 = vmul.f32 %v1258, %v1248
          %v1261 = vadd.f32 %v1259, 1e-05
          %v1262 = vadd.f32 %v1260, 1e-05
          %v1263 = vrsqrt.pop %v1261
          %v1264 = vrsqrt.pop %v1262
          %v1265 = vmul.f32 %v1251, %v1263
          %v1266 = vmul.f32 %v1252, %v1264
          %v1268 = vlaneseq
          %v1269 = vshrl.u32 %v1268, 7
          %v1270 = vsub.s32 0, %v1269
          %v1271 = vrot.slane %v1242, %v1270
          %v1273 = vmul.f32 %v1265, %v1271
          %v1274 = vmul.f32 %v1266, %v1271
          %v1276 = vlaneseq
          %v1277 = vshrl.u32 %v1276, 7
          %v1278 = vsub.s32 0, %v1277
          %v1279 = vrot.slane %v1243, %v1278
          %v1281 = vadd.f32 %v1273, %v1279
          %v1282 = vadd.f32 %v1274, %v1279
          %1283 = vst [vmem:[#allocation2] sm:$0xff] %v1281
          %1284 = vst [vmem:[#allocation2 + $0x8] sm:$0xff] %v1282
        $region200: #{sentiment_classifier_forward.1} parent=123 // pred_fallthru
          _
        %v1285 = vld [vmem:[#allocation2] sm:$0xff]
        %v1286 = vld [vmem:[#allocation2 + $0x8] sm:$0xff]
        %v1287 = vpack.c.bf16 %v1286, %v1285
        %v1288 = vld [vmem:[%s1015] sm:$0xff]
        %v1289 = vld [vmem:[%s1015 + $0x8] sm:$0xf]
        %v1290 = vld [vmem:[%s1015 + $0xc] sm:$0xff]
        %v1291 = vld [vmem:[%s1015 + $0x14] sm:$0xf]
        %v1292 = vld [vmem:[%s1015 + $0x18] sm:$0xff]
        %v1293 = vld [vmem:[%s1015 + $0x20] sm:$0xf]
        %v1294 = vld [vmem:[%s1015 + $0x24] sm:$0xff]
        %v1295 = vld [vmem:[%s1015 + $0x2c] sm:$0xf]
        %v1296 = vld [vmem:[%s1015 + $0x30] sm:$0xff]
        %v1297 = vld [vmem:[%s1015 + $0x38] sm:$0xf]
        %v1298 = vld [vmem:[%s1015 + $0x3c] sm:$0xff]
        %v1299 = vld [vmem:[%s1015 + $0x44] sm:$0xf]
        %v1300 = vld [vmem:[%s1015 + $0x48] sm:$0xff]
        %v1301 = vld [vmem:[%s1015 + $0x50] sm:$0xf]
        %v1302 = vld [vmem:[%s1015 + $0x54] sm:$0xff]
        %v1303 = vld [vmem:[%s1015 + $0x5c] sm:$0xf]
        %v1304 = vld [vmem:[%s1015 + $0x60] sm:$0xff]
        %v1305 = vld [vmem:[%s1015 + $0x68] sm:$0xf]
        %v1306 = vld [vmem:[%s1015 + $0x6c] sm:$0xff]
        %v1307 = vld [vmem:[%s1015 + $0x74] sm:$0xf]
        %v1308 = vld [vmem:[%s1015 + $0x78] sm:$0xff]
        %v1309 = vld [vmem:[%s1015 + $0x80] sm:$0xf]
        %v1310 = vld [vmem:[%s1015 + $0x84] sm:$0xff]
        %v1311 = vld [vmem:[%s1015 + $0x8c] sm:$0xf]
        %v1312 = vld [vmem:[%s1015 + $0x90] sm:$0xff]
        %v1313 = vld [vmem:[%s1015 + $0x98] sm:$0xf]
        %v1314 = vld [vmem:[%s1015 + $0x9c] sm:$0xff]
        %v1315 = vld [vmem:[%s1015 + $0xa4] sm:$0xf]
        %v1316 = vld [vmem:[%s1015 + $0xa8] sm:$0xff]
        %v1317 = vld [vmem:[%s1015 + $0xb0] sm:$0xf]
        %v1318 = vld [vmem:[%s1015 + $0xb4] sm:$0xff]
        %v1319 = vld [vmem:[%s1015 + $0xbc] sm:$0xf]
        %v1320 = vld [vmem:[%s1229] sm:$0x7]
        %v1322 = vlaneseq
        %v1323 = vshrl.u32 %v1322, 7
        %v1324 = vsub.s32 0, %v1323
        %v1325 = vrot.slane %v1320, %v1324
        %v1326 = vlaneseq
        %v1327 = vshrl.u32 %v1326, 7
        %v1328 = vsub.s32 1, %v1327
        %v1329 = vrot.slane %v1320, %v1328
        %v1330 = vlaneseq
        %v1331 = vshrl.u32 %v1330, 7
        %v1332 = vsub.s32 2, %v1331
        %v1333 = vrot.slane %v1320, %v1332
        %v1369 = vunpack.c.l.b16 %v1288
        %v1370 = vunpack.c.h.b16 %v1288
        %v1371 = vunpack.c.l.b16 %v1289
        %v1372 = vunpack.c.l.b16 %v1290
        %v1373 = vunpack.c.h.b16 %v1290
        %v1374 = vunpack.c.l.b16 %v1291
        %v1375 = vunpack.c.l.b16 %v1292
        %v1376 = vunpack.c.h.b16 %v1292
        %v1377 = vunpack.c.l.b16 %v1293
        %v1378 = vunpack.c.l.b16 %v1294
        %v1379 = vunpack.c.h.b16 %v1294
        %v1380 = vunpack.c.l.b16 %v1295
        %v1381 = vunpack.c.l.b16 %v1296
        %v1382 = vunpack.c.h.b16 %v1296
        %v1383 = vunpack.c.l.b16 %v1297
        %v1384 = vunpack.c.l.b16 %v1298
        %v1385 = vunpack.c.h.b16 %v1298
        %v1386 = vunpack.c.l.b16 %v1299
        %v1387 = vunpack.c.l.b16 %v1300
        %v1388 = vunpack.c.h.b16 %v1300
        %v1389 = vunpack.c.l.b16 %v1301
        %v1390 = vunpack.c.l.b16 %v1302
        %v1391 = vunpack.c.h.b16 %v1302
        %v1392 = vunpack.c.l.b16 %v1303
        %v1393 = vunpack.c.l.b16 %v1304
        %v1394 = vunpack.c.h.b16 %v1304
        %v1395 = vunpack.c.l.b16 %v1305
        %v1396 = vunpack.c.l.b16 %v1306
        %v1397 = vunpack.c.h.b16 %v1306
        %v1398 = vunpack.c.l.b16 %v1307
        %v1399 = vunpack.c.l.b16 %v1308
        %v1400 = vunpack.c.h.b16 %v1308
        %v1401 = vunpack.c.l.b16 %v1309
        %v1402 = vunpack.c.l.b16 %v1310
        %v1403 = vunpack.c.h.b16 %v1310
        %v1404 = vunpack.c.l.b16 %v1311
        %v1405 = vunpack.c.l.b16 %v1312
        %v1406 = vunpack.c.h.b16 %v1312
        %v1407 = vunpack.c.l.b16 %v1313
        %v1408 = vunpack.c.l.b16 %v1314
        %v1409 = vunpack.c.h.b16 %v1314
        %v1410 = vunpack.c.l.b16 %v1315
        %v1411 = vunpack.c.l.b16 %v1316
        %v1412 = vunpack.c.h.b16 %v1316
        %v1413 = vunpack.c.l.b16 %v1317
        %v1414 = vunpack.c.l.b16 %v1318
        %v1415 = vunpack.c.h.b16 %v1318
        %v1416 = vunpack.c.l.b16 %v1319
        %v1417 = vpack.c.b16 %v1372, %v1369
        %v1418 = vpack.c.b16 %v1373, %v1370
        %v1419 = vpack.c.b16 %v1374, %v1371
        %v1420 = vpack.c.b16 %v1378, %v1375
        %v1421 = vpack.c.b16 %v1379, %v1376
        %v1422 = vpack.c.b16 %v1380, %v1377
        %v1423 = vpack.c.b16 %v1384, %v1381
        %v1424 = vpack.c.b16 %v1385, %v1382
        %v1425 = vpack.c.b16 %v1386, %v1383
        %v1426 = vpack.c.b16 %v1390, %v1387
        %v1427 = vpack.c.b16 %v1391, %v1388
        %v1428 = vpack.c.b16 %v1392, %v1389
        %v1429 = vpack.c.b16 %v1396, %v1393
        %v1430 = vpack.c.b16 %v1397, %v1394
        %v1431 = vpack.c.b16 %v1398, %v1395
        %v1432 = vpack.c.b16 %v1402, %v1399
        %v1433 = vpack.c.b16 %v1403, %v1400
        %v1434 = vpack.c.b16 %v1404, %v1401
        %v1435 = vpack.c.b16 %v1408, %v1405
        %v1436 = vpack.c.b16 %v1409, %v1406
        %v1437 = vpack.c.b16 %v1410, %v1407
        %v1438 = vpack.c.b16 %v1414, %v1411
        %v1439 = vpack.c.b16 %v1415, %v1412
        %v1440 = vpack.c.b16 %v1416, %v1413
        %1465 = vmatprep.subr.bf16.mxu0 %v1439
        %1466 = vmatpush1.bf16.msra.mxu0 %v1438
        %1467 = vmatprep.subr.bf16.mxu0 %v1436
        %1468 = vmatpush1.bf16.msra.mxu0 %v1435
        %1469 = vmatprep.subr.bf16.mxu0 %v1433
        %1470 = vmatpush1.bf16.msra.mxu0 %v1432
        %1471 = vmatprep.subr.bf16.mxu0 %v1430
        %1472 = vmatpush1.bf16.msra.mxu0 %v1429
        %1473 = vmatprep.subr.bf16.mxu0 %v1427
        %1474 = vmatpush1.bf16.msra.mxu0 %v1426
        %1475 = vmatprep.subr.bf16.mxu0 %v1424
        %1476 = vmatpush1.bf16.msra.mxu0 %v1423
        %1477 = vmatprep.subr.bf16.mxu0 %v1421
        %1478 = vmatpush1.bf16.msra.mxu0 %v1420
        %1479 = vmatprep.subr.bf16.mxu0 %v1418
        %1480 = vmatpush1.bf16.msra.mxu0 %v1417
        %1481 = vmatprep.subr.bf16.mxu0 0
        %1482 = vmatpush2.bf16.msra.mxu0 0
        %1483 = vmatprep.subr.bf16.mxu0 0
        %1484 = vmatpush2.bf16.msra.mxu0 0
        %1485 = vmatprep.subr.bf16.mxu0 0
        %1486 = vmatpush2.bf16.msra.mxu0 0
        %1487 = vmatprep.subr.bf16.mxu0 0
        %1488 = vmatpush2.bf16.msra.mxu0 0
        %1489 = vmatprep.subr.bf16.mxu0 0
        %1490 = vmatpush2.bf16.msra.mxu0 0
        %1491 = vmatprep.subr.bf16.mxu0 0
        %1492 = vmatpush2.bf16.msra.mxu0 0
        %1493 = vmatprep.subr.bf16.mxu0 0
        %1494 = vmatpush2.bf16.msra.mxu0 0
        %1495 = vmatprep.subr.bf16.mxu0 0
        %1496 = vmatpush2.bf16.msra.mxu0 0
        %1497 = vmatprep.mubr.bf16.mxu0 0
        %1498 = vmatmul.mubr.bf16.gmra.mxu0 %v1287
        %v1499 = vpop.f32.mrf.mxu0
        %v1500 = vadd.f32 %v1325, %v1499
        %v1501 = vpop.f32.mrf.mxu0
        %v1502 = vadd.f32 %v1329, %v1501
        %v1503 = vpop.f32.mrf.mxu0
        %v1504 = vadd.f32 %v1325, %v1503
        %v1505 = vpop.f32.mrf.mxu0
        %v1506 = vadd.f32 %v1329, %v1505
        %1507 = vdwg.mxu0
        %1508 = vmatprep.subr.bf16.mxu0 0
        %1509 = vmatpush1.bf16.msra.mxu0 %v1440
        %1510 = vmatprep.subr.bf16.mxu0 0
        %1511 = vmatpush1.bf16.msra.mxu0 %v1437
        %1512 = vmatprep.subr.bf16.mxu0 0
        %1513 = vmatpush1.bf16.msra.mxu0 %v1434
        %1514 = vmatprep.subr.bf16.mxu0 0
        %1515 = vmatpush1.bf16.msra.mxu0 %v1431
        %1516 = vmatprep.subr.bf16.mxu0 0
        %1517 = vmatpush1.bf16.msra.mxu0 %v1428
        %1518 = vmatprep.subr.bf16.mxu0 0
        %1519 = vmatpush1.bf16.msra.mxu0 %v1425
        %1520 = vmatprep.subr.bf16.mxu0 0
        %1521 = vmatpush1.bf16.msra.mxu0 %v1422
        %1522 = vmatprep.subr.bf16.mxu0 0
        %1523 = vmatpush1.bf16.msra.mxu0 %v1419
        %1524 = vmatprep.subr.bf16.mxu0 0
        %1525 = vmatpush2.bf16.msra.mxu0 0
        %1526 = vmatprep.subr.bf16.mxu0 0
        %1527 = vmatpush2.bf16.msra.mxu0 0
        %1528 = vmatprep.subr.bf16.mxu0 0
        %1529 = vmatpush2.bf16.msra.mxu0 0
        %1530 = vmatprep.subr.bf16.mxu0 0
        %1531 = vmatpush2.bf16.msra.mxu0 0
        %1532 = vmatprep.subr.bf16.mxu0 0
        %1533 = vmatpush2.bf16.msra.mxu0 0
        %1534 = vmatprep.subr.bf16.mxu0 0
        %1535 = vmatpush2.bf16.msra.mxu0 0
        %1536 = vmatprep.subr.bf16.mxu0 0
        %1537 = vmatpush2.bf16.msra.mxu0 0
        %1538 = vmatprep.subr.bf16.mxu0 0
        %1539 = vmatpush2.bf16.msra.mxu0 0
        %1540 = vmatprep.mubr.bf16.mxu0 0
        %1541 = vmatmul.mubr.bf16.gmra.mxu0 %v1287
        %v1542 = vpop.f32.mrf.mxu0
        %v1543 = vadd.f32 %v1333, %v1542
        %v1544 = vpop.f32.mrf.mxu0
        %v1545 = vpop.f32.mrf.mxu0
        %v1546 = vadd.f32 %v1333, %v1545
        %v1547 = vpop.f32.mrf.mxu0
        %1548 = vdwg.mxu0
        %1551 = vrot.lane.b32.xlu0 %v1500, 96
        %v1552 = vpop.permute.xlu0 %1551
        %1553 = vrot.lane.b32.xlu0 %v1504, 96
        %v1554 = vpop.permute.xlu0 %1553
        %1557 = vrot.lane.b32.xlu0 %v1500, 64
        %v1558 = vpop.permute.xlu0 %1557
        %1559 = vrot.lane.b32.xlu0 %v1504, 64
        %v1560 = vpop.permute.xlu0 %1559
        %1563 = vrot.lane.b32.xlu0 %v1500, 32
        %v1564 = vpop.permute.xlu0 %1563
        %1565 = vrot.lane.b32.xlu0 %v1504, 32
        %v1566 = vpop.permute.xlu0 %1565
        %v1569 = vpack.c.bf16 %v1504, %v1500
        %v1570 = vpack.c.bf16 %v1554, %v1552
        %v1571 = vpack.c.bf16 %v1560, %v1558
        %v1572 = vpack.c.bf16 %v1566, %v1564
        %1575 = vrot.lane.b32.xlu0 %v1502, 96
        %v1576 = vpop.permute.xlu0 %1575
        %1577 = vrot.lane.b32.xlu0 %v1506, 96
        %v1578 = vpop.permute.xlu0 %1577
        %1581 = vrot.lane.b32.xlu0 %v1502, 64
        %v1582 = vpop.permute.xlu0 %1581
        %1583 = vrot.lane.b32.xlu0 %v1506, 64
        %v1584 = vpop.permute.xlu0 %1583
        %1587 = vrot.lane.b32.xlu0 %v1502, 32
        %v1588 = vpop.permute.xlu0 %1587
        %1589 = vrot.lane.b32.xlu0 %v1506, 32
        %v1590 = vpop.permute.xlu0 %1589
        %v1593 = vpack.c.bf16 %v1506, %v1502
        %v1594 = vpack.c.bf16 %v1578, %v1576
        %v1595 = vpack.c.bf16 %v1584, %v1582
        %v1596 = vpack.c.bf16 %v1590, %v1588
        %1599 = vrot.lane.b32.xlu0 %v1543, 96
        %v1600 = vpop.permute.xlu0 %1599
        %1601 = vrot.lane.b32.xlu0 %v1546, 96
        %v1602 = vpop.permute.xlu0 %1601
        %1605 = vrot.lane.b32.xlu0 %v1543, 64
        %v1606 = vpop.permute.xlu0 %1605
        %1607 = vrot.lane.b32.xlu0 %v1546, 64
        %v1608 = vpop.permute.xlu0 %1607
        %1611 = vrot.lane.b32.xlu0 %v1543, 32
        %v1612 = vpop.permute.xlu0 %1611
        %1613 = vrot.lane.b32.xlu0 %v1546, 32
        %v1614 = vpop.permute.xlu0 %1613
        %v1617 = vpack.c.bf16 %v1546, %v1543
        %v1618 = vpack.c.bf16 %v1602, %v1600
        %v1619 = vpack.c.bf16 %v1608, %v1606
        %v1620 = vpack.c.bf16 %v1614, %v1612
        %v1621 = vld [vmem:[%s1] sm:$0xff]
        %v1622 = vld [vmem:[%s1 + $0x8] sm:$0xff]
        %vm1623 = vcmask 261120
        %v1625 = vsel %vm1623, %v1569, 0
        %v1628 = vsel %vm1623, %v1593, 0
        %1630 = vmatprep.subr.bf16.mxu0 0
        %1631 = vmatpush1.bf16.xpose.msra.mxu0 0
        %1632 = vmatprep.subr.bf16.mxu0 0
        %1633 = vmatpush1.bf16.xpose.msra.mxu0 0
        %1634 = vmatprep.subr.bf16.mxu0 0
        %1635 = vmatpush1.bf16.xpose.msra.mxu0 0
        %1636 = vmatprep.subr.bf16.mxu0 0
        %1637 = vmatpush1.bf16.xpose.msra.mxu0 0
        %1638 = vmatprep.subr.bf16.mxu0 0
        %1639 = vmatpush1.bf16.xpose.msra.mxu0 0
        %1640 = vmatprep.subr.bf16.mxu0 0
        %1641 = vmatpush1.bf16.xpose.msra.mxu0 0
        %1642 = vmatprep.subr.bf16.mxu0 0
        %1643 = vmatpush1.bf16.xpose.msra.mxu0 0
        %1644 = vmatprep.subr.bf16.mxu0 0
        %1645 = vmatpush1.bf16.xpose.msra.mxu0 %v1628
        %1646 = vmatprep.subr.bf16.mxu0 0
        %1647 = vmatpush2.bf16.xpose.msra.mxu0 0
        %1648 = vmatprep.subr.bf16.mxu0 0
        %1649 = vmatpush2.bf16.xpose.msra.mxu0 0
        %1650 = vmatprep.subr.bf16.mxu0 0
        %1651 = vmatpush2.bf16.xpose.msra.mxu0 0
        %1652 = vmatprep.subr.bf16.mxu0 0
        %1653 = vmatpush2.bf16.xpose.msra.mxu0 0
        %1654 = vmatprep.subr.bf16.mxu0 0
        %1655 = vmatpush2.bf16.xpose.msra.mxu0 0
        %1656 = vmatprep.subr.bf16.mxu0 0
        %1657 = vmatpush2.bf16.xpose.msra.mxu0 0
        %1658 = vmatprep.subr.bf16.mxu0 0
        %1659 = vmatpush2.bf16.xpose.msra.mxu0 0
        %1660 = vmatprep.subr.bf16.mxu0 0
        %1661 = vmatpush2.bf16.xpose.msra.mxu0 0
        %1662 = vmatprep.mubr.bf16.mxu0 0
        %1663 = vmatmul.mubr.bf16.gmra.mxu0 %v1625
        %v1664 = vpop.f32.mrf.mxu0
        %v1665 = vadd.f32 %v1621, %v1664
        %v1666 = vpop.f32.mrf.mxu0
        %v1667 = vpop.f32.mrf.mxu0
        %v1668 = vadd.f32 %v1622, %v1667
        %v1669 = vpop.f32.mrf.mxu0
        %1670 = vdwg.mxu0
        %v1672 = vsel %vm1623, %v1570, 0
        %v1675 = vsel %vm1623, %v1594, 0
        %1677 = vmatprep.subr.bf16.mxu0 0
        %1678 = vmatpush1.bf16.xpose.msra.mxu0 0
        %1679 = vmatprep.subr.bf16.mxu0 0
        %1680 = vmatpush1.bf16.xpose.msra.mxu0 0
        %1681 = vmatprep.subr.bf16.mxu0 0
        %1682 = vmatpush1.bf16.xpose.msra.mxu0 0
        %1683 = vmatprep.subr.bf16.mxu0 0
        %1684 = vmatpush1.bf16.xpose.msra.mxu0 0
        %1685 = vmatprep.subr.bf16.mxu0 0
        %1686 = vmatpush1.bf16.xpose.msra.mxu0 0
        %1687 = vmatprep.subr.bf16.mxu0 0
        %1688 = vmatpush1.bf16.xpose.msra.mxu0 0
        %1689 = vmatprep.subr.bf16.mxu0 0
        %1690 = vmatpush1.bf16.xpose.msra.mxu0 0
        %1691 = vmatprep.subr.bf16.mxu0 0
        %1692 = vmatpush1.bf16.xpose.msra.mxu0 %v1675
        %1693 = vmatprep.subr.bf16.mxu0 0
        %1694 = vmatpush2.bf16.xpose.msra.mxu0 0
        %1695 = vmatprep.subr.bf16.mxu0 0
        %1696 = vmatpush2.bf16.xpose.msra.mxu0 0
        %1697 = vmatprep.subr.bf16.mxu0 0
        %1698 = vmatpush2.bf16.xpose.msra.mxu0 0
        %1699 = vmatprep.subr.bf16.mxu0 0
        %1700 = vmatpush2.bf16.xpose.msra.mxu0 0
        %1701 = vmatprep.subr.bf16.mxu0 0
        %1702 = vmatpush2.bf16.xpose.msra.mxu0 0
        %1703 = vmatprep.subr.bf16.mxu0 0
        %1704 = vmatpush2.bf16.xpose.msra.mxu0 0
        %1705 = vmatprep.subr.bf16.mxu0 0
        %1706 = vmatpush2.bf16.xpose.msra.mxu0 0
        %1707 = vmatprep.subr.bf16.mxu0 0
        %1708 = vmatpush2.bf16.xpose.msra.mxu0 0
        %1709 = vmatprep.mubr.bf16.mxu0 0
        %1710 = vmatmul.mubr.bf16.gmra.mxu0 %v1672
        %v1711 = vpop.f32.mrf.mxu0
        %v1712 = vadd.f32 %v1621, %v1711
        %v1713 = vpop.f32.mrf.mxu0
        %v1714 = vpop.f32.mrf.mxu0
        %v1715 = vadd.f32 %v1622, %v1714
        %v1716 = vpop.f32.mrf.mxu0
        %1717 = vdwg.mxu0
        %v1719 = vsel %vm1623, %v1571, 0
        %v1722 = vsel %vm1623, %v1595, 0
        %1724 = vmatprep.subr.bf16.mxu0 0
        %1725 = vmatpush1.bf16.xpose.msra.mxu0 0
        %1726 = vmatprep.subr.bf16.mxu0 0
        %1727 = vmatpush1.bf16.xpose.msra.mxu0 0
        %1728 = vmatprep.subr.bf16.mxu0 0
        %1729 = vmatpush1.bf16.xpose.msra.mxu0 0
        %1730 = vmatprep.subr.bf16.mxu0 0
        %1731 = vmatpush1.bf16.xpose.msra.mxu0 0
        %1732 = vmatprep.subr.bf16.mxu0 0
        %1733 = vmatpush1.bf16.xpose.msra.mxu0 0
        %1734 = vmatprep.subr.bf16.mxu0 0
        %1735 = vmatpush1.bf16.xpose.msra.mxu0 0
        %1736 = vmatprep.subr.bf16.mxu0 0
        %1737 = vmatpush1.bf16.xpose.msra.mxu0 0
        %1738 = vmatprep.subr.bf16.mxu0 0
        %1739 = vmatpush1.bf16.xpose.msra.mxu0 %v1722
        %1740 = vmatprep.subr.bf16.mxu0 0
        %1741 = vmatpush2.bf16.xpose.msra.mxu0 0
        %1742 = vmatprep.subr.bf16.mxu0 0
        %1743 = vmatpush2.bf16.xpose.msra.mxu0 0
        %1744 = vmatprep.subr.bf16.mxu0 0
        %1745 = vmatpush2.bf16.xpose.msra.mxu0 0
        %1746 = vmatprep.subr.bf16.mxu0 0
        %1747 = vmatpush2.bf16.xpose.msra.mxu0 0
        %1748 = vmatprep.subr.bf16.mxu0 0
        %1749 = vmatpush2.bf16.xpose.msra.mxu0 0
        %1750 = vmatprep.subr.bf16.mxu0 0
        %1751 = vmatpush2.bf16.xpose.msra.mxu0 0
        %1752 = vmatprep.subr.bf16.mxu0 0
        %1753 = vmatpush2.bf16.xpose.msra.mxu0 0
        %1754 = vmatprep.subr.bf16.mxu0 0
        %1755 = vmatpush2.bf16.xpose.msra.mxu0 0
        %1756 = vmatprep.mubr.bf16.mxu0 0
        %1757 = vmatmul.mubr.bf16.gmra.mxu0 %v1719
        %v1758 = vpop.f32.mrf.mxu0
        %v1759 = vadd.f32 %v1621, %v1758
        %v1760 = vpop.f32.mrf.mxu0
        %v1761 = vpop.f32.mrf.mxu0
        %v1762 = vadd.f32 %v1622, %v1761
        %v1763 = vpop.f32.mrf.mxu0
        %1764 = vdwg.mxu0
        %v1766 = vsel %vm1623, %v1572, 0
        %v1769 = vsel %vm1623, %v1596, 0
        %1771 = vmatprep.subr.bf16.mxu0 0
        %1772 = vmatpush1.bf16.xpose.msra.mxu0 0
        %1773 = vmatprep.subr.bf16.mxu0 0
        %1774 = vmatpush1.bf16.xpose.msra.mxu0 0
        %1775 = vmatprep.subr.bf16.mxu0 0
        %1776 = vmatpush1.bf16.xpose.msra.mxu0 0
        %1777 = vmatprep.subr.bf16.mxu0 0
        %1778 = vmatpush1.bf16.xpose.msra.mxu0 0
        %1779 = vmatprep.subr.bf16.mxu0 0
        %1780 = vmatpush1.bf16.xpose.msra.mxu0 0
        %1781 = vmatprep.subr.bf16.mxu0 0
        %1782 = vmatpush1.bf16.xpose.msra.mxu0 0
        %1783 = vmatprep.subr.bf16.mxu0 0
        %1784 = vmatpush1.bf16.xpose.msra.mxu0 0
        %1785 = vmatprep.subr.bf16.mxu0 0
        %1786 = vmatpush1.bf16.xpose.msra.mxu0 %v1769
        %1787 = vmatprep.subr.bf16.mxu0 0
        %1788 = vmatpush2.bf16.xpose.msra.mxu0 0
        %1789 = vmatprep.subr.bf16.mxu0 0
        %1790 = vmatpush2.bf16.xpose.msra.mxu0 0
        %1791 = vmatprep.subr.bf16.mxu0 0
        %1792 = vmatpush2.bf16.xpose.msra.mxu0 0
        %1793 = vmatprep.subr.bf16.mxu0 0
        %1794 = vmatpush2.bf16.xpose.msra.mxu0 0
        %1795 = vmatprep.subr.bf16.mxu0 0
        %1796 = vmatpush2.bf16.xpose.msra.mxu0 0
        %1797 = vmatprep.subr.bf16.mxu0 0
        %1798 = vmatpush2.bf16.xpose.msra.mxu0 0
        %1799 = vmatprep.subr.bf16.mxu0 0
        %1800 = vmatpush2.bf16.xpose.msra.mxu0 0
        %1801 = vmatprep.subr.bf16.mxu0 0
        %1802 = vmatpush2.bf16.xpose.msra.mxu0 0
        %1803 = vmatprep.mubr.bf16.mxu0 0
        %1804 = vmatmul.mubr.bf16.gmra.mxu0 %v1766
        %v1805 = vpop.f32.mrf.mxu0
        %v1806 = vadd.f32 %v1621, %v1805
        %v1807 = vpop.f32.mrf.mxu0
        %v1808 = vpop.f32.mrf.mxu0
        %v1809 = vadd.f32 %v1622, %v1808
        %v1810 = vpop.f32.mrf.mxu0
        %1811 = vdwg.mxu0
        %vm1812 = vcmask 130048
        %v1813 = vsel %vm1812, %v1665, -inf
        %1814 = vmax.xlane.f32.xlu0 %v1813
        %v1815 = vpop.xlane.xlu0 %1814
        %v1816 = vsel %vm1812, %v1668, -inf
        %1817 = vmax.xlane.f32.xlu0 %v1816
        %v1818 = vpop.xlane.xlu0 %1817
        %v1819 = vsel %vm1812, %v1712, -inf
        %1820 = vmax.xlane.f32.xlu0 %v1819
        %v1821 = vpop.xlane.xlu0 %1820
        %v1822 = vsel %vm1812, %v1715, -inf
        %1823 = vmax.xlane.f32.xlu0 %v1822
        %v1824 = vpop.xlane.xlu0 %1823
        %v1825 = vsel %vm1812, %v1759, -inf
        %1826 = vmax.xlane.f32.xlu0 %v1825
        %v1827 = vpop.xlane.xlu0 %1826
        %v1828 = vsel %vm1812, %v1762, -inf
        %1829 = vmax.xlane.f32.xlu0 %v1828
        %v1830 = vpop.xlane.xlu0 %1829
        %v1831 = vsel %vm1812, %v1806, -inf
        %1832 = vmax.xlane.f32.xlu0 %v1831
        %v1833 = vpop.xlane.xlu0 %1832
        %v1834 = vsel %vm1812, %v1809, -inf
        %1835 = vmax.xlane.f32.xlu0 %v1834
        %v1836 = vpop.xlane.xlu0 %1835
        %v1837 = vsub.f32 %v1665, %v1815
        %v1838 = vsub.f32 %v1668, %v1818
        %v1839 = vsub.f32 %v1712, %v1821
        %v1840 = vsub.f32 %v1715, %v1824
        %v1841 = vsub.f32 %v1759, %v1827
        %v1842 = vsub.f32 %v1762, %v1830
        %v1843 = vsub.f32 %v1806, %v1833
        %v1844 = vsub.f32 %v1809, %v1836
        %v1845 = vmul.f32 %v1837, 1.442695
        %v1846 = vpow.pop %v1845
        %v1847 = vmul.f32 %v1838, 1.442695
        %v1848 = vpow.pop %v1847
        %v1849 = vmul.f32 %v1839, 1.442695
        %v1850 = vpow.pop %v1849
        %v1851 = vmul.f32 %v1840, 1.442695
        %v1852 = vpow.pop %v1851
        %v1853 = vmul.f32 %v1841, 1.442695
        %v1854 = vpow.pop %v1853
        %v1855 = vmul.f32 %v1842, 1.442695
        %v1856 = vpow.pop %v1855
        %v1857 = vmul.f32 %v1843, 1.442695
        %v1858 = vpow.pop %v1857
        %v1859 = vmul.f32 %v1844, 1.442695
        %v1860 = vpow.pop %v1859
        %v1861 = vsel %vm1812, %v1846, 0.0
        %1862 = vadd.xlane.f32.xlu0 %v1861
        %v1863 = vpop.xlane.xlu0 %1862
        %v1864 = vsel %vm1812, %v1848, 0.0
        %1865 = vadd.xlane.f32.xlu0 %v1864
        %v1866 = vpop.xlane.xlu0 %1865
        %v1867 = vsel %vm1812, %v1850, 0.0
        %1868 = vadd.xlane.f32.xlu0 %v1867
        %v1869 = vpop.xlane.xlu0 %1868
        %v1870 = vsel %vm1812, %v1852, 0.0
        %1871 = vadd.xlane.f32.xlu0 %v1870
        %v1872 = vpop.xlane.xlu0 %1871
        %v1873 = vsel %vm1812, %v1854, 0.0
        %1874 = vadd.xlane.f32.xlu0 %v1873
        %v1875 = vpop.xlane.xlu0 %1874
        %v1876 = vsel %vm1812, %v1856, 0.0
        %1877 = vadd.xlane.f32.xlu0 %v1876
        %v1878 = vpop.xlane.xlu0 %1877
        %v1879 = vsel %vm1812, %v1858, 0.0
        %1880 = vadd.xlane.f32.xlu0 %v1879
        %v1881 = vpop.xlane.xlu0 %1880
        %v1882 = vsel %vm1812, %v1860, 0.0
        %1883 = vadd.xlane.f32.xlu0 %v1882
        %v1884 = vpop.xlane.xlu0 %1883
        %v1885 = vrcp.pop %v1863
        %v1886 = vrcp.pop %v1866
        %v1887 = vrcp.pop %v1869
        %v1888 = vrcp.pop %v1872
        %v1889 = vrcp.pop %v1875
        %v1890 = vrcp.pop %v1878
        %v1891 = vrcp.pop %v1881
        %v1892 = vrcp.pop %v1884
        %v1893 = vmul.f32 %v1846, %v1885
        %v1894 = vmul.f32 %v1848, %v1886
        %v1895 = vmul.f32 %v1850, %v1887
        %v1896 = vmul.f32 %v1852, %v1888
        %v1897 = vmul.f32 %v1854, %v1889
        %v1898 = vmul.f32 %v1856, %v1890
        %v1899 = vmul.f32 %v1858, %v1891
        %v1900 = vmul.f32 %v1860, %v1892
        %v1901 = vpack.c.bf16 %v1894, %v1893
        %v1902 = vpack.c.bf16 %v1896, %v1895
        %v1903 = vpack.c.bf16 %v1898, %v1897
        %v1904 = vpack.c.bf16 %v1900, %v1899
        %v1906 = vsel %vm1812, %v1901, 0
        %1908 = vmatprep.subr.bf16.mxu0 0
        %1909 = vmatpush1.bf16.msra.mxu0 0
        %1910 = vmatprep.subr.bf16.mxu0 0
        %1911 = vmatpush1.bf16.msra.mxu0 0
        %1912 = vmatprep.subr.bf16.mxu0 0
        %1913 = vmatpush1.bf16.msra.mxu0 0
        %1914 = vmatprep.subr.bf16.mxu0 0
        %1915 = vmatpush1.bf16.msra.mxu0 0
        %1916 = vmatprep.subr.bf16.mxu0 0
        %1917 = vmatpush1.bf16.msra.mxu0 0
        %1918 = vmatprep.subr.bf16.mxu0 0
        %1919 = vmatpush1.bf16.msra.mxu0 0
        %1920 = vmatprep.subr.bf16.mxu0 0
        %1921 = vmatpush1.bf16.msra.mxu0 0
        %1922 = vmatprep.subr.bf16.mxu0 0
        %1923 = vmatpush1.bf16.msra.mxu0 %v1617
        %1924 = vmatprep.subr.bf16.mxu0 0
        %1925 = vmatpush2.bf16.msra.mxu0 0
        %1926 = vmatprep.subr.bf16.mxu0 0
        %1927 = vmatpush2.bf16.msra.mxu0 0
        %1928 = vmatprep.subr.bf16.mxu0 0
        %1929 = vmatpush2.bf16.msra.mxu0 0
        %1930 = vmatprep.subr.bf16.mxu0 0
        %1931 = vmatpush2.bf16.msra.mxu0 0
        %1932 = vmatprep.subr.bf16.mxu0 0
        %1933 = vmatpush2.bf16.msra.mxu0 0
        %1934 = vmatprep.subr.bf16.mxu0 0
        %1935 = vmatpush2.bf16.msra.mxu0 0
        %1936 = vmatprep.subr.bf16.mxu0 0
        %1937 = vmatpush2.bf16.msra.mxu0 0
        %1938 = vmatprep.subr.bf16.mxu0 0
        %1939 = vmatpush2.bf16.msra.mxu0 0
        %1940 = vmatprep.mubr.bf16.mxu0 0
        %1941 = vmatmul.mubr.bf16.gmra.mxu0 %v1906
        %v1942 = vpop.f32.mrf.mxu0
        %v1943 = vadd.f32 0.0, %v1942
        %v1944 = vpop.f32.mrf.mxu0
        %v1945 = vpop.f32.mrf.mxu0
        %v1946 = vadd.f32 0.0, %v1945
        %v1947 = vpop.f32.mrf.mxu0
        %1948 = vdwg.mxu0
        %v1950 = vsel %vm1812, %v1902, 0
        %1952 = vmatprep.subr.bf16.mxu0 0
        %1953 = vmatpush1.bf16.msra.mxu0 0
        %1954 = vmatprep.subr.bf16.mxu0 0
        %1955 = vmatpush1.bf16.msra.mxu0 0
        %1956 = vmatprep.subr.bf16.mxu0 0
        %1957 = vmatpush1.bf16.msra.mxu0 0
        %1958 = vmatprep.subr.bf16.mxu0 0
        %1959 = vmatpush1.bf16.msra.mxu0 0
        %1960 = vmatprep.subr.bf16.mxu0 0
        %1961 = vmatpush1.bf16.msra.mxu0 0
        %1962 = vmatprep.subr.bf16.mxu0 0
        %1963 = vmatpush1.bf16.msra.mxu0 0
        %1964 = vmatprep.subr.bf16.mxu0 0
        %1965 = vmatpush1.bf16.msra.mxu0 0
        %1966 = vmatprep.subr.bf16.mxu0 0
        %1967 = vmatpush1.bf16.msra.mxu0 %v1618
        %1968 = vmatprep.subr.bf16.mxu0 0
        %1969 = vmatpush2.bf16.msra.mxu0 0
        %1970 = vmatprep.subr.bf16.mxu0 0
        %1971 = vmatpush2.bf16.msra.mxu0 0
        %1972 = vmatprep.subr.bf16.mxu0 0
        %1973 = vmatpush2.bf16.msra.mxu0 0
        %1974 = vmatprep.subr.bf16.mxu0 0
        %1975 = vmatpush2.bf16.msra.mxu0 0
        %1976 = vmatprep.subr.bf16.mxu0 0
        %1977 = vmatpush2.bf16.msra.mxu0 0
        %1978 = vmatprep.subr.bf16.mxu0 0
        %1979 = vmatpush2.bf16.msra.mxu0 0
        %1980 = vmatprep.subr.bf16.mxu0 0
        %1981 = vmatpush2.bf16.msra.mxu0 0
        %1982 = vmatprep.subr.bf16.mxu0 0
        %1983 = vmatpush2.bf16.msra.mxu0 0
        %1984 = vmatprep.mubr.bf16.mxu0 0
        %1985 = vmatmul.mubr.bf16.gmra.mxu0 %v1950
        %v1986 = vpop.f32.mrf.mxu0
        %v1987 = vadd.f32 0.0, %v1986
        %v1988 = vpop.f32.mrf.mxu0
        %v1989 = vpop.f32.mrf.mxu0
        %v1990 = vadd.f32 0.0, %v1989
        %v1991 = vpop.f32.mrf.mxu0
        %1992 = vdwg.mxu0
        %v1994 = vsel %vm1812, %v1903, 0
        %1996 = vmatprep.subr.bf16.mxu0 0
        %1997 = vmatpush1.bf16.msra.mxu0 0
        %1998 = vmatprep.subr.bf16.mxu0 0
        %1999 = vmatpush1.bf16.msra.mxu0 0
        %2000 = vmatprep.subr.bf16.mxu0 0
        %2001 = vmatpush1.bf16.msra.mxu0 0
        %2002 = vmatprep.subr.bf16.mxu0 0
        %2003 = vmatpush1.bf16.msra.mxu0 0
        %2004 = vmatprep.subr.bf16.mxu0 0
        %2005 = vmatpush1.bf16.msra.mxu0 0
        %2006 = vmatprep.subr.bf16.mxu0 0
        %2007 = vmatpush1.bf16.msra.mxu0 0
        %2008 = vmatprep.subr.bf16.mxu0 0
        %2009 = vmatpush1.bf16.msra.mxu0 0
        %2010 = vmatprep.subr.bf16.mxu0 0
        %2011 = vmatpush1.bf16.msra.mxu0 %v1619
        %2012 = vmatprep.subr.bf16.mxu0 0
        %2013 = vmatpush2.bf16.msra.mxu0 0
        %2014 = vmatprep.subr.bf16.mxu0 0
        %2015 = vmatpush2.bf16.msra.mxu0 0
        %2016 = vmatprep.subr.bf16.mxu0 0
        %2017 = vmatpush2.bf16.msra.mxu0 0
        %2018 = vmatprep.subr.bf16.mxu0 0
        %2019 = vmatpush2.bf16.msra.mxu0 0
        %2020 = vmatprep.subr.bf16.mxu0 0
        %2021 = vmatpush2.bf16.msra.mxu0 0
        %2022 = vmatprep.subr.bf16.mxu0 0
        %2023 = vmatpush2.bf16.msra.mxu0 0
        %2024 = vmatprep.subr.bf16.mxu0 0
        %2025 = vmatpush2.bf16.msra.mxu0 0
        %2026 = vmatprep.subr.bf16.mxu0 0
        %2027 = vmatpush2.bf16.msra.mxu0 0
        %2028 = vmatprep.mubr.bf16.mxu0 0
        %2029 = vmatmul.mubr.bf16.gmra.mxu0 %v1994
        %v2030 = vpop.f32.mrf.mxu0
        %v2031 = vadd.f32 0.0, %v2030
        %v2032 = vpop.f32.mrf.mxu0
        %v2033 = vpop.f32.mrf.mxu0
        %v2034 = vadd.f32 0.0, %v2033
        %v2035 = vpop.f32.mrf.mxu0
        %2036 = vdwg.mxu0
        %v2038 = vsel %vm1812, %v1904, 0
        %2040 = vmatprep.subr.bf16.mxu0 0
        %2041 = vmatpush1.bf16.msra.mxu0 0
        %2042 = vmatprep.subr.bf16.mxu0 0
        %2043 = vmatpush1.bf16.msra.mxu0 0
        %2044 = vmatprep.subr.bf16.mxu0 0
        %2045 = vmatpush1.bf16.msra.mxu0 0
        %2046 = vmatprep.subr.bf16.mxu0 0
        %2047 = vmatpush1.bf16.msra.mxu0 0
        %2048 = vmatprep.subr.bf16.mxu0 0
        %2049 = vmatpush1.bf16.msra.mxu0 0
        %2050 = vmatprep.subr.bf16.mxu0 0
        %2051 = vmatpush1.bf16.msra.mxu0 0
        %2052 = vmatprep.subr.bf16.mxu0 0
        %2053 = vmatpush1.bf16.msra.mxu0 0
        %2054 = vmatprep.subr.bf16.mxu0 0
        %2055 = vmatpush1.bf16.msra.mxu0 %v1620
        %2056 = vmatprep.subr.bf16.mxu0 0
        %2057 = vmatpush2.bf16.msra.mxu0 0
        %2058 = vmatprep.subr.bf16.mxu0 0
        %2059 = vmatpush2.bf16.msra.mxu0 0
        %2060 = vmatprep.subr.bf16.mxu0 0
        %2061 = vmatpush2.bf16.msra.mxu0 0
        %2062 = vmatprep.subr.bf16.mxu0 0
        %2063 = vmatpush2.bf16.msra.mxu0 0
        %2064 = vmatprep.subr.bf16.mxu0 0
        %2065 = vmatpush2.bf16.msra.mxu0 0
        %2066 = vmatprep.subr.bf16.mxu0 0
        %2067 = vmatpush2.bf16.msra.mxu0 0
        %2068 = vmatprep.subr.bf16.mxu0 0
        %2069 = vmatpush2.bf16.msra.mxu0 0
        %2070 = vmatprep.subr.bf16.mxu0 0
        %2071 = vmatpush2.bf16.msra.mxu0 0
        %2072 = vmatprep.mubr.bf16.mxu0 0
        %2073 = vmatmul.mubr.bf16.gmra.mxu0 %v2038
        %v2074 = vpop.f32.mrf.mxu0
        %v2075 = vadd.f32 0.0, %v2074
        %v2076 = vpop.f32.mrf.mxu0
        %v2077 = vpop.f32.mrf.mxu0
        %v2078 = vadd.f32 0.0, %v2077
        %v2079 = vpop.f32.mrf.mxu0
        %2080 = vdwg.mxu0
        %v2081 = vpack.c.bf16 %v1946, %v1943
        %v2082 = vpack.c.bf16 %v1990, %v1987
        %v2083 = vpack.c.bf16 %v2034, %v2031
        %v2084 = vpack.c.bf16 %v2078, %v2075
        %v2085 = vld [vmem:[%s1024] sm:$0xf]
        %v2086 = vld [vmem:[%s1024 + $0x4] sm:$0xf]
        %v2087 = vld [vmem:[%s1024 + $0x8] sm:$0xf]
        %v2088 = vld [vmem:[%s1024 + $0xc] sm:$0xf]
        %v2089 = vld [vmem:[%s1024 + $0x10] sm:$0xf]
        %v2090 = vld [vmem:[%s1024 + $0x14] sm:$0xf]
        %v2091 = vld [vmem:[%s1024 + $0x18] sm:$0xf]
        %v2092 = vld [vmem:[%s1024 + $0x1c] sm:$0xf]
        %v2093 = vld [vmem:[%s1024 + $0x20] sm:$0xf]
        %v2094 = vld [vmem:[%s1024 + $0x24] sm:$0xf]
        %v2095 = vld [vmem:[%s1024 + $0x28] sm:$0xf]
        %v2096 = vld [vmem:[%s1024 + $0x2c] sm:$0xf]
        %v2097 = vld [vmem:[%s1024 + $0x30] sm:$0xf]
        %v2098 = vld [vmem:[%s1024 + $0x34] sm:$0xf]
        %v2099 = vld [vmem:[%s1024 + $0x38] sm:$0xf]
        %v2100 = vld [vmem:[%s1024 + $0x3c] sm:$0xf]
        %v2105 = vunpack.c.l.b16 %v2085
        %v2106 = vunpack.c.l.b16 %v2086
        %v2107 = vunpack.c.l.b16 %v2087
        %v2108 = vunpack.c.l.b16 %v2088
        %v2109 = vpack.c.b16 %v2106, %v2105
        %v2110 = vpack.c.b16 %v2108, %v2107
        %v2114 = vsel %vm1623, %v2081, 0
        %2116 = vmatprep.subr.bf16.mxu0 0
        %2117 = vmatpush1.bf16.msra.mxu0 0
        %2118 = vmatprep.subr.bf16.mxu0 0
        %2119 = vmatpush1.bf16.msra.mxu0 0
        %2120 = vmatprep.subr.bf16.mxu0 0
        %2121 = vmatpush1.bf16.msra.mxu0 0
        %2122 = vmatprep.subr.bf16.mxu0 0
        %2123 = vmatpush1.bf16.msra.mxu0 0
        %2124 = vmatprep.subr.bf16.mxu0 0
        %2125 = vmatpush1.bf16.msra.mxu0 0
        %2126 = vmatprep.subr.bf16.mxu0 0
        %2127 = vmatpush1.bf16.msra.mxu0 0
        %2128 = vmatprep.subr.bf16.mxu0 0
        %2129 = vmatpush1.bf16.msra.mxu0 %v2110
        %2130 = vmatprep.subr.bf16.mxu0 0
        %2131 = vmatpush1.bf16.msra.mxu0 %v2109
        %2132 = vmatprep.subr.bf16.mxu0 0
        %2133 = vmatpush2.bf16.msra.mxu0 0
        %2134 = vmatprep.subr.bf16.mxu0 0
        %2135 = vmatpush2.bf16.msra.mxu0 0
        %2136 = vmatprep.subr.bf16.mxu0 0
        %2137 = vmatpush2.bf16.msra.mxu0 0
        %2138 = vmatprep.subr.bf16.mxu0 0
        %2139 = vmatpush2.bf16.msra.mxu0 0
        %2140 = vmatprep.subr.bf16.mxu0 0
        %2141 = vmatpush2.bf16.msra.mxu0 0
        %2142 = vmatprep.subr.bf16.mxu0 0
        %2143 = vmatpush2.bf16.msra.mxu0 0
        %2144 = vmatprep.subr.bf16.mxu0 0
        %2145 = vmatpush2.bf16.msra.mxu0 0
        %2146 = vmatprep.subr.bf16.mxu0 0
        %2147 = vmatpush2.bf16.msra.mxu0 0
        %2148 = vmatprep.mubr.bf16.mxu0 0
        %2149 = vmatmul.mubr.bf16.gmra.mxu0 %v2114
        %v2150 = vpop.f32.mrf.mxu0
        %v2151 = vadd.f32 0.0, %v2150
        %v2152 = vpop.f32.mrf.mxu0
        %v2153 = vpop.f32.mrf.mxu0
        %v2154 = vadd.f32 0.0, %v2153
        %v2155 = vpop.f32.mrf.mxu0
        %2156 = vdwg.mxu0
        %v2161 = vunpack.c.l.b16 %v2089
        %v2162 = vunpack.c.l.b16 %v2090
        %v2163 = vunpack.c.l.b16 %v2091
        %v2164 = vunpack.c.l.b16 %v2092
        %v2165 = vpack.c.b16 %v2162, %v2161
        %v2166 = vpack.c.b16 %v2164, %v2163
        %v2170 = vsel %vm1623, %v2082, 0
        %2172 = vmatprep.subr.bf16.mxu0 0
        %2173 = vmatpush1.bf16.msra.mxu0 0
        %2174 = vmatprep.subr.bf16.mxu0 0
        %2175 = vmatpush1.bf16.msra.mxu0 0
        %2176 = vmatprep.subr.bf16.mxu0 0
        %2177 = vmatpush1.bf16.msra.mxu0 0
        %2178 = vmatprep.subr.bf16.mxu0 0
        %2179 = vmatpush1.bf16.msra.mxu0 0
        %2180 = vmatprep.subr.bf16.mxu0 0
        %2181 = vmatpush1.bf16.msra.mxu0 0
        %2182 = vmatprep.subr.bf16.mxu0 0
        %2183 = vmatpush1.bf16.msra.mxu0 0
        %2184 = vmatprep.subr.bf16.mxu0 0
        %2185 = vmatpush1.bf16.msra.mxu0 %v2166
        %2186 = vmatprep.subr.bf16.mxu0 0
        %2187 = vmatpush1.bf16.msra.mxu0 %v2165
        %2188 = vmatprep.subr.bf16.mxu0 0
        %2189 = vmatpush2.bf16.msra.mxu0 0
        %2190 = vmatprep.subr.bf16.mxu0 0
        %2191 = vmatpush2.bf16.msra.mxu0 0
        %2192 = vmatprep.subr.bf16.mxu0 0
        %2193 = vmatpush2.bf16.msra.mxu0 0
        %2194 = vmatprep.subr.bf16.mxu0 0
        %2195 = vmatpush2.bf16.msra.mxu0 0
        %2196 = vmatprep.subr.bf16.mxu0 0
        %2197 = vmatpush2.bf16.msra.mxu0 0
        %2198 = vmatprep.subr.bf16.mxu0 0
        %2199 = vmatpush2.bf16.msra.mxu0 0
        %2200 = vmatprep.subr.bf16.mxu0 0
        %2201 = vmatpush2.bf16.msra.mxu0 0
        %2202 = vmatprep.subr.bf16.mxu0 0
        %2203 = vmatpush2.bf16.msra.mxu0 0
        %2204 = vmatprep.mubr.bf16.mxu0 0
        %2205 = vmatmul.mubr.bf16.gmra.mxu0 %v2170
        %v2206 = vpop.f32.mrf.mxu0
        %v2207 = vadd.f32 0.0, %v2206
        %v2208 = vpop.f32.mrf.mxu0
        %v2209 = vpop.f32.mrf.mxu0
        %v2210 = vadd.f32 0.0, %v2209
        %v2211 = vpop.f32.mrf.mxu0
        %2212 = vdwg.mxu0
        %v2217 = vunpack.c.l.b16 %v2093
        %v2218 = vunpack.c.l.b16 %v2094
        %v2219 = vunpack.c.l.b16 %v2095
        %v2220 = vunpack.c.l.b16 %v2096
        %v2221 = vpack.c.b16 %v2218, %v2217
        %v2222 = vpack.c.b16 %v2220, %v2219
        %v2226 = vsel %vm1623, %v2083, 0
        %2228 = vmatprep.subr.bf16.mxu0 0
        %2229 = vmatpush1.bf16.msra.mxu0 0
        %2230 = vmatprep.subr.bf16.mxu0 0
        %2231 = vmatpush1.bf16.msra.mxu0 0
        %2232 = vmatprep.subr.bf16.mxu0 0
        %2233 = vmatpush1.bf16.msra.mxu0 0
        %2234 = vmatprep.subr.bf16.mxu0 0
        %2235 = vmatpush1.bf16.msra.mxu0 0
        %2236 = vmatprep.subr.bf16.mxu0 0
        %2237 = vmatpush1.bf16.msra.mxu0 0
        %2238 = vmatprep.subr.bf16.mxu0 0
        %2239 = vmatpush1.bf16.msra.mxu0 0
        %2240 = vmatprep.subr.bf16.mxu0 0
        %2241 = vmatpush1.bf16.msra.mxu0 %v2222
        %2242 = vmatprep.subr.bf16.mxu0 0
        %2243 = vmatpush1.bf16.msra.mxu0 %v2221
        %2244 = vmatprep.subr.bf16.mxu0 0
        %2245 = vmatpush2.bf16.msra.mxu0 0
        %2246 = vmatprep.subr.bf16.mxu0 0
        %2247 = vmatpush2.bf16.msra.mxu0 0
        %2248 = vmatprep.subr.bf16.mxu0 0
        %2249 = vmatpush2.bf16.msra.mxu0 0
        %2250 = vmatprep.subr.bf16.mxu0 0
        %2251 = vmatpush2.bf16.msra.mxu0 0
        %2252 = vmatprep.subr.bf16.mxu0 0
        %2253 = vmatpush2.bf16.msra.mxu0 0
        %2254 = vmatprep.subr.bf16.mxu0 0
        %2255 = vmatpush2.bf16.msra.mxu0 0
        %2256 = vmatprep.subr.bf16.mxu0 0
        %2257 = vmatpush2.bf16.msra.mxu0 0
        %2258 = vmatprep.subr.bf16.mxu0 0
        %2259 = vmatpush2.bf16.msra.mxu0 0
        %2260 = vmatprep.mubr.bf16.mxu0 0
        %2261 = vmatmul.mubr.bf16.gmra.mxu0 %v2226
        %v2262 = vpop.f32.mrf.mxu0
        %v2263 = vadd.f32 0.0, %v2262
        %v2264 = vpop.f32.mrf.mxu0
        %v2265 = vpop.f32.mrf.mxu0
        %v2266 = vadd.f32 0.0, %v2265
        %v2267 = vpop.f32.mrf.mxu0
        %2268 = vdwg.mxu0
        %v2273 = vunpack.c.l.b16 %v2097
        %v2274 = vunpack.c.l.b16 %v2098
        %v2275 = vunpack.c.l.b16 %v2099
        %v2276 = vunpack.c.l.b16 %v2100
        %v2277 = vpack.c.b16 %v2274, %v2273
        %v2278 = vpack.c.b16 %v2276, %v2275
        %v2282 = vsel %vm1623, %v2084, 0
        %2284 = vmatprep.subr.bf16.mxu0 0
        %2285 = vmatpush1.bf16.msra.mxu0 0
        %2286 = vmatprep.subr.bf16.mxu0 0
        %2287 = vmatpush1.bf16.msra.mxu0 0
        %2288 = vmatprep.subr.bf16.mxu0 0
        %2289 = vmatpush1.bf16.msra.mxu0 0
        %2290 = vmatprep.subr.bf16.mxu0 0
        %2291 = vmatpush1.bf16.msra.mxu0 0
        %2292 = vmatprep.subr.bf16.mxu0 0
        %2293 = vmatpush1.bf16.msra.mxu0 0
        %2294 = vmatprep.subr.bf16.mxu0 0
        %2295 = vmatpush1.bf16.msra.mxu0 0
        %2296 = vmatprep.subr.bf16.mxu0 0
        %2297 = vmatpush1.bf16.msra.mxu0 %v2278
        %2298 = vmatprep.subr.bf16.mxu0 0
        %2299 = vmatpush1.bf16.msra.mxu0 %v2277
        %2300 = vmatprep.subr.bf16.mxu0 0
        %2301 = vmatpush2.bf16.msra.mxu0 0
        %2302 = vmatprep.subr.bf16.mxu0 0
        %2303 = vmatpush2.bf16.msra.mxu0 0
        %2304 = vmatprep.subr.bf16.mxu0 0
        %2305 = vmatpush2.bf16.msra.mxu0 0
        %2306 = vmatprep.subr.bf16.mxu0 0
        %2307 = vmatpush2.bf16.msra.mxu0 0
        %2308 = vmatprep.subr.bf16.mxu0 0
        %2309 = vmatpush2.bf16.msra.mxu0 0
        %2310 = vmatprep.subr.bf16.mxu0 0
        %2311 = vmatpush2.bf16.msra.mxu0 0
        %2312 = vmatprep.subr.bf16.mxu0 0
        %2313 = vmatpush2.bf16.msra.mxu0 0
        %2314 = vmatprep.subr.bf16.mxu0 0
        %2315 = vmatpush2.bf16.msra.mxu0 0
        %2316 = vmatprep.mubr.bf16.mxu0 0
        %2317 = vmatmul.mubr.bf16.gmra.mxu0 %v2282
        %v2318 = vpop.f32.mrf.mxu0
        %v2319 = vadd.f32 0.0, %v2318
        %v2320 = vpop.f32.mrf.mxu0
        %v2321 = vpop.f32.mrf.mxu0
        %v2322 = vadd.f32 0.0, %v2321
        %v2323 = vpop.f32.mrf.mxu0
        %2324 = vdwg.mxu0
        %v2325 = vld [vmem:[%s1032] sm:$0x1]
        %v2327 = vlaneseq
        %v2328 = vshrl.u32 %v2327, 7
        %v2329 = vsub.s32 0, %v2328
        %v2330 = vrot.slane %v2325, %v2329
        %v2332 = vadd.f32 %v2330, %v2151
        %v2333 = vadd.f32 %v2330, %v2154
        %v2334 = vadd.f32 %v2332, %v2207
        %v2335 = vadd.f32 %v2333, %v2210
        %v2336 = vadd.f32 %v2334, %v2263
        %v2337 = vadd.f32 %v2335, %v2266
        %v2338 = vadd.f32 %v2336, %v2319
        %v2339 = vadd.f32 %v2337, %v2322
        %v2340 = vadd.f32 %v2338, %v1285
        %v2341 = vadd.f32 %v2339, %v1286
        %v2342 = vld [vmem:[%s1040] sm:$0x1]
        %v2343 = vld [vmem:[%s1048] sm:$0x1]
        %2344 = vadd.xlane.f32.xlu0 %v2340
        %v2345 = vpop.xlane.xlu0 %2344
        %2346 = vadd.xlane.f32.xlu0 %v2341
        %v2347 = vpop.xlane.xlu0 %2346
        %v2348 = vrcp.pop 128.0
        %v2349 = vmul.f32 %v2345, %v2348
        %v2350 = vmul.f32 %v2347, %v2348
        %v2351 = vsub.f32 %v2340, %v2349
        %v2352 = vsub.f32 %v2341, %v2350
        %v2353 = vmul.f32 %v2351, %v2351
        %v2354 = vmul.f32 %v2352, %v2352
        %2355 = vadd.xlane.f32.xlu0 %v2353
        %v2356 = vpop.xlane.xlu0 %2355
        %2357 = vadd.xlane.f32.xlu0 %v2354
        %v2358 = vpop.xlane.xlu0 %2357
        %v2359 = vmul.f32 %v2356, %v2348
        %v2360 = vmul.f32 %v2358, %v2348
        %v2361 = vadd.f32 %v2359, 1e-05
        %v2362 = vadd.f32 %v2360, 1e-05
        %v2363 = vrsqrt.pop %v2361
        %v2364 = vrsqrt.pop %v2362
        %v2365 = vmul.f32 %v2351, %v2363
        %v2366 = vmul.f32 %v2352, %v2364
        %v2368 = vlaneseq
        %v2369 = vshrl.u32 %v2368, 7
        %v2370 = vsub.s32 0, %v2369
        %v2371 = vrot.slane %v2342, %v2370
        %v2373 = vmul.f32 %v2365, %v2371
        %v2374 = vmul.f32 %v2366, %v2371
        %v2376 = vlaneseq
        %v2377 = vshrl.u32 %v2376, 7
        %v2378 = vsub.s32 0, %v2377
        %v2379 = vrot.slane %v2343, %v2378
        %v2381 = vadd.f32 %v2373, %v2379
        %v2382 = vadd.f32 %v2374, %v2379
        %v2383 = vpack.c.bf16 %v2382, %v2381
        %v2384 = vld [vmem:[%s1234] sm:$0xff]
        %v2385 = vld [vmem:[%s1234 + $0x8] sm:$0xff]
        %v2386 = vld [vmem:[%s1234 + $0x10] sm:$0xff]
        %v2387 = vld [vmem:[%s1234 + $0x18] sm:$0xff]
        %v2388 = vld [vmem:[%s1234 + $0x20] sm:$0xff]
        %v2389 = vld [vmem:[%s1234 + $0x28] sm:$0xff]
        %v2390 = vld [vmem:[%s1234 + $0x30] sm:$0xff]
        %v2391 = vld [vmem:[%s1234 + $0x38] sm:$0xff]
        %v2392 = vld [vmem:[%s1234 + $0x40] sm:$0xff]
        %v2393 = vld [vmem:[%s1234 + $0x48] sm:$0xff]
        %v2394 = vld [vmem:[%s1234 + $0x50] sm:$0xff]
        %v2395 = vld [vmem:[%s1234 + $0x58] sm:$0xff]
        %v2396 = vld [vmem:[%s1234 + $0x60] sm:$0xff]
        %v2397 = vld [vmem:[%s1234 + $0x68] sm:$0xff]
        %v2398 = vld [vmem:[%s1234 + $0x70] sm:$0xff]
        %v2399 = vld [vmem:[%s1234 + $0x78] sm:$0xff]
        %v2400 = vld [vmem:[%s1057] sm:$0x3]
        %v2402 = vlaneseq
        %v2403 = vshrl.u32 %v2402, 7
        %v2404 = vsub.s32 0, %v2403
        %v2405 = vrot.slane %v2400, %v2404
        %v2406 = vlaneseq
        %v2407 = vshrl.u32 %v2406, 7
        %v2408 = vsub.s32 1, %v2407
        %v2409 = vrot.slane %v2400, %v2408
        %v2428 = vunpack.c.l.b16 %v2384
        %v2429 = vunpack.c.h.b16 %v2384
        %v2430 = vunpack.c.l.b16 %v2385
        %v2431 = vunpack.c.h.b16 %v2385
        %v2432 = vunpack.c.l.b16 %v2386
        %v2433 = vunpack.c.h.b16 %v2386
        %v2434 = vunpack.c.l.b16 %v2387
        %v2435 = vunpack.c.h.b16 %v2387
        %v2436 = vunpack.c.l.b16 %v2388
        %v2437 = vunpack.c.h.b16 %v2388
        %v2438 = vunpack.c.l.b16 %v2389
        %v2439 = vunpack.c.h.b16 %v2389
        %v2440 = vunpack.c.l.b16 %v2390
        %v2441 = vunpack.c.h.b16 %v2390
        %v2442 = vunpack.c.l.b16 %v2391
        %v2443 = vunpack.c.h.b16 %v2391
        %v2444 = vunpack.c.l.b16 %v2392
        %v2445 = vunpack.c.h.b16 %v2392
        %v2446 = vunpack.c.l.b16 %v2393
        %v2447 = vunpack.c.h.b16 %v2393
        %v2448 = vunpack.c.l.b16 %v2394
        %v2449 = vunpack.c.h.b16 %v2394
        %v2450 = vunpack.c.l.b16 %v2395
        %v2451 = vunpack.c.h.b16 %v2395
        %v2452 = vunpack.c.l.b16 %v2396
        %v2453 = vunpack.c.h.b16 %v2396
        %v2454 = vunpack.c.l.b16 %v2397
        %v2455 = vunpack.c.h.b16 %v2397
        %v2456 = vunpack.c.l.b16 %v2398
        %v2457 = vunpack.c.h.b16 %v2398
        %v2458 = vunpack.c.l.b16 %v2399
        %v2459 = vunpack.c.h.b16 %v2399
        %v2460 = vpack.c.b16 %v2430, %v2428
        %v2461 = vpack.c.b16 %v2431, %v2429
        %v2462 = vpack.c.b16 %v2434, %v2432
        %v2463 = vpack.c.b16 %v2435, %v2433
        %v2464 = vpack.c.b16 %v2438, %v2436
        %v2465 = vpack.c.b16 %v2439, %v2437
        %v2466 = vpack.c.b16 %v2442, %v2440
        %v2467 = vpack.c.b16 %v2443, %v2441
        %v2468 = vpack.c.b16 %v2446, %v2444
        %v2469 = vpack.c.b16 %v2447, %v2445
        %v2470 = vpack.c.b16 %v2450, %v2448
        %v2471 = vpack.c.b16 %v2451, %v2449
        %v2472 = vpack.c.b16 %v2454, %v2452
        %v2473 = vpack.c.b16 %v2455, %v2453
        %v2474 = vpack.c.b16 %v2458, %v2456
        %v2475 = vpack.c.b16 %v2459, %v2457
        %2492 = vmatprep.subr.bf16.mxu0 %v2475
        %2493 = vmatpush1.bf16.msra.mxu0 %v2474
        %2494 = vmatprep.subr.bf16.mxu0 %v2473
        %2495 = vmatpush1.bf16.msra.mxu0 %v2472
        %2496 = vmatprep.subr.bf16.mxu0 %v2471
        %2497 = vmatpush1.bf16.msra.mxu0 %v2470
        %2498 = vmatprep.subr.bf16.mxu0 %v2469
        %2499 = vmatpush1.bf16.msra.mxu0 %v2468
        %2500 = vmatprep.subr.bf16.mxu0 %v2467
        %2501 = vmatpush1.bf16.msra.mxu0 %v2466
        %2502 = vmatprep.subr.bf16.mxu0 %v2465
        %2503 = vmatpush1.bf16.msra.mxu0 %v2464
        %2504 = vmatprep.subr.bf16.mxu0 %v2463
        %2505 = vmatpush1.bf16.msra.mxu0 %v2462
        %2506 = vmatprep.subr.bf16.mxu0 %v2461
        %2507 = vmatpush1.bf16.msra.mxu0 %v2460
        %2508 = vmatprep.subr.bf16.mxu0 0
        %2509 = vmatpush2.bf16.msra.mxu0 0
        %2510 = vmatprep.subr.bf16.mxu0 0
        %2511 = vmatpush2.bf16.msra.mxu0 0
        %2512 = vmatprep.subr.bf16.mxu0 0
        %2513 = vmatpush2.bf16.msra.mxu0 0
        %2514 = vmatprep.subr.bf16.mxu0 0
        %2515 = vmatpush2.bf16.msra.mxu0 0
        %2516 = vmatprep.subr.bf16.mxu0 0
        %2517 = vmatpush2.bf16.msra.mxu0 0
        %2518 = vmatprep.subr.bf16.mxu0 0
        %2519 = vmatpush2.bf16.msra.mxu0 0
        %2520 = vmatprep.subr.bf16.mxu0 0
        %2521 = vmatpush2.bf16.msra.mxu0 0
        %2522 = vmatprep.subr.bf16.mxu0 0
        %2523 = vmatpush2.bf16.msra.mxu0 0
        %2524 = vmatprep.mubr.bf16.mxu0 0
        %2525 = vmatmul.mubr.bf16.gmra.mxu0 %v2383
        %v2526 = vpop.f32.mrf.mxu0
        %v2527 = vadd.f32 %v2405, %v2526
        %v2528 = vpop.f32.mrf.mxu0
        %v2529 = vadd.f32 %v2409, %v2528
        %v2530 = vpop.f32.mrf.mxu0
        %v2531 = vadd.f32 %v2405, %v2530
        %v2532 = vpop.f32.mrf.mxu0
        %v2533 = vadd.f32 %v2409, %v2532
        %2534 = vdwg.mxu0
        %v2535 = vmul.f32 %v2527, %v2527
        %v2536 = vmul.f32 %v2529, %v2529
        %v2537 = vmul.f32 %v2531, %v2531
        %v2538 = vmul.f32 %v2533, %v2533
        %v2539 = vmul.f32 %v2527, %v2535
        %v2540 = vmul.f32 %v2529, %v2536
        %v2541 = vmul.f32 %v2531, %v2537
        %v2542 = vmul.f32 %v2533, %v2538
        %v2543 = vmul.f32 %v2539, 0.044715
        %v2544 = vmul.f32 %v2540, 0.044715
        %v2545 = vmul.f32 %v2541, 0.044715
        %v2546 = vmul.f32 %v2542, 0.044715
        %v2547 = vadd.f32 %v2527, %v2543
        %v2548 = vadd.f32 %v2529, %v2544
        %v2549 = vadd.f32 %v2531, %v2545
        %v2550 = vadd.f32 %v2533, %v2546
        %v2551 = vmul.f32 %v2547, 0.7978846
        %v2552 = vmul.f32 %v2548, 0.7978846
        %v2553 = vmul.f32 %v2549, 0.7978846
        %v2554 = vmul.f32 %v2550, 0.7978846
        %v2555 = vtanh.pop %v2551
        %v2556 = vtanh.pop %v2552
        %v2557 = vtanh.pop %v2553
        %v2558 = vtanh.pop %v2554
        %v2559 = vadd.f32 %v2555, 1.0
        %v2560 = vadd.f32 %v2556, 1.0
        %v2561 = vadd.f32 %v2557, 1.0
        %v2562 = vadd.f32 %v2558, 1.0
        %v2563 = vmul.f32 %v2559, 0.5
        %v2564 = vmul.f32 %v2560, 0.5
        %v2565 = vmul.f32 %v2561, 0.5
        %v2566 = vmul.f32 %v2562, 0.5
        %v2567 = vmul.f32 %v2527, %v2563
        %v2568 = vmul.f32 %v2529, %v2564
        %v2569 = vmul.f32 %v2531, %v2565
        %v2570 = vmul.f32 %v2533, %v2566
        %v2571 = vpack.c.bf16 %v2569, %v2567
        %v2572 = vpack.c.bf16 %v2570, %v2568
        %v2573 = vld [vmem:[%s1066] sm:$0xf]
        %v2574 = vld [vmem:[%s1066 + $0x4] sm:$0xf]
        %v2575 = vld [vmem:[%s1066 + $0x8] sm:$0xf]
        %v2576 = vld [vmem:[%s1066 + $0xc] sm:$0xf]
        %v2577 = vld [vmem:[%s1066 + $0x10] sm:$0xf]
        %v2578 = vld [vmem:[%s1066 + $0x14] sm:$0xf]
        %v2579 = vld [vmem:[%s1066 + $0x18] sm:$0xf]
        %v2580 = vld [vmem:[%s1066 + $0x1c] sm:$0xf]
        %v2581 = vld [vmem:[%s1066 + $0x20] sm:$0xf]
        %v2582 = vld [vmem:[%s1066 + $0x24] sm:$0xf]
        %v2583 = vld [vmem:[%s1066 + $0x28] sm:$0xf]
        %v2584 = vld [vmem:[%s1066 + $0x2c] sm:$0xf]
        %v2585 = vld [vmem:[%s1066 + $0x30] sm:$0xf]
        %v2586 = vld [vmem:[%s1066 + $0x34] sm:$0xf]
        %v2587 = vld [vmem:[%s1066 + $0x38] sm:$0xf]
        %v2588 = vld [vmem:[%s1066 + $0x3c] sm:$0xf]
        %v2589 = vld [vmem:[%s1066 + $0x40] sm:$0xf]
        %v2590 = vld [vmem:[%s1066 + $0x44] sm:$0xf]
        %v2591 = vld [vmem:[%s1066 + $0x48] sm:$0xf]
        %v2592 = vld [vmem:[%s1066 + $0x4c] sm:$0xf]
        %v2593 = vld [vmem:[%s1066 + $0x50] sm:$0xf]
        %v2594 = vld [vmem:[%s1066 + $0x54] sm:$0xf]
        %v2595 = vld [vmem:[%s1066 + $0x58] sm:$0xf]
        %v2596 = vld [vmem:[%s1066 + $0x5c] sm:$0xf]
        %v2597 = vld [vmem:[%s1066 + $0x60] sm:$0xf]
        %v2598 = vld [vmem:[%s1066 + $0x64] sm:$0xf]
        %v2599 = vld [vmem:[%s1066 + $0x68] sm:$0xf]
        %v2600 = vld [vmem:[%s1066 + $0x6c] sm:$0xf]
        %v2601 = vld [vmem:[%s1066 + $0x70] sm:$0xf]
        %v2602 = vld [vmem:[%s1066 + $0x74] sm:$0xf]
        %v2603 = vld [vmem:[%s1066 + $0x78] sm:$0xf]
        %v2604 = vld [vmem:[%s1066 + $0x7c] sm:$0xf]
        %v2605 = vld [vmem:[%s1074] sm:$0x1]
        %v2607 = vlaneseq
        %v2608 = vshrl.u32 %v2607, 7
        %v2609 = vsub.s32 0, %v2608
        %v2610 = vrot.slane %v2605, %v2609
        %v2644 = vunpack.c.l.b16 %v2573
        %v2645 = vunpack.c.l.b16 %v2574
        %v2646 = vunpack.c.l.b16 %v2575
        %v2647 = vunpack.c.l.b16 %v2576
        %v2648 = vunpack.c.l.b16 %v2577
        %v2649 = vunpack.c.l.b16 %v2578
        %v2650 = vunpack.c.l.b16 %v2579
        %v2651 = vunpack.c.l.b16 %v2580
        %v2652 = vunpack.c.l.b16 %v2581
        %v2653 = vunpack.c.l.b16 %v2582
        %v2654 = vunpack.c.l.b16 %v2583
        %v2655 = vunpack.c.l.b16 %v2584
        %v2656 = vunpack.c.l.b16 %v2585
        %v2657 = vunpack.c.l.b16 %v2586
        %v2658 = vunpack.c.l.b16 %v2587
        %v2659 = vunpack.c.l.b16 %v2588
        %v2660 = vunpack.c.l.b16 %v2589
        %v2661 = vunpack.c.l.b16 %v2590
        %v2662 = vunpack.c.l.b16 %v2591
        %v2663 = vunpack.c.l.b16 %v2592
        %v2664 = vunpack.c.l.b16 %v2593
        %v2665 = vunpack.c.l.b16 %v2594
        %v2666 = vunpack.c.l.b16 %v2595
        %v2667 = vunpack.c.l.b16 %v2596
        %v2668 = vunpack.c.l.b16 %v2597
        %v2669 = vunpack.c.l.b16 %v2598
        %v2670 = vunpack.c.l.b16 %v2599
        %v2671 = vunpack.c.l.b16 %v2600
        %v2672 = vunpack.c.l.b16 %v2601
        %v2673 = vunpack.c.l.b16 %v2602
        %v2674 = vunpack.c.l.b16 %v2603
        %v2675 = vunpack.c.l.b16 %v2604
        %v2676 = vpack.c.b16 %v2645, %v2644
        %v2677 = vpack.c.b16 %v2647, %v2646
        %v2678 = vpack.c.b16 %v2649, %v2648
        %v2679 = vpack.c.b16 %v2651, %v2650
        %v2680 = vpack.c.b16 %v2653, %v2652
        %v2681 = vpack.c.b16 %v2655, %v2654
        %v2682 = vpack.c.b16 %v2657, %v2656
        %v2683 = vpack.c.b16 %v2659, %v2658
        %v2684 = vpack.c.b16 %v2661, %v2660
        %v2685 = vpack.c.b16 %v2663, %v2662
        %v2686 = vpack.c.b16 %v2665, %v2664
        %v2687 = vpack.c.b16 %v2667, %v2666
        %v2688 = vpack.c.b16 %v2669, %v2668
        %v2689 = vpack.c.b16 %v2671, %v2670
        %v2690 = vpack.c.b16 %v2673, %v2672
        %v2691 = vpack.c.b16 %v2675, %v2674
        %2708 = vmatprep.subr.bf16.mxu0 0
        %2709 = vmatpush1.bf16.msra.mxu0 %v2683
        %2710 = vmatprep.subr.bf16.mxu0 0
        %2711 = vmatpush1.bf16.msra.mxu0 %v2682
        %2712 = vmatprep.subr.bf16.mxu0 0
        %2713 = vmatpush1.bf16.msra.mxu0 %v2681
        %2714 = vmatprep.subr.bf16.mxu0 0
        %2715 = vmatpush1.bf16.msra.mxu0 %v2680
        %2716 = vmatprep.subr.bf16.mxu0 0
        %2717 = vmatpush1.bf16.msra.mxu0 %v2679
        %2718 = vmatprep.subr.bf16.mxu0 0
        %2719 = vmatpush1.bf16.msra.mxu0 %v2678
        %2720 = vmatprep.subr.bf16.mxu0 0
        %2721 = vmatpush1.bf16.msra.mxu0 %v2677
        %2722 = vmatprep.subr.bf16.mxu0 0
        %2723 = vmatpush1.bf16.msra.mxu0 %v2676
        %2724 = vmatprep.subr.bf16.mxu0 0
        %2725 = vmatpush2.bf16.msra.mxu0 %v2691
        %2726 = vmatprep.subr.bf16.mxu0 0
        %2727 = vmatpush2.bf16.msra.mxu0 %v2690
        %2728 = vmatprep.subr.bf16.mxu0 0
        %2729 = vmatpush2.bf16.msra.mxu0 %v2689
        %2730 = vmatprep.subr.bf16.mxu0 0
        %2731 = vmatpush2.bf16.msra.mxu0 %v2688
        %2732 = vmatprep.subr.bf16.mxu0 0
        %2733 = vmatpush2.bf16.msra.mxu0 %v2687
        %2734 = vmatprep.subr.bf16.mxu0 0
        %2735 = vmatpush2.bf16.msra.mxu0 %v2686
        %2736 = vmatprep.subr.bf16.mxu0 0
        %2737 = vmatpush2.bf16.msra.mxu0 %v2685
        %2738 = vmatprep.subr.bf16.mxu0 0
        %2739 = vmatpush2.bf16.msra.mxu0 %v2684
        %2740 = vmatprep.mubr.bf16.mxu0 %v2572
        %2741 = vmatmul.mubr.bf16.gmra.mxu0 %v2571
        %v2742 = vpop.f32.mrf.mxu0
        %v2743 = vadd.f32 %v2610, %v2742
        %v2744 = vpop.f32.mrf.mxu0
        %v2745 = vpop.f32.mrf.mxu0
        %v2746 = vadd.f32 %v2610, %v2745
        %v2747 = vpop.f32.mrf.mxu0
        %2748 = vdwg.mxu0
        %v2749 = vadd.f32 %v2743, %v2381
        %v2750 = vadd.f32 %v2746, %v2382
        %v2751 = vld [vmem:[%s1082] sm:$0x1]
        %v2752 = vld [vmem:[%s1090] sm:$0x1]
        %2753 = vadd.xlane.f32.xlu0 %v2749
        %v2754 = vpop.xlane.xlu0 %2753
        %2755 = vadd.xlane.f32.xlu0 %v2750
        %v2756 = vpop.xlane.xlu0 %2755
        %v2757 = vmul.f32 %v2754, %v2348
        %v2758 = vmul.f32 %v2756, %v2348
        %v2759 = vsub.f32 %v2749, %v2757
        %v2760 = vsub.f32 %v2750, %v2758
        %v2761 = vmul.f32 %v2759, %v2759
        %v2762 = vmul.f32 %v2760, %v2760
        %2763 = vadd.xlane.f32.xlu0 %v2761
        %v2764 = vpop.xlane.xlu0 %2763
        %2765 = vadd.xlane.f32.xlu0 %v2762
        %v2766 = vpop.xlane.xlu0 %2765
        %v2767 = vmul.f32 %v2764, %v2348
        %v2768 = vmul.f32 %v2766, %v2348
        %v2769 = vadd.f32 %v2767, 1e-05
        %v2770 = vadd.f32 %v2768, 1e-05
        %v2771 = vrsqrt.pop %v2769
        %v2772 = vrsqrt.pop %v2770
        %v2773 = vmul.f32 %v2759, %v2771
        %v2774 = vmul.f32 %v2760, %v2772
        %v2776 = vlaneseq
        %v2777 = vshrl.u32 %v2776, 7
        %v2778 = vsub.s32 0, %v2777
        %v2779 = vrot.slane %v2751, %v2778
        %v2781 = vmul.f32 %v2773, %v2779
        %v2782 = vmul.f32 %v2774, %v2779
        %v2784 = vlaneseq
        %v2785 = vshrl.u32 %v2784, 7
        %v2786 = vsub.s32 0, %v2785
        %v2787 = vrot.slane %v2752, %v2786
        %v2789 = vadd.f32 %v2781, %v2787
        %v2790 = vadd.f32 %v2782, %v2787
        %2791 = vst [vmem:[#allocation2] sm:$0xff] %v2789
        %2792 = vst [vmem:[#allocation2 + $0x8] sm:$0xff] %v2790
        %p2793 = scmp.eq.s32.totalorder %s42, 1
        // Predicated region
        $region201: #{sentiment_classifier_forward.1} parent=123 // pred_check
          %p2794 = pneg %p2793
        $region202: #{sentiment_classifier_forward.1} parent=123 // pred_check_branch
          %2796 = sbr.rel (%p2794) target = $region204
        $region203: #{sentiment_classifier_forward.1} parent=123 // pred_region
          %v2797 = vpack.c.bf16 %v2790, %v2789
          %v2798 = vld [vmem:[%s16] sm:$0xf]
          %v2799 = vld [vmem:[%s16 + $0x4] sm:$0xf]
          %v2800 = vld [vmem:[%s16 + $0x8] sm:$0xf]
          %v2801 = vld [vmem:[%s16 + $0xc] sm:$0xf]
          %v2802 = vld [vmem:[%s16 + $0x10] sm:$0xf]
          %v2803 = vld [vmem:[%s16 + $0x14] sm:$0xf]
          %v2804 = vld [vmem:[%s16 + $0x18] sm:$0xf]
          %v2805 = vld [vmem:[%s16 + $0x1c] sm:$0xf]
          %v2806 = vld [vmem:[%s16 + $0x20] sm:$0xf]
          %v2807 = vld [vmem:[%s16 + $0x24] sm:$0xf]
          %v2808 = vld [vmem:[%s16 + $0x28] sm:$0xf]
          %v2809 = vld [vmem:[%s16 + $0x2c] sm:$0xf]
          %v2810 = vld [vmem:[%s16 + $0x30] sm:$0xf]
          %v2811 = vld [vmem:[%s16 + $0x34] sm:$0xf]
          %v2812 = vld [vmem:[%s16 + $0x38] sm:$0xf]
          %v2813 = vld [vmem:[%s16 + $0x3c] sm:$0xf]
          %v2814 = vld [vmem:[%s17] sm:$0x1]
          %v2816 = vlaneseq
          %v2817 = vshrl.u32 %v2816, 7
          %v2818 = vsub.s32 0, %v2817
          %v2819 = vrot.slane %v2814, %v2818
          %v2837 = vunpack.c.l.b16 %v2798
          %v2838 = vunpack.c.l.b16 %v2799
          %v2839 = vunpack.c.l.b16 %v2800
          %v2840 = vunpack.c.l.b16 %v2801
          %v2841 = vunpack.c.l.b16 %v2802
          %v2842 = vunpack.c.l.b16 %v2803
          %v2843 = vunpack.c.l.b16 %v2804
          %v2844 = vunpack.c.l.b16 %v2805
          %v2845 = vunpack.c.l.b16 %v2806
          %v2846 = vunpack.c.l.b16 %v2807
          %v2847 = vunpack.c.l.b16 %v2808
          %v2848 = vunpack.c.l.b16 %v2809
          %v2849 = vunpack.c.l.b16 %v2810
          %v2850 = vunpack.c.l.b16 %v2811
          %v2851 = vunpack.c.l.b16 %v2812
          %v2852 = vunpack.c.l.b16 %v2813
          %v2853 = vpack.c.b16 %v2838, %v2837
          %v2854 = vpack.c.b16 %v2840, %v2839
          %v2855 = vpack.c.b16 %v2842, %v2841
          %v2856 = vpack.c.b16 %v2844, %v2843
          %v2857 = vpack.c.b16 %v2846, %v2845
          %v2858 = vpack.c.b16 %v2848, %v2847
          %v2859 = vpack.c.b16 %v2850, %v2849
          %v2860 = vpack.c.b16 %v2852, %v2851
          %2869 = vmatprep.subr.bf16.mxu0 0
          %2870 = vmatpush1.bf16.msra.mxu0 %v2860
          %2871 = vmatprep.subr.bf16.mxu0 0
          %2872 = vmatpush1.bf16.msra.mxu0 %v2859
          %2873 = vmatprep.subr.bf16.mxu0 0
          %2874 = vmatpush1.bf16.msra.mxu0 %v2858
          %2875 = vmatprep.subr.bf16.mxu0 0
          %2876 = vmatpush1.bf16.msra.mxu0 %v2857
          %2877 = vmatprep.subr.bf16.mxu0 0
          %2878 = vmatpush1.bf16.msra.mxu0 %v2856
          %2879 = vmatprep.subr.bf16.mxu0 0
          %2880 = vmatpush1.bf16.msra.mxu0 %v2855
          %2881 = vmatprep.subr.bf16.mxu0 0
          %2882 = vmatpush1.bf16.msra.mxu0 %v2854
          %2883 = vmatprep.subr.bf16.mxu0 0
          %2884 = vmatpush1.bf16.msra.mxu0 %v2853
          %2885 = vmatprep.subr.bf16.mxu0 0
          %2886 = vmatpush2.bf16.msra.mxu0 0
          %2887 = vmatprep.subr.bf16.mxu0 0
          %2888 = vmatpush2.bf16.msra.mxu0 0
          %2889 = vmatprep.subr.bf16.mxu0 0
          %2890 = vmatpush2.bf16.msra.mxu0 0
          %2891 = vmatprep.subr.bf16.mxu0 0
          %2892 = vmatpush2.bf16.msra.mxu0 0
          %2893 = vmatprep.subr.bf16.mxu0 0
          %2894 = vmatpush2.bf16.msra.mxu0 0
          %2895 = vmatprep.subr.bf16.mxu0 0
          %2896 = vmatpush2.bf16.msra.mxu0 0
          %2897 = vmatprep.subr.bf16.mxu0 0
          %2898 = vmatpush2.bf16.msra.mxu0 0
          %2899 = vmatprep.subr.bf16.mxu0 0
          %2900 = vmatpush2.bf16.msra.mxu0 0
          %2901 = vmatprep.mubr.bf16.mxu0 0
          %2902 = vmatmul.mubr.bf16.gmra.mxu0 %v2797
          %v2903 = vpop.f32.mrf.mxu0
          %v2904 = vadd.f32 %v2819, %v2903
          %v2905 = vpop.f32.mrf.mxu0
          %v2906 = vpop.f32.mrf.mxu0
          %v2907 = vadd.f32 %v2819, %v2906
          %v2908 = vpop.f32.mrf.mxu0
          %2909 = vdwg.mxu0
          %v2910 = vtanh.pop %v2904
          %v2911 = vtanh.pop %v2907
          %v2912 = vpack.c.bf16 %v2911, %v2910
          %v2913 = vld [vmem:[#allocation17] sm:$0xff]
          %v2914 = vld [vmem:[#allocation17 + $0x8] sm:$0xff]
          %v2915 = vld [vmem:[#allocation17 + $0x10] sm:$0xff]
          %v2916 = vld [vmem:[#allocation17 + $0x18] sm:$0xff]
          %v2917 = vld [vmem:[#allocation17 + $0x20] sm:$0xff]
          %v2918 = vld [vmem:[#allocation17 + $0x28] sm:$0xff]
          %v2919 = vld [vmem:[#allocation17 + $0x30] sm:$0xff]
          %v2920 = vld [vmem:[#allocation17 + $0x38] sm:$0xff]
          %v2921 = vld [vmem:[#allocation17 + $0x40] sm:$0xff]
          %v2922 = vld [vmem:[#allocation17 + $0x48] sm:$0xff]
          %v2923 = vld [vmem:[#allocation17 + $0x50] sm:$0xff]
          %v2924 = vld [vmem:[#allocation17 + $0x58] sm:$0xff]
          %v2925 = vld [vmem:[#allocation17 + $0x60] sm:$0xff]
          %v2926 = vld [vmem:[#allocation17 + $0x68] sm:$0xff]
          %v2927 = vld [vmem:[#allocation17 + $0x70] sm:$0xff]
          %v2928 = vld [vmem:[#allocation17 + $0x78] sm:$0xff]
          %v2929 = vld [vmem:[#allocation17 + $0x80] sm:$0xff]
          %v2930 = vld [vmem:[#allocation17 + $0x88] sm:$0xff]
          %v2931 = vld [vmem:[#allocation17 + $0x90] sm:$0xff]
          %v2932 = vld [vmem:[#allocation17 + $0x98] sm:$0xff]
          %v2933 = vld [vmem:[#allocation17 + $0xa0] sm:$0xff]
          %v2934 = vld [vmem:[#allocation17 + $0xa8] sm:$0xff]
          %v2935 = vld [vmem:[#allocation17 + $0xb0] sm:$0xff]
          %v2936 = vld [vmem:[#allocation17 + $0xb8] sm:$0xff]
          %v2937 = vld [vmem:[#allocation17 + $0xc0] sm:$0xff]
          %v2938 = vld [vmem:[#allocation17 + $0xc8] sm:$0xff]
          %v2939 = vld [vmem:[#allocation17 + $0xd0] sm:$0xff]
          %v2940 = vld [vmem:[#allocation17 + $0xd8] sm:$0xff]
          %v2941 = vld [vmem:[#allocation17 + $0xe0] sm:$0xff]
          %v2942 = vld [vmem:[#allocation17 + $0xe8] sm:$0xff]
          %v2943 = vld [vmem:[#allocation17 + $0xf0] sm:$0xff]
          %v2944 = vld [vmem:[#allocation17 + $0xf8] sm:$0xff]
          %v2945 = vld [vmem:[#allocation17 + $0x100] sm:$0xff]
          %v2946 = vld [vmem:[#allocation17 + $0x108] sm:$0xff]
          %v2947 = vld [vmem:[#allocation17 + $0x110] sm:$0xff]
          %v2948 = vld [vmem:[#allocation17 + $0x118] sm:$0xff]
          %v2949 = vld [vmem:[#allocation17 + $0x120] sm:$0xff]
          %v2950 = vld [vmem:[#allocation17 + $0x128] sm:$0xff]
          %v2951 = vld [vmem:[#allocation17 + $0x130] sm:$0xff]
          %v2952 = vld [vmem:[#allocation17 + $0x138] sm:$0xff]
          %v2953 = vld [vmem:[#allocation17 + $0x140] sm:$0xff]
          %v2954 = vld [vmem:[#allocation17 + $0x148] sm:$0xff]
          %v2955 = vld [vmem:[#allocation17 + $0x150] sm:$0xff]
          %v2956 = vld [vmem:[#allocation17 + $0x158] sm:$0xff]
          %v2957 = vld [vmem:[#allocation17 + $0x160] sm:$0xff]
          %v2958 = vld [vmem:[#allocation17 + $0x168] sm:$0xff]
          %v2959 = vld [vmem:[#allocation17 + $0x170] sm:$0xff]
          %v2960 = vld [vmem:[#allocation17 + $0x178] sm:$0xff]
          %v2961 = vld [vmem:[%s19] sm:$0x3f]
          %v2963 = vlaneseq
          %v2964 = vshrl.u32 %v2963, 7
          %v2965 = vsub.s32 0, %v2964
          %v2966 = vrot.slane %v2961, %v2965
          %v2967 = vlaneseq
          %v2968 = vshrl.u32 %v2967, 7
          %v2969 = vsub.s32 1, %v2968
          %v2970 = vrot.slane %v2961, %v2969
          %v2971 = vlaneseq
          %v2972 = vshrl.u32 %v2971, 7
          %v2973 = vsub.s32 2, %v2972
          %v2974 = vrot.slane %v2961, %v2973
          %v2975 = vlaneseq
          %v2976 = vshrl.u32 %v2975, 7
          %v2977 = vsub.s32 3, %v2976
          %v2978 = vrot.slane %v2961, %v2977
          %v2979 = vlaneseq
          %v2980 = vshrl.u32 %v2979, 7
          %v2981 = vsub.s32 4, %v2980
          %v2982 = vrot.slane %v2961, %v2981
          %v2983 = vlaneseq
          %v2984 = vshrl.u32 %v2983, 7
          %v2985 = vsub.s32 5, %v2984
          %v2986 = vrot.slane %v2961, %v2985
          %v3041 = vunpack.c.l.b16 %v2913
          %v3042 = vunpack.c.h.b16 %v2913
          %v3043 = vunpack.c.l.b16 %v2914
          %v3044 = vunpack.c.h.b16 %v2914
          %v3045 = vunpack.c.l.b16 %v2915
          %v3046 = vunpack.c.h.b16 %v2915
          %v3047 = vunpack.c.l.b16 %v2916
          %v3048 = vunpack.c.h.b16 %v2916
          %v3049 = vunpack.c.l.b16 %v2917
          %v3050 = vunpack.c.h.b16 %v2917
          %v3051 = vunpack.c.l.b16 %v2918
          %v3052 = vunpack.c.h.b16 %v2918
          %v3053 = vunpack.c.l.b16 %v2919
          %v3054 = vunpack.c.h.b16 %v2919
          %v3055 = vunpack.c.l.b16 %v2920
          %v3056 = vunpack.c.h.b16 %v2920
          %v3057 = vunpack.c.l.b16 %v2921
          %v3058 = vunpack.c.h.b16 %v2921
          %v3059 = vunpack.c.l.b16 %v2922
          %v3060 = vunpack.c.h.b16 %v2922
          %v3061 = vunpack.c.l.b16 %v2923
          %v3062 = vunpack.c.h.b16 %v2923
          %v3063 = vunpack.c.l.b16 %v2924
          %v3064 = vunpack.c.h.b16 %v2924
          %v3065 = vunpack.c.l.b16 %v2925
          %v3066 = vunpack.c.h.b16 %v2925
          %v3067 = vunpack.c.l.b16 %v2926
          %v3068 = vunpack.c.h.b16 %v2926
          %v3069 = vunpack.c.l.b16 %v2927
          %v3070 = vunpack.c.h.b16 %v2927
          %v3071 = vunpack.c.l.b16 %v2928
          %v3072 = vunpack.c.h.b16 %v2928
          %v3073 = vunpack.c.l.b16 %v2929
          %v3074 = vunpack.c.h.b16 %v2929
          %v3075 = vunpack.c.l.b16 %v2930
          %v3076 = vunpack.c.h.b16 %v2930
          %v3077 = vunpack.c.l.b16 %v2931
          %v3078 = vunpack.c.h.b16 %v2931
          %v3079 = vunpack.c.l.b16 %v2932
          %v3080 = vunpack.c.h.b16 %v2932
          %v3081 = vunpack.c.l.b16 %v2933
          %v3082 = vunpack.c.h.b16 %v2933
          %v3083 = vunpack.c.l.b16 %v2934
          %v3084 = vunpack.c.h.b16 %v2934
          %v3085 = vunpack.c.l.b16 %v2935
          %v3086 = vunpack.c.h.b16 %v2935
          %v3087 = vunpack.c.l.b16 %v2936
          %v3088 = vunpack.c.h.b16 %v2936
          %v3089 = vunpack.c.l.b16 %v2937
          %v3090 = vunpack.c.h.b16 %v2937
          %v3091 = vunpack.c.l.b16 %v2938
          %v3092 = vunpack.c.h.b16 %v2938
          %v3093 = vunpack.c.l.b16 %v2939
          %v3094 = vunpack.c.h.b16 %v2939
          %v3095 = vunpack.c.l.b16 %v2940
          %v3096 = vunpack.c.h.b16 %v2940
          %v3097 = vunpack.c.l.b16 %v2941
          %v3098 = vunpack.c.h.b16 %v2941
          %v3099 = vunpack.c.l.b16 %v2942
          %v3100 = vunpack.c.h.b16 %v2942
          %v3101 = vunpack.c.l.b16 %v2943
          %v3102 = vunpack.c.h.b16 %v2943
          %v3103 = vunpack.c.l.b16 %v2944
          %v3104 = vunpack.c.h.b16 %v2944
          %v3105 = vunpack.c.l.b16 %v2945
          %v3106 = vunpack.c.h.b16 %v2945
          %v3107 = vunpack.c.l.b16 %v2946
          %v3108 = vunpack.c.h.b16 %v2946
          %v3109 = vunpack.c.l.b16 %v2947
          %v3110 = vunpack.c.h.b16 %v2947
          %v3111 = vunpack.c.l.b16 %v2948
          %v3112 = vunpack.c.h.b16 %v2948
          %v3113 = vunpack.c.l.b16 %v2949
          %v3114 = vunpack.c.h.b16 %v2949
          %v3115 = vunpack.c.l.b16 %v2950
          %v3116 = vunpack.c.h.b16 %v2950
          %v3117 = vunpack.c.l.b16 %v2951
          %v3118 = vunpack.c.h.b16 %v2951
          %v3119 = vunpack.c.l.b16 %v2952
          %v3120 = vunpack.c.h.b16 %v2952
          %v3121 = vunpack.c.l.b16 %v2953
          %v3122 = vunpack.c.h.b16 %v2953
          %v3123 = vunpack.c.l.b16 %v2954
          %v3124 = vunpack.c.h.b16 %v2954
          %v3125 = vunpack.c.l.b16 %v2955
          %v3126 = vunpack.c.h.b16 %v2955
          %v3127 = vunpack.c.l.b16 %v2956
          %v3128 = vunpack.c.h.b16 %v2956
          %v3129 = vunpack.c.l.b16 %v2957
          %v3130 = vunpack.c.h.b16 %v2957
          %v3131 = vunpack.c.l.b16 %v2958
          %v3132 = vunpack.c.h.b16 %v2958
          %v3133 = vunpack.c.l.b16 %v2959
          %v3134 = vunpack.c.h.b16 %v2959
          %v3135 = vunpack.c.l.b16 %v2960
          %v3136 = vunpack.c.h.b16 %v2960
          %v3137 = vpack.c.b16 %v3047, %v3041
          %v3138 = vpack.c.b16 %v3048, %v3042
          %v3139 = vpack.c.b16 %v3049, %v3043
          %v3140 = vpack.c.b16 %v3050, %v3044
          %v3141 = vpack.c.b16 %v3051, %v3045
          %v3142 = vpack.c.b16 %v3052, %v3046
          %v3143 = vpack.c.b16 %v3059, %v3053
          %v3144 = vpack.c.b16 %v3060, %v3054
          %v3145 = vpack.c.b16 %v3061, %v3055
          %v3146 = vpack.c.b16 %v3062, %v3056
          %v3147 = vpack.c.b16 %v3063, %v3057
          %v3148 = vpack.c.b16 %v3064, %v3058
          %v3149 = vpack.c.b16 %v3071, %v3065
          %v3150 = vpack.c.b16 %v3072, %v3066
          %v3151 = vpack.c.b16 %v3073, %v3067
          %v3152 = vpack.c.b16 %v3074, %v3068
          %v3153 = vpack.c.b16 %v3075, %v3069
          %v3154 = vpack.c.b16 %v3076, %v3070
          %v3155 = vpack.c.b16 %v3083, %v3077
          %v3156 = vpack.c.b16 %v3084, %v3078
          %v3157 = vpack.c.b16 %v3085, %v3079
          %v3158 = vpack.c.b16 %v3086, %v3080
          %v3159 = vpack.c.b16 %v3087, %v3081
          %v3160 = vpack.c.b16 %v3088, %v3082
          %v3161 = vpack.c.b16 %v3095, %v3089
          %v3162 = vpack.c.b16 %v3096, %v3090
          %v3163 = vpack.c.b16 %v3097, %v3091
          %v3164 = vpack.c.b16 %v3098, %v3092
          %v3165 = vpack.c.b16 %v3099, %v3093
          %v3166 = vpack.c.b16 %v3100, %v3094
          %v3167 = vpack.c.b16 %v3107, %v3101
          %v3168 = vpack.c.b16 %v3108, %v3102
          %v3169 = vpack.c.b16 %v3109, %v3103
          %v3170 = vpack.c.b16 %v3110, %v3104
          %v3171 = vpack.c.b16 %v3111, %v3105
          %v3172 = vpack.c.b16 %v3112, %v3106
          %v3173 = vpack.c.b16 %v3119, %v3113
          %v3174 = vpack.c.b16 %v3120, %v3114
          %v3175 = vpack.c.b16 %v3121, %v3115
          %v3176 = vpack.c.b16 %v3122, %v3116
          %v3177 = vpack.c.b16 %v3123, %v3117
          %v3178 = vpack.c.b16 %v3124, %v3118
          %v3179 = vpack.c.b16 %v3131, %v3125
          %v3180 = vpack.c.b16 %v3132, %v3126
          %v3181 = vpack.c.b16 %v3133, %v3127
          %v3182 = vpack.c.b16 %v3134, %v3128
          %v3183 = vpack.c.b16 %v3135, %v3129
          %v3184 = vpack.c.b16 %v3136, %v3130
          %3233 = vmatprep.subr.bf16.mxu0 %v3180
          %3234 = vmatpush1.bf16.msra.mxu0 %v3179
          %3235 = vmatprep.subr.bf16.mxu0 %v3174
          %3236 = vmatpush1.bf16.msra.mxu0 %v3173
          %3237 = vmatprep.subr.bf16.mxu0 %v3168
          %3238 = vmatpush1.bf16.msra.mxu0 %v3167
          %3239 = vmatprep.subr.bf16.mxu0 %v3162
          %3240 = vmatpush1.bf16.msra.mxu0 %v3161
          %3241 = vmatprep.subr.bf16.mxu0 %v3156
          %3242 = vmatpush1.bf16.msra.mxu0 %v3155
          %3243 = vmatprep.subr.bf16.mxu0 %v3150
          %3244 = vmatpush1.bf16.msra.mxu0 %v3149
          %3245 = vmatprep.subr.bf16.mxu0 %v3144
          %3246 = vmatpush1.bf16.msra.mxu0 %v3143
          %3247 = vmatprep.subr.bf16.mxu0 %v3138
          %3248 = vmatpush1.bf16.msra.mxu0 %v3137
          %3249 = vmatprep.subr.bf16.mxu0 0
          %3250 = vmatpush2.bf16.msra.mxu0 0
          %3251 = vmatprep.subr.bf16.mxu0 0
          %3252 = vmatpush2.bf16.msra.mxu0 0
          %3253 = vmatprep.subr.bf16.mxu0 0
          %3254 = vmatpush2.bf16.msra.mxu0 0
          %3255 = vmatprep.subr.bf16.mxu0 0
          %3256 = vmatpush2.bf16.msra.mxu0 0
          %3257 = vmatprep.subr.bf16.mxu0 0
          %3258 = vmatpush2.bf16.msra.mxu0 0
          %3259 = vmatprep.subr.bf16.mxu0 0
          %3260 = vmatpush2.bf16.msra.mxu0 0
          %3261 = vmatprep.subr.bf16.mxu0 0
          %3262 = vmatpush2.bf16.msra.mxu0 0
          %3263 = vmatprep.subr.bf16.mxu0 0
          %3264 = vmatpush2.bf16.msra.mxu0 0
          %3265 = vmatprep.mubr.bf16.mxu0 0
          %3266 = vmatmul.mubr.bf16.gmra.mxu0 %v2912
          %v3267 = vpop.f32.mrf.mxu0
          %v3268 = vadd.f32 %v2966, %v3267
          %v3269 = vpop.f32.mrf.mxu0
          %v3270 = vadd.f32 %v2970, %v3269
          %v3271 = vpop.f32.mrf.mxu0
          %v3272 = vadd.f32 %v2966, %v3271
          %v3273 = vpop.f32.mrf.mxu0
          %v3274 = vadd.f32 %v2970, %v3273
          %3275 = vdwg.mxu0
          %3276 = vmatprep.subr.bf16.mxu0 %v3182
          %3277 = vmatpush1.bf16.msra.mxu0 %v3181
          %3278 = vmatprep.subr.bf16.mxu0 %v3176
          %3279 = vmatpush1.bf16.msra.mxu0 %v3175
          %3280 = vmatprep.subr.bf16.mxu0 %v3170
          %3281 = vmatpush1.bf16.msra.mxu0 %v3169
          %3282 = vmatprep.subr.bf16.mxu0 %v3164
          %3283 = vmatpush1.bf16.msra.mxu0 %v3163
          %3284 = vmatprep.subr.bf16.mxu0 %v3158
          %3285 = vmatpush1.bf16.msra.mxu0 %v3157
          %3286 = vmatprep.subr.bf16.mxu0 %v3152
          %3287 = vmatpush1.bf16.msra.mxu0 %v3151
          %3288 = vmatprep.subr.bf16.mxu0 %v3146
          %3289 = vmatpush1.bf16.msra.mxu0 %v3145
          %3290 = vmatprep.subr.bf16.mxu0 %v3140
          %3291 = vmatpush1.bf16.msra.mxu0 %v3139
          %3292 = vmatprep.subr.bf16.mxu0 0
          %3293 = vmatpush2.bf16.msra.mxu0 0
          %3294 = vmatprep.subr.bf16.mxu0 0
          %3295 = vmatpush2.bf16.msra.mxu0 0
          %3296 = vmatprep.subr.bf16.mxu0 0
          %3297 = vmatpush2.bf16.msra.mxu0 0
          %3298 = vmatprep.subr.bf16.mxu0 0
          %3299 = vmatpush2.bf16.msra.mxu0 0
          %3300 = vmatprep.subr.bf16.mxu0 0
          %3301 = vmatpush2.bf16.msra.mxu0 0
          %3302 = vmatprep.subr.bf16.mxu0 0
          %3303 = vmatpush2.bf16.msra.mxu0 0
          %3304 = vmatprep.subr.bf16.mxu0 0
          %3305 = vmatpush2.bf16.msra.mxu0 0
          %3306 = vmatprep.subr.bf16.mxu0 0
          %3307 = vmatpush2.bf16.msra.mxu0 0
          %3308 = vmatprep.mubr.bf16.mxu0 0
          %3309 = vmatmul.mubr.bf16.gmra.mxu0 %v2912
          %v3310 = vpop.f32.mrf.mxu0
          %v3311 = vadd.f32 %v2974, %v3310
          %v3312 = vpop.f32.mrf.mxu0
          %v3313 = vadd.f32 %v2978, %v3312
          %v3314 = vpop.f32.mrf.mxu0
          %v3315 = vadd.f32 %v2974, %v3314
          %v3316 = vpop.f32.mrf.mxu0
          %v3317 = vadd.f32 %v2978, %v3316
          %3318 = vdwg.mxu0
          %3319 = vmatprep.subr.bf16.mxu0 %v3184
          %3320 = vmatpush1.bf16.msra.mxu0 %v3183
          %3321 = vmatprep.subr.bf16.mxu0 %v3178
          %3322 = vmatpush1.bf16.msra.mxu0 %v3177
          %3323 = vmatprep.subr.bf16.mxu0 %v3172
          %3324 = vmatpush1.bf16.msra.mxu0 %v3171
          %3325 = vmatprep.subr.bf16.mxu0 %v3166
          %3326 = vmatpush1.bf16.msra.mxu0 %v3165
          %3327 = vmatprep.subr.bf16.mxu0 %v3160
          %3328 = vmatpush1.bf16.msra.mxu0 %v3159
          %3329 = vmatprep.subr.bf16.mxu0 %v3154
          %3330 = vmatpush1.bf16.msra.mxu0 %v3153
          %3331 = vmatprep.subr.bf16.mxu0 %v3148
          %3332 = vmatpush1.bf16.msra.mxu0 %v3147
          %3333 = vmatprep.subr.bf16.mxu0 %v3142
          %3334 = vmatpush1.bf16.msra.mxu0 %v3141
          %3335 = vmatprep.subr.bf16.mxu0 0
          %3336 = vmatpush2.bf16.msra.mxu0 0
          %3337 = vmatprep.subr.bf16.mxu0 0
          %3338 = vmatpush2.bf16.msra.mxu0 0
          %3339 = vmatprep.subr.bf16.mxu0 0
          %3340 = vmatpush2.bf16.msra.mxu0 0
          %3341 = vmatprep.subr.bf16.mxu0 0
          %3342 = vmatpush2.bf16.msra.mxu0 0
          %3343 = vmatprep.subr.bf16.mxu0 0
          %3344 = vmatpush2.bf16.msra.mxu0 0
          %3345 = vmatprep.subr.bf16.mxu0 0
          %3346 = vmatpush2.bf16.msra.mxu0 0
          %3347 = vmatprep.subr.bf16.mxu0 0
          %3348 = vmatpush2.bf16.msra.mxu0 0
          %3349 = vmatprep.subr.bf16.mxu0 0
          %3350 = vmatpush2.bf16.msra.mxu0 0
          %3351 = vmatprep.mubr.bf16.mxu0 0
          %3352 = vmatmul.mubr.bf16.gmra.mxu0 %v2912
          %v3353 = vpop.f32.mrf.mxu0
          %v3354 = vadd.f32 %v2982, %v3353
          %v3355 = vpop.f32.mrf.mxu0
          %v3356 = vadd.f32 %v2986, %v3355
          %v3357 = vpop.f32.mrf.mxu0
          %v3358 = vadd.f32 %v2982, %v3357
          %v3359 = vpop.f32.mrf.mxu0
          %v3360 = vadd.f32 %v2986, %v3359
          %3361 = vdwg.mxu0
          %v3362 = vpack.c.bf16 %v3272, %v3268
          %v3363 = vpack.c.bf16 %v3274, %v3270
          %v3364 = vpack.c.bf16 %v3315, %v3311
          %v3365 = vpack.c.bf16 %v3317, %v3313
          %v3366 = vpack.c.bf16 %v3358, %v3354
          %v3367 = vpack.c.bf16 %v3360, %v3356
          %v3368 = vld [vmem:[#allocation18] sm:$0xff]
          %v3369 = vld [vmem:[#allocation18 + $0x8] sm:$0xff]
          %v3370 = vld [vmem:[#allocation18 + $0x10] sm:$0xff]
          %v3371 = vld [vmem:[#allocation18 + $0x18] sm:$0xff]
          %v3372 = vld [vmem:[#allocation18 + $0x20] sm:$0xff]
          %v3373 = vld [vmem:[#allocation18 + $0x28] sm:$0xff]
          %v3374 = vld [vmem:[#allocation18 + $0x30] sm:$0xff]
          %v3375 = vld [vmem:[#allocation18 + $0x38] sm:$0xff]
          %v3376 = vld [vmem:[#allocation18 + $0x40] sm:$0xff]
          %v3377 = vld [vmem:[#allocation18 + $0x48] sm:$0xff]
          %v3378 = vld [vmem:[#allocation18 + $0x50] sm:$0xff]
          %v3379 = vld [vmem:[#allocation18 + $0x58] sm:$0xff]
          %v3380 = vld [vmem:[#allocation18 + $0x60] sm:$0xff]
          %v3381 = vld [vmem:[#allocation18 + $0x68] sm:$0xff]
          %v3382 = vld [vmem:[#allocation18 + $0x70] sm:$0xff]
          %v3383 = vld [vmem:[#allocation18 + $0x78] sm:$0xff]
          %v3384 = vld [vmem:[#allocation18 + $0x80] sm:$0xff]
          %v3385 = vld [vmem:[#allocation18 + $0x88] sm:$0xff]
          %v3386 = vld [vmem:[#allocation18 + $0x90] sm:$0xff]
          %v3387 = vld [vmem:[#allocation18 + $0x98] sm:$0xff]
          %v3388 = vld [vmem:[#allocation18 + $0xa0] sm:$0xff]
          %v3389 = vld [vmem:[#allocation18 + $0xa8] sm:$0xff]
          %v3390 = vld [vmem:[#allocation18 + $0xb0] sm:$0xff]
          %v3391 = vld [vmem:[#allocation18 + $0xb8] sm:$0xff]
          %v3392 = vld [vmem:[#allocation18 + $0xc0] sm:$0xff]
          %v3393 = vld [vmem:[#allocation18 + $0xc8] sm:$0xff]
          %v3394 = vld [vmem:[#allocation18 + $0xd0] sm:$0xff]
          %v3395 = vld [vmem:[#allocation18 + $0xd8] sm:$0xff]
          %v3396 = vld [vmem:[#allocation18 + $0xe0] sm:$0xff]
          %v3397 = vld [vmem:[#allocation18 + $0xe8] sm:$0xff]
          %v3398 = vld [vmem:[#allocation18 + $0xf0] sm:$0xff]
          %v3399 = vld [vmem:[#allocation18 + $0xf8] sm:$0xff]
          %v3400 = vld [vmem:[#allocation18 + $0x100] sm:$0xff]
          %v3401 = vld [vmem:[#allocation18 + $0x108] sm:$0xff]
          %v3402 = vld [vmem:[#allocation18 + $0x110] sm:$0xff]
          %v3403 = vld [vmem:[#allocation18 + $0x118] sm:$0xff]
          %v3404 = vld [vmem:[#allocation18 + $0x120] sm:$0xff]
          %v3405 = vld [vmem:[#allocation18 + $0x128] sm:$0xff]
          %v3406 = vld [vmem:[#allocation18 + $0x130] sm:$0xff]
          %v3407 = vld [vmem:[#allocation18 + $0x138] sm:$0xff]
          %v3408 = vld [vmem:[#allocation18 + $0x140] sm:$0xff]
          %v3409 = vld [vmem:[#allocation18 + $0x148] sm:$0xff]
          %v3410 = vld [vmem:[#allocation18 + $0x150] sm:$0xff]
          %v3411 = vld [vmem:[#allocation18 + $0x158] sm:$0xff]
          %v3412 = vld [vmem:[#allocation18 + $0x160] sm:$0xff]
          %v3413 = vld [vmem:[#allocation18 + $0x168] sm:$0xff]
          %v3414 = vld [vmem:[#allocation18 + $0x170] sm:$0xff]
          %v3415 = vld [vmem:[#allocation18 + $0x178] sm:$0xff]
          %v3416 = vld [vmem:[#allocation18 + $0x180] sm:$0xff]
          %v3417 = vld [vmem:[#allocation18 + $0x188] sm:$0xff]
          %v3418 = vld [vmem:[#allocation18 + $0x190] sm:$0xff]
          %v3419 = vld [vmem:[#allocation18 + $0x198] sm:$0xff]
          %v3420 = vld [vmem:[#allocation18 + $0x1a0] sm:$0xff]
          %v3421 = vld [vmem:[#allocation18 + $0x1a8] sm:$0xff]
          %v3422 = vld [vmem:[#allocation18 + $0x1b0] sm:$0xff]
          %v3423 = vld [vmem:[#allocation18 + $0x1b8] sm:$0xff]
          %v3424 = vld [vmem:[#allocation18 + $0x1c0] sm:$0xff]
          %v3425 = vld [vmem:[#allocation18 + $0x1c8] sm:$0xff]
          %v3426 = vld [vmem:[#allocation18 + $0x1d0] sm:$0xff]
          %v3427 = vld [vmem:[#allocation18 + $0x1d8] sm:$0xff]
          %v3428 = vld [vmem:[#allocation18 + $0x1e0] sm:$0xff]
          %v3429 = vld [vmem:[#allocation18 + $0x1e8] sm:$0xff]
          %v3430 = vld [vmem:[#allocation18 + $0x1f0] sm:$0xff]
          %v3431 = vld [vmem:[#allocation18 + $0x1f8] sm:$0xff]
          %v3432 = vld [vmem:[#allocation18 + $0x200] sm:$0xff]
          %v3433 = vld [vmem:[#allocation18 + $0x208] sm:$0xff]
          %v3434 = vld [vmem:[#allocation18 + $0x210] sm:$0xff]
          %v3435 = vld [vmem:[#allocation18 + $0x218] sm:$0xff]
          %v3436 = vld [vmem:[#allocation18 + $0x220] sm:$0xff]
          %v3437 = vld [vmem:[#allocation18 + $0x228] sm:$0xff]
          %v3438 = vld [vmem:[#allocation18 + $0x230] sm:$0xff]
          %v3439 = vld [vmem:[#allocation18 + $0x238] sm:$0xff]
          %v3440 = vld [vmem:[#allocation18 + $0x240] sm:$0xff]
          %v3441 = vld [vmem:[#allocation18 + $0x248] sm:$0xff]
          %v3442 = vld [vmem:[#allocation18 + $0x250] sm:$0xff]
          %v3443 = vld [vmem:[#allocation18 + $0x258] sm:$0xff]
          %v3444 = vld [vmem:[#allocation18 + $0x260] sm:$0xff]
          %v3445 = vld [vmem:[#allocation18 + $0x268] sm:$0xff]
          %v3446 = vld [vmem:[#allocation18 + $0x270] sm:$0xff]
          %v3447 = vld [vmem:[#allocation18 + $0x278] sm:$0xff]
          %v3448 = vld [vmem:[#allocation18 + $0x280] sm:$0xff]
          %v3449 = vld [vmem:[#allocation18 + $0x288] sm:$0xff]
          %v3450 = vld [vmem:[#allocation18 + $0x290] sm:$0xff]
          %v3451 = vld [vmem:[#allocation18 + $0x298] sm:$0xff]
          %v3452 = vld [vmem:[#allocation18 + $0x2a0] sm:$0xff]
          %v3453 = vld [vmem:[#allocation18 + $0x2a8] sm:$0xff]
          %v3454 = vld [vmem:[#allocation18 + $0x2b0] sm:$0xff]
          %v3455 = vld [vmem:[#allocation18 + $0x2b8] sm:$0xff]
          %v3456 = vld [vmem:[#allocation18 + $0x2c0] sm:$0xff]
          %v3457 = vld [vmem:[#allocation18 + $0x2c8] sm:$0xff]
          %v3458 = vld [vmem:[#allocation18 + $0x2d0] sm:$0xff]
          %v3459 = vld [vmem:[#allocation18 + $0x2d8] sm:$0xff]
          %v3460 = vld [vmem:[#allocation18 + $0x2e0] sm:$0xff]
          %v3461 = vld [vmem:[#allocation18 + $0x2e8] sm:$0xff]
          %v3462 = vld [vmem:[#allocation18 + $0x2f0] sm:$0xff]
          %v3463 = vld [vmem:[#allocation18 + $0x2f8] sm:$0xff]
          %v3464 = vld [vmem:[#allocation18 + $0x300] sm:$0xff]
          %v3465 = vld [vmem:[#allocation18 + $0x308] sm:$0xff]
          %v3466 = vld [vmem:[#allocation18 + $0x310] sm:$0xff]
          %v3467 = vld [vmem:[#allocation18 + $0x318] sm:$0xff]
          %v3468 = vld [vmem:[#allocation18 + $0x320] sm:$0xff]
          %v3469 = vld [vmem:[#allocation18 + $0x328] sm:$0xff]
          %v3470 = vld [vmem:[#allocation18 + $0x330] sm:$0xff]
          %v3471 = vld [vmem:[#allocation18 + $0x338] sm:$0xff]
          %v3472 = vld [vmem:[#allocation18 + $0x340] sm:$0xff]
          %v3473 = vld [vmem:[#allocation18 + $0x348] sm:$0xff]
          %v3474 = vld [vmem:[#allocation18 + $0x350] sm:$0xff]
          %v3475 = vld [vmem:[#allocation18 + $0x358] sm:$0xff]
          %v3476 = vld [vmem:[#allocation18 + $0x360] sm:$0xff]
          %v3477 = vld [vmem:[#allocation18 + $0x368] sm:$0xff]
          %v3478 = vld [vmem:[#allocation18 + $0x370] sm:$0xff]
          %v3479 = vld [vmem:[#allocation18 + $0x378] sm:$0xff]
          %v3480 = vld [vmem:[#allocation18 + $0x380] sm:$0xff]
          %v3481 = vld [vmem:[#allocation18 + $0x388] sm:$0xff]
          %v3482 = vld [vmem:[#allocation18 + $0x390] sm:$0xff]
          %v3483 = vld [vmem:[#allocation18 + $0x398] sm:$0xff]
          %v3484 = vld [vmem:[#allocation18 + $0x3a0] sm:$0xff]
          %v3485 = vld [vmem:[#allocation18 + $0x3a8] sm:$0xff]
          %v3486 = vld [vmem:[#allocation18 + $0x3b0] sm:$0xff]
          %v3487 = vld [vmem:[#allocation18 + $0x3b8] sm:$0xff]
          %v3488 = vld [vmem:[#allocation18 + $0x3c0] sm:$0xff]
          %v3489 = vld [vmem:[#allocation18 + $0x3c8] sm:$0xff]
          %v3490 = vld [vmem:[#allocation18 + $0x3d0] sm:$0xff]
          %v3491 = vld [vmem:[#allocation18 + $0x3d8] sm:$0xff]
          %v3492 = vld [vmem:[#allocation18 + $0x3e0] sm:$0xff]
          %v3493 = vld [vmem:[#allocation18 + $0x3e8] sm:$0xff]
          %v3494 = vld [vmem:[#allocation18 + $0x3f0] sm:$0xff]
          %v3495 = vld [vmem:[#allocation18 + $0x3f8] sm:$0xff]
          %v3496 = vld [vmem:[#allocation18 + $0x400] sm:$0xff]
          %v3497 = vld [vmem:[#allocation18 + $0x408] sm:$0xff]
          %v3498 = vld [vmem:[#allocation18 + $0x410] sm:$0xff]
          %v3499 = vld [vmem:[#allocation18 + $0x418] sm:$0xff]
          %v3500 = vld [vmem:[#allocation18 + $0x420] sm:$0xff]
          %v3501 = vld [vmem:[#allocation18 + $0x428] sm:$0xff]
          %v3502 = vld [vmem:[#allocation18 + $0x430] sm:$0xff]
          %v3503 = vld [vmem:[#allocation18 + $0x438] sm:$0xff]
          %v3504 = vld [vmem:[#allocation18 + $0x440] sm:$0xff]
          %v3505 = vld [vmem:[#allocation18 + $0x448] sm:$0xff]
          %v3506 = vld [vmem:[#allocation18 + $0x450] sm:$0xff]
          %v3507 = vld [vmem:[#allocation18 + $0x458] sm:$0xff]
          %v3508 = vld [vmem:[#allocation18 + $0x460] sm:$0xff]
          %v3509 = vld [vmem:[#allocation18 + $0x468] sm:$0xff]
          %v3510 = vld [vmem:[#allocation18 + $0x470] sm:$0xff]
          %v3511 = vld [vmem:[#allocation18 + $0x478] sm:$0xff]
          %v3512 = vld [vmem:[#allocation18 + $0x480] sm:$0xff]
          %v3513 = vld [vmem:[#allocation18 + $0x488] sm:$0xff]
          %v3514 = vld [vmem:[#allocation18 + $0x490] sm:$0xff]
          %v3515 = vld [vmem:[#allocation18 + $0x498] sm:$0xff]
          %v3516 = vld [vmem:[#allocation18 + $0x4a0] sm:$0xff]
          %v3517 = vld [vmem:[#allocation18 + $0x4a8] sm:$0xff]
          %v3518 = vld [vmem:[#allocation18 + $0x4b0] sm:$0xff]
          %v3519 = vld [vmem:[#allocation18 + $0x4b8] sm:$0xff]
          %v3520 = vld [vmem:[#allocation18 + $0x4c0] sm:$0xff]
          %v3521 = vld [vmem:[#allocation18 + $0x4c8] sm:$0xff]
          %v3522 = vld [vmem:[#allocation18 + $0x4d0] sm:$0xff]
          %v3523 = vld [vmem:[#allocation18 + $0x4d8] sm:$0xff]
          %v3524 = vld [vmem:[#allocation18 + $0x4e0] sm:$0xff]
          %v3525 = vld [vmem:[#allocation18 + $0x4e8] sm:$0xff]
          %v3526 = vld [vmem:[#allocation18 + $0x4f0] sm:$0xff]
          %v3527 = vld [vmem:[#allocation18 + $0x4f8] sm:$0xff]
          %v3528 = vld [vmem:[#allocation18 + $0x500] sm:$0xff]
          %v3529 = vld [vmem:[#allocation18 + $0x508] sm:$0xff]
          %v3530 = vld [vmem:[#allocation18 + $0x510] sm:$0xff]
          %v3531 = vld [vmem:[#allocation18 + $0x518] sm:$0xff]
          %v3532 = vld [vmem:[#allocation18 + $0x520] sm:$0xff]
          %v3533 = vld [vmem:[#allocation18 + $0x528] sm:$0xff]
          %v3534 = vld [vmem:[#allocation18 + $0x530] sm:$0xff]
          %v3535 = vld [vmem:[#allocation18 + $0x538] sm:$0xff]
          %v3536 = vld [vmem:[#allocation18 + $0x540] sm:$0xff]
          %v3537 = vld [vmem:[#allocation18 + $0x548] sm:$0xff]
          %v3538 = vld [vmem:[#allocation18 + $0x550] sm:$0xff]
          %v3539 = vld [vmem:[#allocation18 + $0x558] sm:$0xff]
          %v3540 = vld [vmem:[#allocation18 + $0x560] sm:$0xff]
          %v3541 = vld [vmem:[#allocation18 + $0x568] sm:$0xff]
          %v3542 = vld [vmem:[#allocation18 + $0x570] sm:$0xff]
          %v3543 = vld [vmem:[#allocation18 + $0x578] sm:$0xff]
          %v3544 = vld [vmem:[#allocation18 + $0x580] sm:$0xff]
          %v3545 = vld [vmem:[#allocation18 + $0x588] sm:$0xff]
          %v3546 = vld [vmem:[#allocation18 + $0x590] sm:$0xff]
          %v3547 = vld [vmem:[#allocation18 + $0x598] sm:$0xff]
          %v3548 = vld [vmem:[#allocation18 + $0x5a0] sm:$0xff]
          %v3549 = vld [vmem:[#allocation18 + $0x5a8] sm:$0xff]
          %v3550 = vld [vmem:[#allocation18 + $0x5b0] sm:$0xff]
          %v3551 = vld [vmem:[#allocation18 + $0x5b8] sm:$0xff]
          %v3552 = vld [vmem:[#allocation18 + $0x5c0] sm:$0xff]
          %v3553 = vld [vmem:[#allocation18 + $0x5c8] sm:$0xff]
          %v3554 = vld [vmem:[#allocation18 + $0x5d0] sm:$0xff]
          %v3555 = vld [vmem:[#allocation18 + $0x5d8] sm:$0xff]
          %v3556 = vld [vmem:[#allocation18 + $0x5e0] sm:$0xff]
          %v3557 = vld [vmem:[#allocation18 + $0x5e8] sm:$0xff]
          %v3558 = vld [vmem:[#allocation18 + $0x5f0] sm:$0xff]
          %v3559 = vld [vmem:[#allocation18 + $0x5f8] sm:$0xff]
          %v3560 = vld [vmem:[#allocation20] sm:$0xf]
          %v3562 = vlaneseq
          %v3563 = vshrl.u32 %v3562, 7
          %v3564 = vsub.s32 0, %v3563
          %v3565 = vrot.slane %v3560, %v3564
          %v3566 = vlaneseq
          %v3567 = vshrl.u32 %v3566, 7
          %v3568 = vsub.s32 1, %v3567
          %v3569 = vrot.slane %v3560, %v3568
          %v3570 = vlaneseq
          %v3571 = vshrl.u32 %v3570, 7
          %v3572 = vsub.s32 2, %v3571
          %v3573 = vrot.slane %v3560, %v3572
          %v3574 = vlaneseq
          %v3575 = vshrl.u32 %v3574, 7
          %v3576 = vsub.s32 3, %v3575
          %v3577 = vrot.slane %v3560, %v3576
          %v3774 = vunpack.c.l.b16 %v3368
          %v3775 = vunpack.c.h.b16 %v3368
          %v3776 = vunpack.c.l.b16 %v3369
          %v3777 = vunpack.c.h.b16 %v3369
          %v3778 = vunpack.c.l.b16 %v3370
          %v3779 = vunpack.c.h.b16 %v3370
          %v3780 = vunpack.c.l.b16 %v3371
          %v3781 = vunpack.c.h.b16 %v3371
          %v3782 = vunpack.c.l.b16 %v3372
          %v3783 = vunpack.c.h.b16 %v3372
          %v3784 = vunpack.c.l.b16 %v3373
          %v3785 = vunpack.c.h.b16 %v3373
          %v3786 = vunpack.c.l.b16 %v3374
          %v3787 = vunpack.c.h.b16 %v3374
          %v3788 = vunpack.c.l.b16 %v3375
          %v3789 = vunpack.c.h.b16 %v3375
          %v3790 = vunpack.c.l.b16 %v3376
          %v3791 = vunpack.c.h.b16 %v3376
          %v3792 = vunpack.c.l.b16 %v3377
          %v3793 = vunpack.c.h.b16 %v3377
          %v3794 = vunpack.c.l.b16 %v3378
          %v3795 = vunpack.c.h.b16 %v3378
          %v3796 = vunpack.c.l.b16 %v3379
          %v3797 = vunpack.c.h.b16 %v3379
          %v3798 = vunpack.c.l.b16 %v3380
          %v3799 = vunpack.c.h.b16 %v3380
          %v3800 = vunpack.c.l.b16 %v3381
          %v3801 = vunpack.c.h.b16 %v3381
          %v3802 = vunpack.c.l.b16 %v3382
          %v3803 = vunpack.c.h.b16 %v3382
          %v3804 = vunpack.c.l.b16 %v3383
          %v3805 = vunpack.c.h.b16 %v3383
          %v3806 = vunpack.c.l.b16 %v3384
          %v3807 = vunpack.c.h.b16 %v3384
          %v3808 = vunpack.c.l.b16 %v3385
          %v3809 = vunpack.c.h.b16 %v3385
          %v3810 = vunpack.c.l.b16 %v3386
          %v3811 = vunpack.c.h.b16 %v3386
          %v3812 = vunpack.c.l.b16 %v3387
          %v3813 = vunpack.c.h.b16 %v3387
          %v3814 = vunpack.c.l.b16 %v3388
          %v3815 = vunpack.c.h.b16 %v3388
          %v3816 = vunpack.c.l.b16 %v3389
          %v3817 = vunpack.c.h.b16 %v3389
          %v3818 = vunpack.c.l.b16 %v3390
          %v3819 = vunpack.c.h.b16 %v3390
          %v3820 = vunpack.c.l.b16 %v3391
          %v3821 = vunpack.c.h.b16 %v3391
          %v3822 = vunpack.c.l.b16 %v3392
          %v3823 = vunpack.c.h.b16 %v3392
          %v3824 = vunpack.c.l.b16 %v3393
          %v3825 = vunpack.c.h.b16 %v3393
          %v3826 = vunpack.c.l.b16 %v3394
          %v3827 = vunpack.c.h.b16 %v3394
          %v3828 = vunpack.c.l.b16 %v3395
          %v3829 = vunpack.c.h.b16 %v3395
          %v3830 = vunpack.c.l.b16 %v3396
          %v3831 = vunpack.c.h.b16 %v3396
          %v3832 = vunpack.c.l.b16 %v3397
          %v3833 = vunpack.c.h.b16 %v3397
          %v3834 = vunpack.c.l.b16 %v3398
          %v3835 = vunpack.c.h.b16 %v3398
          %v3836 = vunpack.c.l.b16 %v3399
          %v3837 = vunpack.c.h.b16 %v3399
          %v3838 = vunpack.c.l.b16 %v3400
          %v3839 = vunpack.c.h.b16 %v3400
          %v3840 = vunpack.c.l.b16 %v3401
          %v3841 = vunpack.c.h.b16 %v3401
          %v3842 = vunpack.c.l.b16 %v3402
          %v3843 = vunpack.c.h.b16 %v3402
          %v3844 = vunpack.c.l.b16 %v3403
          %v3845 = vunpack.c.h.b16 %v3403
          %v3846 = vunpack.c.l.b16 %v3404
          %v3847 = vunpack.c.h.b16 %v3404
          %v3848 = vunpack.c.l.b16 %v3405
          %v3849 = vunpack.c.h.b16 %v3405
          %v3850 = vunpack.c.l.b16 %v3406
          %v3851 = vunpack.c.h.b16 %v3406
          %v3852 = vunpack.c.l.b16 %v3407
          %v3853 = vunpack.c.h.b16 %v3407
          %v3854 = vunpack.c.l.b16 %v3408
          %v3855 = vunpack.c.h.b16 %v3408
          %v3856 = vunpack.c.l.b16 %v3409
          %v3857 = vunpack.c.h.b16 %v3409
          %v3858 = vunpack.c.l.b16 %v3410
          %v3859 = vunpack.c.h.b16 %v3410
          %v3860 = vunpack.c.l.b16 %v3411
          %v3861 = vunpack.c.h.b16 %v3411
          %v3862 = vunpack.c.l.b16 %v3412
          %v3863 = vunpack.c.h.b16 %v3412
          %v3864 = vunpack.c.l.b16 %v3413
          %v3865 = vunpack.c.h.b16 %v3413
          %v3866 = vunpack.c.l.b16 %v3414
          %v3867 = vunpack.c.h.b16 %v3414
          %v3868 = vunpack.c.l.b16 %v3415
          %v3869 = vunpack.c.h.b16 %v3415
          %v3870 = vunpack.c.l.b16 %v3416
          %v3871 = vunpack.c.h.b16 %v3416
          %v3872 = vunpack.c.l.b16 %v3417
          %v3873 = vunpack.c.h.b16 %v3417
          %v3874 = vunpack.c.l.b16 %v3418
          %v3875 = vunpack.c.h.b16 %v3418
          %v3876 = vunpack.c.l.b16 %v3419
          %v3877 = vunpack.c.h.b16 %v3419
          %v3878 = vunpack.c.l.b16 %v3420
          %v3879 = vunpack.c.h.b16 %v3420
          %v3880 = vunpack.c.l.b16 %v3421
          %v3881 = vunpack.c.h.b16 %v3421
          %v3882 = vunpack.c.l.b16 %v3422
          %v3883 = vunpack.c.h.b16 %v3422
          %v3884 = vunpack.c.l.b16 %v3423
          %v3885 = vunpack.c.h.b16 %v3423
          %v3886 = vunpack.c.l.b16 %v3424
          %v3887 = vunpack.c.h.b16 %v3424
          %v3888 = vunpack.c.l.b16 %v3425
          %v3889 = vunpack.c.h.b16 %v3425
          %v3890 = vunpack.c.l.b16 %v3426
          %v3891 = vunpack.c.h.b16 %v3426
          %v3892 = vunpack.c.l.b16 %v3427
          %v3893 = vunpack.c.h.b16 %v3427
          %v3894 = vunpack.c.l.b16 %v3428
          %v3895 = vunpack.c.h.b16 %v3428
          %v3896 = vunpack.c.l.b16 %v3429
          %v3897 = vunpack.c.h.b16 %v3429
          %v3898 = vunpack.c.l.b16 %v3430
          %v3899 = vunpack.c.h.b16 %v3430
          %v3900 = vunpack.c.l.b16 %v3431
          %v3901 = vunpack.c.h.b16 %v3431
          %v3902 = vunpack.c.l.b16 %v3432
          %v3903 = vunpack.c.h.b16 %v3432
          %v3904 = vunpack.c.l.b16 %v3433
          %v3905 = vunpack.c.h.b16 %v3433
          %v3906 = vunpack.c.l.b16 %v3434
          %v3907 = vunpack.c.h.b16 %v3434
          %v3908 = vunpack.c.l.b16 %v3435
          %v3909 = vunpack.c.h.b16 %v3435
          %v3910 = vunpack.c.l.b16 %v3436
          %v3911 = vunpack.c.h.b16 %v3436
          %v3912 = vunpack.c.l.b16 %v3437
          %v3913 = vunpack.c.h.b16 %v3437
          %v3914 = vunpack.c.l.b16 %v3438
          %v3915 = vunpack.c.h.b16 %v3438
          %v3916 = vunpack.c.l.b16 %v3439
          %v3917 = vunpack.c.h.b16 %v3439
          %v3918 = vunpack.c.l.b16 %v3440
          %v3919 = vunpack.c.h.b16 %v3440
          %v3920 = vunpack.c.l.b16 %v3441
          %v3921 = vunpack.c.h.b16 %v3441
          %v3922 = vunpack.c.l.b16 %v3442
          %v3923 = vunpack.c.h.b16 %v3442
          %v3924 = vunpack.c.l.b16 %v3443
          %v3925 = vunpack.c.h.b16 %v3443
          %v3926 = vunpack.c.l.b16 %v3444
          %v3927 = vunpack.c.h.b16 %v3444
          %v3928 = vunpack.c.l.b16 %v3445
          %v3929 = vunpack.c.h.b16 %v3445
          %v3930 = vunpack.c.l.b16 %v3446
          %v3931 = vunpack.c.h.b16 %v3446
          %v3932 = vunpack.c.l.b16 %v3447
          %v3933 = vunpack.c.h.b16 %v3447
          %v3934 = vunpack.c.l.b16 %v3448
          %v3935 = vunpack.c.h.b16 %v3448
          %v3936 = vunpack.c.l.b16 %v3449
          %v3937 = vunpack.c.h.b16 %v3449
          %v3938 = vunpack.c.l.b16 %v3450
          %v3939 = vunpack.c.h.b16 %v3450
          %v3940 = vunpack.c.l.b16 %v3451
          %v3941 = vunpack.c.h.b16 %v3451
          %v3942 = vunpack.c.l.b16 %v3452
          %v3943 = vunpack.c.h.b16 %v3452
          %v3944 = vunpack.c.l.b16 %v3453
          %v3945 = vunpack.c.h.b16 %v3453
          %v3946 = vunpack.c.l.b16 %v3454
          %v3947 = vunpack.c.h.b16 %v3454
          %v3948 = vunpack.c.l.b16 %v3455
          %v3949 = vunpack.c.h.b16 %v3455
          %v3950 = vunpack.c.l.b16 %v3456
          %v3951 = vunpack.c.h.b16 %v3456
          %v3952 = vunpack.c.l.b16 %v3457
          %v3953 = vunpack.c.h.b16 %v3457
          %v3954 = vunpack.c.l.b16 %v3458
          %v3955 = vunpack.c.h.b16 %v3458
          %v3956 = vunpack.c.l.b16 %v3459
          %v3957 = vunpack.c.h.b16 %v3459
          %v3958 = vunpack.c.l.b16 %v3460
          %v3959 = vunpack.c.h.b16 %v3460
          %v3960 = vunpack.c.l.b16 %v3461
          %v3961 = vunpack.c.h.b16 %v3461
          %v3962 = vunpack.c.l.b16 %v3462
          %v3963 = vunpack.c.h.b16 %v3462
          %v3964 = vunpack.c.l.b16 %v3463
          %v3965 = vunpack.c.h.b16 %v3463
          %v3966 = vunpack.c.l.b16 %v3464
          %v3967 = vunpack.c.h.b16 %v3464
          %v3968 = vunpack.c.l.b16 %v3465
          %v3969 = vunpack.c.h.b16 %v3465
          %v3970 = vunpack.c.l.b16 %v3466
          %v3971 = vunpack.c.h.b16 %v3466
          %v3972 = vunpack.c.l.b16 %v3467
          %v3973 = vunpack.c.h.b16 %v3467
          %v3974 = vunpack.c.l.b16 %v3468
          %v3975 = vunpack.c.h.b16 %v3468
          %v3976 = vunpack.c.l.b16 %v3469
          %v3977 = vunpack.c.h.b16 %v3469
          %v3978 = vunpack.c.l.b16 %v3470
          %v3979 = vunpack.c.h.b16 %v3470
          %v3980 = vunpack.c.l.b16 %v3471
          %v3981 = vunpack.c.h.b16 %v3471
          %v3982 = vunpack.c.l.b16 %v3472
          %v3983 = vunpack.c.h.b16 %v3472
          %v3984 = vunpack.c.l.b16 %v3473
          %v3985 = vunpack.c.h.b16 %v3473
          %v3986 = vunpack.c.l.b16 %v3474
          %v3987 = vunpack.c.h.b16 %v3474
          %v3988 = vunpack.c.l.b16 %v3475
          %v3989 = vunpack.c.h.b16 %v3475
          %v3990 = vunpack.c.l.b16 %v3476
          %v3991 = vunpack.c.h.b16 %v3476
          %v3992 = vunpack.c.l.b16 %v3477
          %v3993 = vunpack.c.h.b16 %v3477
          %v3994 = vunpack.c.l.b16 %v3478
          %v3995 = vunpack.c.h.b16 %v3478
          %v3996 = vunpack.c.l.b16 %v3479
          %v3997 = vunpack.c.h.b16 %v3479
          %v3998 = vunpack.c.l.b16 %v3480
          %v3999 = vunpack.c.h.b16 %v3480
          %v4000 = vunpack.c.l.b16 %v3481
          %v4001 = vunpack.c.h.b16 %v3481
          %v4002 = vunpack.c.l.b16 %v3482
          %v4003 = vunpack.c.h.b16 %v3482
          %v4004 = vunpack.c.l.b16 %v3483
          %v4005 = vunpack.c.h.b16 %v3483
          %v4006 = vunpack.c.l.b16 %v3484
          %v4007 = vunpack.c.h.b16 %v3484
          %v4008 = vunpack.c.l.b16 %v3485
          %v4009 = vunpack.c.h.b16 %v3485
          %v4010 = vunpack.c.l.b16 %v3486
          %v4011 = vunpack.c.h.b16 %v3486
          %v4012 = vunpack.c.l.b16 %v3487
          %v4013 = vunpack.c.h.b16 %v3487
          %v4014 = vunpack.c.l.b16 %v3488
          %v4015 = vunpack.c.h.b16 %v3488
          %v4016 = vunpack.c.l.b16 %v3489
          %v4017 = vunpack.c.h.b16 %v3489
          %v4018 = vunpack.c.l.b16 %v3490
          %v4019 = vunpack.c.h.b16 %v3490
          %v4020 = vunpack.c.l.b16 %v3491
          %v4021 = vunpack.c.h.b16 %v3491
          %v4022 = vunpack.c.l.b16 %v3492
          %v4023 = vunpack.c.h.b16 %v3492
          %v4024 = vunpack.c.l.b16 %v3493
          %v4025 = vunpack.c.h.b16 %v3493
          %v4026 = vunpack.c.l.b16 %v3494
          %v4027 = vunpack.c.h.b16 %v3494
          %v4028 = vunpack.c.l.b16 %v3495
          %v4029 = vunpack.c.h.b16 %v3495
          %v4030 = vunpack.c.l.b16 %v3496
          %v4031 = vunpack.c.h.b16 %v3496
          %v4032 = vunpack.c.l.b16 %v3497
          %v4033 = vunpack.c.h.b16 %v3497
          %v4034 = vunpack.c.l.b16 %v3498
          %v4035 = vunpack.c.h.b16 %v3498
          %v4036 = vunpack.c.l.b16 %v3499
          %v4037 = vunpack.c.h.b16 %v3499
          %v4038 = vunpack.c.l.b16 %v3500
          %v4039 = vunpack.c.h.b16 %v3500
          %v4040 = vunpack.c.l.b16 %v3501
          %v4041 = vunpack.c.h.b16 %v3501
          %v4042 = vunpack.c.l.b16 %v3502
          %v4043 = vunpack.c.h.b16 %v3502
          %v4044 = vunpack.c.l.b16 %v3503
          %v4045 = vunpack.c.h.b16 %v3503
          %v4046 = vunpack.c.l.b16 %v3504
          %v4047 = vunpack.c.h.b16 %v3504
          %v4048 = vunpack.c.l.b16 %v3505
          %v4049 = vunpack.c.h.b16 %v3505
          %v4050 = vunpack.c.l.b16 %v3506
          %v4051 = vunpack.c.h.b16 %v3506
          %v4052 = vunpack.c.l.b16 %v3507
          %v4053 = vunpack.c.h.b16 %v3507
          %v4054 = vunpack.c.l.b16 %v3508
          %v4055 = vunpack.c.h.b16 %v3508
          %v4056 = vunpack.c.l.b16 %v3509
          %v4057 = vunpack.c.h.b16 %v3509
          %v4058 = vunpack.c.l.b16 %v3510
          %v4059 = vunpack.c.h.b16 %v3510
          %v4060 = vunpack.c.l.b16 %v3511
          %v4061 = vunpack.c.h.b16 %v3511
          %v4062 = vunpack.c.l.b16 %v3512
          %v4063 = vunpack.c.h.b16 %v3512
          %v4064 = vunpack.c.l.b16 %v3513
          %v4065 = vunpack.c.h.b16 %v3513
          %v4066 = vunpack.c.l.b16 %v3514
          %v4067 = vunpack.c.h.b16 %v3514
          %v4068 = vunpack.c.l.b16 %v3515
          %v4069 = vunpack.c.h.b16 %v3515
          %v4070 = vunpack.c.l.b16 %v3516
          %v4071 = vunpack.c.h.b16 %v3516
          %v4072 = vunpack.c.l.b16 %v3517
          %v4073 = vunpack.c.h.b16 %v3517
          %v4074 = vunpack.c.l.b16 %v3518
          %v4075 = vunpack.c.h.b16 %v3518
          %v4076 = vunpack.c.l.b16 %v3519
          %v4077 = vunpack.c.h.b16 %v3519
          %v4078 = vunpack.c.l.b16 %v3520
          %v4079 = vunpack.c.h.b16 %v3520
          %v4080 = vunpack.c.l.b16 %v3521
          %v4081 = vunpack.c.h.b16 %v3521
          %v4082 = vunpack.c.l.b16 %v3522
          %v4083 = vunpack.c.h.b16 %v3522
          %v4084 = vunpack.c.l.b16 %v3523
          %v4085 = vunpack.c.h.b16 %v3523
          %v4086 = vunpack.c.l.b16 %v3524
          %v4087 = vunpack.c.h.b16 %v3524
          %v4088 = vunpack.c.l.b16 %v3525
          %v4089 = vunpack.c.h.b16 %v3525
          %v4090 = vunpack.c.l.b16 %v3526
          %v4091 = vunpack.c.h.b16 %v3526
          %v4092 = vunpack.c.l.b16 %v3527
          %v4093 = vunpack.c.h.b16 %v3527
          %v4094 = vunpack.c.l.b16 %v3528
          %v4095 = vunpack.c.h.b16 %v3528
          %v4096 = vunpack.c.l.b16 %v3529
          %v4097 = vunpack.c.h.b16 %v3529
          %v4098 = vunpack.c.l.b16 %v3530
          %v4099 = vunpack.c.h.b16 %v3530
          %v4100 = vunpack.c.l.b16 %v3531
          %v4101 = vunpack.c.h.b16 %v3531
          %v4102 = vunpack.c.l.b16 %v3532
          %v4103 = vunpack.c.h.b16 %v3532
          %v4104 = vunpack.c.l.b16 %v3533
          %v4105 = vunpack.c.h.b16 %v3533
          %v4106 = vunpack.c.l.b16 %v3534
          %v4107 = vunpack.c.h.b16 %v3534
          %v4108 = vunpack.c.l.b16 %v3535
          %v4109 = vunpack.c.h.b16 %v3535
          %v4110 = vunpack.c.l.b16 %v3536
          %v4111 = vunpack.c.h.b16 %v3536
          %v4112 = vunpack.c.l.b16 %v3537
          %v4113 = vunpack.c.h.b16 %v3537
          %v4114 = vunpack.c.l.b16 %v3538
          %v4115 = vunpack.c.h.b16 %v3538
          %v4116 = vunpack.c.l.b16 %v3539
          %v4117 = vunpack.c.h.b16 %v3539
          %v4118 = vunpack.c.l.b16 %v3540
          %v4119 = vunpack.c.h.b16 %v3540
          %v4120 = vunpack.c.l.b16 %v3541
          %v4121 = vunpack.c.h.b16 %v3541
          %v4122 = vunpack.c.l.b16 %v3542
          %v4123 = vunpack.c.h.b16 %v3542
          %v4124 = vunpack.c.l.b16 %v3543
          %v4125 = vunpack.c.h.b16 %v3543
          %v4126 = vunpack.c.l.b16 %v3544
          %v4127 = vunpack.c.h.b16 %v3544
          %v4128 = vunpack.c.l.b16 %v3545
          %v4129 = vunpack.c.h.b16 %v3545
          %v4130 = vunpack.c.l.b16 %v3546
          %v4131 = vunpack.c.h.b16 %v3546
          %v4132 = vunpack.c.l.b16 %v3547
          %v4133 = vunpack.c.h.b16 %v3547
          %v4134 = vunpack.c.l.b16 %v3548
          %v4135 = vunpack.c.h.b16 %v3548
          %v4136 = vunpack.c.l.b16 %v3549
          %v4137 = vunpack.c.h.b16 %v3549
          %v4138 = vunpack.c.l.b16 %v3550
          %v4139 = vunpack.c.h.b16 %v3550
          %v4140 = vunpack.c.l.b16 %v3551
          %v4141 = vunpack.c.h.b16 %v3551
          %v4142 = vunpack.c.l.b16 %v3552
          %v4143 = vunpack.c.h.b16 %v3552
          %v4144 = vunpack.c.l.b16 %v3553
          %v4145 = vunpack.c.h.b16 %v3553
          %v4146 = vunpack.c.l.b16 %v3554
          %v4147 = vunpack.c.h.b16 %v3554
          %v4148 = vunpack.c.l.b16 %v3555
          %v4149 = vunpack.c.h.b16 %v3555
          %v4150 = vunpack.c.l.b16 %v3556
          %v4151 = vunpack.c.h.b16 %v3556
          %v4152 = vunpack.c.l.b16 %v3557
          %v4153 = vunpack.c.h.b16 %v3557
          %v4154 = vunpack.c.l.b16 %v3558
          %v4155 = vunpack.c.h.b16 %v3558
          %v4156 = vunpack.c.l.b16 %v3559
          %v4157 = vunpack.c.h.b16 %v3559
          %v4158 = vpack.c.b16 %v3778, %v3774
          %v4159 = vpack.c.b16 %v3779, %v3775
          %v4160 = vpack.c.b16 %v3780, %v3776
          %v4161 = vpack.c.b16 %v3781, %v3777
          %v4162 = vpack.c.b16 %v3786, %v3782
          %v4163 = vpack.c.b16 %v3787, %v3783
          %v4164 = vpack.c.b16 %v3788, %v3784
          %v4165 = vpack.c.b16 %v3789, %v3785
          %v4166 = vpack.c.b16 %v3794, %v3790
          %v4167 = vpack.c.b16 %v3795, %v3791
          %v4168 = vpack.c.b16 %v3796, %v3792
          %v4169 = vpack.c.b16 %v3797, %v3793
          %v4170 = vpack.c.b16 %v3802, %v3798
          %v4171 = vpack.c.b16 %v3803, %v3799
          %v4172 = vpack.c.b16 %v3804, %v3800
          %v4173 = vpack.c.b16 %v3805, %v3801
          %v4174 = vpack.c.b16 %v3810, %v3806
          %v4175 = vpack.c.b16 %v3811, %v3807
          %v4176 = vpack.c.b16 %v3812, %v3808
          %v4177 = vpack.c.b16 %v3813, %v3809
          %v4178 = vpack.c.b16 %v3818, %v3814
          %v4179 = vpack.c.b16 %v3819, %v3815
          %v4180 = vpack.c.b16 %v3820, %v3816
          %v4181 = vpack.c.b16 %v3821, %v3817
          %v4182 = vpack.c.b16 %v3826, %v3822
          %v4183 = vpack.c.b16 %v3827, %v3823
          %v4184 = vpack.c.b16 %v3828, %v3824
          %v4185 = vpack.c.b16 %v3829, %v3825
          %v4186 = vpack.c.b16 %v3834, %v3830
          %v4187 = vpack.c.b16 %v3835, %v3831
          %v4188 = vpack.c.b16 %v3836, %v3832
          %v4189 = vpack.c.b16 %v3837, %v3833
          %v4190 = vpack.c.b16 %v3842, %v3838
          %v4191 = vpack.c.b16 %v3843, %v3839
          %v4192 = vpack.c.b16 %v3844, %v3840
          %v4193 = vpack.c.b16 %v3845, %v3841
          %v4194 = vpack.c.b16 %v3850, %v3846
          %v4195 = vpack.c.b16 %v3851, %v3847
          %v4196 = vpack.c.b16 %v3852, %v3848
          %v4197 = vpack.c.b16 %v3853, %v3849
          %v4198 = vpack.c.b16 %v3858, %v3854
          %v4199 = vpack.c.b16 %v3859, %v3855
          %v4200 = vpack.c.b16 %v3860, %v3856
          %v4201 = vpack.c.b16 %v3861, %v3857
          %v4202 = vpack.c.b16 %v3866, %v3862
          %v4203 = vpack.c.b16 %v3867, %v3863
          %v4204 = vpack.c.b16 %v3868, %v3864
          %v4205 = vpack.c.b16 %v3869, %v3865
          %v4206 = vpack.c.b16 %v3874, %v3870
          %v4207 = vpack.c.b16 %v3875, %v3871
          %v4208 = vpack.c.b16 %v3876, %v3872
          %v4209 = vpack.c.b16 %v3877, %v3873
          %v4210 = vpack.c.b16 %v3882, %v3878
          %v4211 = vpack.c.b16 %v3883, %v3879
          %v4212 = vpack.c.b16 %v3884, %v3880
          %v4213 = vpack.c.b16 %v3885, %v3881
          %v4214 = vpack.c.b16 %v3890, %v3886
          %v4215 = vpack.c.b16 %v3891, %v3887
          %v4216 = vpack.c.b16 %v3892, %v3888
          %v4217 = vpack.c.b16 %v3893, %v3889
          %v4218 = vpack.c.b16 %v3898, %v3894
          %v4219 = vpack.c.b16 %v3899, %v3895
          %v4220 = vpack.c.b16 %v3900, %v3896
          %v4221 = vpack.c.b16 %v3901, %v3897
          %v4222 = vpack.c.b16 %v3906, %v3902
          %v4223 = vpack.c.b16 %v3907, %v3903
          %v4224 = vpack.c.b16 %v3908, %v3904
          %v4225 = vpack.c.b16 %v3909, %v3905
          %v4226 = vpack.c.b16 %v3914, %v3910
          %v4227 = vpack.c.b16 %v3915, %v3911
          %v4228 = vpack.c.b16 %v3916, %v3912
          %v4229 = vpack.c.b16 %v3917, %v3913
          %v4230 = vpack.c.b16 %v3922, %v3918
          %v4231 = vpack.c.b16 %v3923, %v3919
          %v4232 = vpack.c.b16 %v3924, %v3920
          %v4233 = vpack.c.b16 %v3925, %v3921
          %v4234 = vpack.c.b16 %v3930, %v3926
          %v4235 = vpack.c.b16 %v3931, %v3927
          %v4236 = vpack.c.b16 %v3932, %v3928
          %v4237 = vpack.c.b16 %v3933, %v3929
          %v4238 = vpack.c.b16 %v3938, %v3934
          %v4239 = vpack.c.b16 %v3939, %v3935
          %v4240 = vpack.c.b16 %v3940, %v3936
          %v4241 = vpack.c.b16 %v3941, %v3937
          %v4242 = vpack.c.b16 %v3946, %v3942
          %v4243 = vpack.c.b16 %v3947, %v3943
          %v4244 = vpack.c.b16 %v3948, %v3944
          %v4245 = vpack.c.b16 %v3949, %v3945
          %v4246 = vpack.c.b16 %v3954, %v3950
          %v4247 = vpack.c.b16 %v3955, %v3951
          %v4248 = vpack.c.b16 %v3956, %v3952
          %v4249 = vpack.c.b16 %v3957, %v3953
          %v4250 = vpack.c.b16 %v3962, %v3958
          %v4251 = vpack.c.b16 %v3963, %v3959
          %v4252 = vpack.c.b16 %v3964, %v3960
          %v4253 = vpack.c.b16 %v3965, %v3961
          %v4254 = vpack.c.b16 %v3970, %v3966
          %v4255 = vpack.c.b16 %v3971, %v3967
          %v4256 = vpack.c.b16 %v3972, %v3968
          %v4257 = vpack.c.b16 %v3973, %v3969
          %v4258 = vpack.c.b16 %v3978, %v3974
          %v4259 = vpack.c.b16 %v3979, %v3975
          %v4260 = vpack.c.b16 %v3980, %v3976
          %v4261 = vpack.c.b16 %v3981, %v3977
          %v4262 = vpack.c.b16 %v3986, %v3982
          %v4263 = vpack.c.b16 %v3987, %v3983
          %v4264 = vpack.c.b16 %v3988, %v3984
          %v4265 = vpack.c.b16 %v3989, %v3985
          %v4266 = vpack.c.b16 %v3994, %v3990
          %v4267 = vpack.c.b16 %v3995, %v3991
          %v4268 = vpack.c.b16 %v3996, %v3992
          %v4269 = vpack.c.b16 %v3997, %v3993
          %v4270 = vpack.c.b16 %v4002, %v3998
          %v4271 = vpack.c.b16 %v4003, %v3999
          %v4272 = vpack.c.b16 %v4004, %v4000
          %v4273 = vpack.c.b16 %v4005, %v4001
          %v4274 = vpack.c.b16 %v4010, %v4006
          %v4275 = vpack.c.b16 %v4011, %v4007
          %v4276 = vpack.c.b16 %v4012, %v4008
          %v4277 = vpack.c.b16 %v4013, %v4009
          %v4278 = vpack.c.b16 %v4018, %v4014
          %v4279 = vpack.c.b16 %v4019, %v4015
          %v4280 = vpack.c.b16 %v4020, %v4016
          %v4281 = vpack.c.b16 %v4021, %v4017
          %v4282 = vpack.c.b16 %v4026, %v4022
          %v4283 = vpack.c.b16 %v4027, %v4023
          %v4284 = vpack.c.b16 %v4028, %v4024
          %v4285 = vpack.c.b16 %v4029, %v4025
          %v4286 = vpack.c.b16 %v4034, %v4030
          %v4287 = vpack.c.b16 %v4035, %v4031
          %v4288 = vpack.c.b16 %v4036, %v4032
          %v4289 = vpack.c.b16 %v4037, %v4033
          %v4290 = vpack.c.b16 %v4042, %v4038
          %v4291 = vpack.c.b16 %v4043, %v4039
          %v4292 = vpack.c.b16 %v4044, %v4040
          %v4293 = vpack.c.b16 %v4045, %v4041
          %v4294 = vpack.c.b16 %v4050, %v4046
          %v4295 = vpack.c.b16 %v4051, %v4047
          %v4296 = vpack.c.b16 %v4052, %v4048
          %v4297 = vpack.c.b16 %v4053, %v4049
          %v4298 = vpack.c.b16 %v4058, %v4054
          %v4299 = vpack.c.b16 %v4059, %v4055
          %v4300 = vpack.c.b16 %v4060, %v4056
          %v4301 = vpack.c.b16 %v4061, %v4057
          %v4302 = vpack.c.b16 %v4066, %v4062
          %v4303 = vpack.c.b16 %v4067, %v4063
          %v4304 = vpack.c.b16 %v4068, %v4064
          %v4305 = vpack.c.b16 %v4069, %v4065
          %v4306 = vpack.c.b16 %v4074, %v4070
          %v4307 = vpack.c.b16 %v4075, %v4071
          %v4308 = vpack.c.b16 %v4076, %v4072
          %v4309 = vpack.c.b16 %v4077, %v4073
          %v4310 = vpack.c.b16 %v4082, %v4078
          %v4311 = vpack.c.b16 %v4083, %v4079
          %v4312 = vpack.c.b16 %v4084, %v4080
          %v4313 = vpack.c.b16 %v4085, %v4081
          %v4314 = vpack.c.b16 %v4090, %v4086
          %v4315 = vpack.c.b16 %v4091, %v4087
          %v4316 = vpack.c.b16 %v4092, %v4088
          %v4317 = vpack.c.b16 %v4093, %v4089
          %v4318 = vpack.c.b16 %v4098, %v4094
          %v4319 = vpack.c.b16 %v4099, %v4095
          %v4320 = vpack.c.b16 %v4100, %v4096
          %v4321 = vpack.c.b16 %v4101, %v4097
          %v4322 = vpack.c.b16 %v4106, %v4102
          %v4323 = vpack.c.b16 %v4107, %v4103
          %v4324 = vpack.c.b16 %v4108, %v4104
          %v4325 = vpack.c.b16 %v4109, %v4105
          %v4326 = vpack.c.b16 %v4114, %v4110
          %v4327 = vpack.c.b16 %v4115, %v4111
          %v4328 = vpack.c.b16 %v4116, %v4112
          %v4329 = vpack.c.b16 %v4117, %v4113
          %v4330 = vpack.c.b16 %v4122, %v4118
          %v4331 = vpack.c.b16 %v4123, %v4119
          %v4332 = vpack.c.b16 %v4124, %v4120
          %v4333 = vpack.c.b16 %v4125, %v4121
          %v4334 = vpack.c.b16 %v4130, %v4126
          %v4335 = vpack.c.b16 %v4131, %v4127
          %v4336 = vpack.c.b16 %v4132, %v4128
          %v4337 = vpack.c.b16 %v4133, %v4129
          %v4338 = vpack.c.b16 %v4138, %v4134
          %v4339 = vpack.c.b16 %v4139, %v4135
          %v4340 = vpack.c.b16 %v4140, %v4136
          %v4341 = vpack.c.b16 %v4141, %v4137
          %v4342 = vpack.c.b16 %v4146, %v4142
          %v4343 = vpack.c.b16 %v4147, %v4143
          %v4344 = vpack.c.b16 %v4148, %v4144
          %v4345 = vpack.c.b16 %v4149, %v4145
          %v4346 = vpack.c.b16 %v4154, %v4150
          %v4347 = vpack.c.b16 %v4155, %v4151
          %v4348 = vpack.c.b16 %v4156, %v4152
          %v4349 = vpack.c.b16 %v4157, %v4153
          %4542 = vmatprep.subr.bf16.mxu0 %v4187
          %4543 = vmatpush1.bf16.msra.mxu0 %v4186
          %4544 = vmatprep.subr.bf16.mxu0 %v4183
          %4545 = vmatpush1.bf16.msra.mxu0 %v4182
          %4546 = vmatprep.subr.bf16.mxu0 %v4179
          %4547 = vmatpush1.bf16.msra.mxu0 %v4178
          %4548 = vmatprep.subr.bf16.mxu0 %v4175
          %4549 = vmatpush1.bf16.msra.mxu0 %v4174
          %4550 = vmatprep.subr.bf16.mxu0 %v4171
          %4551 = vmatpush1.bf16.msra.mxu0 %v4170
          %4552 = vmatprep.subr.bf16.mxu0 %v4167
          %4553 = vmatpush1.bf16.msra.mxu0 %v4166
          %4554 = vmatprep.subr.bf16.mxu0 %v4163
          %4555 = vmatpush1.bf16.msra.mxu0 %v4162
          %4556 = vmatprep.subr.bf16.mxu0 %v4159
          %4557 = vmatpush1.bf16.msra.mxu0 %v4158
          %4558 = vmatprep.subr.bf16.mxu0 %v4219
          %4559 = vmatpush2.bf16.msra.mxu0 %v4218
          %4560 = vmatprep.subr.bf16.mxu0 %v4215
          %4561 = vmatpush2.bf16.msra.mxu0 %v4214
          %4562 = vmatprep.subr.bf16.mxu0 %v4211
          %4563 = vmatpush2.bf16.msra.mxu0 %v4210
          %4564 = vmatprep.subr.bf16.mxu0 %v4207
          %4565 = vmatpush2.bf16.msra.mxu0 %v4206
          %4566 = vmatprep.subr.bf16.mxu0 %v4203
          %4567 = vmatpush2.bf16.msra.mxu0 %v4202
          %4568 = vmatprep.subr.bf16.mxu0 %v4199
          %4569 = vmatpush2.bf16.msra.mxu0 %v4198
          %4570 = vmatprep.subr.bf16.mxu0 %v4195
          %4571 = vmatpush2.bf16.msra.mxu0 %v4194
          %4572 = vmatprep.subr.bf16.mxu0 %v4191
          %4573 = vmatpush2.bf16.msra.mxu0 %v4190
          %4574 = vmatprep.mubr.bf16.mxu0 %v3363
          %4575 = vmatmul.mubr.bf16.gmra.mxu0 %v3362
          %v4576 = vpop.f32.mrf.mxu0
          %v4577 = vadd.f32 %v3565, %v4576
          %v4578 = vpop.f32.mrf.mxu0
          %v4579 = vadd.f32 %v3569, %v4578
          %v4580 = vpop.f32.mrf.mxu0
          %v4581 = vadd.f32 %v3565, %v4580
          %v4582 = vpop.f32.mrf.mxu0
          %v4583 = vadd.f32 %v3569, %v4582
          %4584 = vdwg.mxu0
          %4585 = vmatprep.subr.bf16.mxu0 %v4251
          %4586 = vmatpush1.bf16.msra.mxu0 %v4250
          %4587 = vmatprep.subr.bf16.mxu0 %v4247
          %4588 = vmatpush1.bf16.msra.mxu0 %v4246
          %4589 = vmatprep.subr.bf16.mxu0 %v4243
          %4590 = vmatpush1.bf16.msra.mxu0 %v4242
          %4591 = vmatprep.subr.bf16.mxu0 %v4239
          %4592 = vmatpush1.bf16.msra.mxu0 %v4238
          %4593 = vmatprep.subr.bf16.mxu0 %v4235
          %4594 = vmatpush1.bf16.msra.mxu0 %v4234
          %4595 = vmatprep.subr.bf16.mxu0 %v4231
          %4596 = vmatpush1.bf16.msra.mxu0 %v4230
          %4597 = vmatprep.subr.bf16.mxu0 %v4227
          %4598 = vmatpush1.bf16.msra.mxu0 %v4226
          %4599 = vmatprep.subr.bf16.mxu0 %v4223
          %4600 = vmatpush1.bf16.msra.mxu0 %v4222
          %4601 = vmatprep.subr.bf16.mxu0 %v4283
          %4602 = vmatpush2.bf16.msra.mxu0 %v4282
          %4603 = vmatprep.subr.bf16.mxu0 %v4279
          %4604 = vmatpush2.bf16.msra.mxu0 %v4278
          %4605 = vmatprep.subr.bf16.mxu0 %v4275
          %4606 = vmatpush2.bf16.msra.mxu0 %v4274
          %4607 = vmatprep.subr.bf16.mxu0 %v4271
          %4608 = vmatpush2.bf16.msra.mxu0 %v4270
          %4609 = vmatprep.subr.bf16.mxu0 %v4267
          %4610 = vmatpush2.bf16.msra.mxu0 %v4266
          %4611 = vmatprep.subr.bf16.mxu0 %v4263
          %4612 = vmatpush2.bf16.msra.mxu0 %v4262
          %4613 = vmatprep.subr.bf16.mxu0 %v4259
          %4614 = vmatpush2.bf16.msra.mxu0 %v4258
          %4615 = vmatprep.subr.bf16.mxu0 %v4255
          %4616 = vmatpush2.bf16.msra.mxu0 %v4254
          %4617 = vmatprep.mubr.bf16.mxu0 %v3365
          %4618 = vmatmul.mubr.bf16.gmra.mxu0 %v3364
          %v4619 = vpop.f32.mrf.mxu0
          %v4620 = vadd.f32 %v4577, %v4619
          %v4621 = vpop.f32.mrf.mxu0
          %v4622 = vadd.f32 %v4579, %v4621
          %v4623 = vpop.f32.mrf.mxu0
          %v4624 = vadd.f32 %v4581, %v4623
          %v4625 = vpop.f32.mrf.mxu0
          %v4626 = vadd.f32 %v4583, %v4625
          %4627 = vdwg.mxu0
          %4628 = vmatprep.subr.bf16.mxu0 %v4315
          %4629 = vmatpush1.bf16.msra.mxu0 %v4314
          %4630 = vmatprep.subr.bf16.mxu0 %v4311
          %4631 = vmatpush1.bf16.msra.mxu0 %v4310
          %4632 = vmatprep.subr.bf16.mxu0 %v4307
          %4633 = vmatpush1.bf16.msra.mxu0 %v4306
          %4634 = vmatprep.subr.bf16.mxu0 %v4303
          %4635 = vmatpush1.bf16.msra.mxu0 %v4302
          %4636 = vmatprep.subr.bf16.mxu0 %v4299
          %4637 = vmatpush1.bf16.msra.mxu0 %v4298
          %4638 = vmatprep.subr.bf16.mxu0 %v4295
          %4639 = vmatpush1.bf16.msra.mxu0 %v4294
          %4640 = vmatprep.subr.bf16.mxu0 %v4291
          %4641 = vmatpush1.bf16.msra.mxu0 %v4290
          %4642 = vmatprep.subr.bf16.mxu0 %v4287
          %4643 = vmatpush1.bf16.msra.mxu0 %v4286
          %4644 = vmatprep.subr.bf16.mxu0 %v4347
          %4645 = vmatpush2.bf16.msra.mxu0 %v4346
          %4646 = vmatprep.subr.bf16.mxu0 %v4343
          %4647 = vmatpush2.bf16.msra.mxu0 %v4342
          %4648 = vmatprep.subr.bf16.mxu0 %v4339
          %4649 = vmatpush2.bf16.msra.mxu0 %v4338
          %4650 = vmatprep.subr.bf16.mxu0 %v4335
          %4651 = vmatpush2.bf16.msra.mxu0 %v4334
          %4652 = vmatprep.subr.bf16.mxu0 %v4331
          %4653 = vmatpush2.bf16.msra.mxu0 %v4330
          %4654 = vmatprep.subr.bf16.mxu0 %v4327
          %4655 = vmatpush2.bf16.msra.mxu0 %v4326
          %4656 = vmatprep.subr.bf16.mxu0 %v4323
          %4657 = vmatpush2.bf16.msra.mxu0 %v4322
          %4658 = vmatprep.subr.bf16.mxu0 %v4319
          %4659 = vmatpush2.bf16.msra.mxu0 %v4318
          %4660 = vmatprep.mubr.bf16.mxu0 %v3367
          %4661 = vmatmul.mubr.bf16.gmra.mxu0 %v3366
          %v4662 = vpop.f32.mrf.mxu0
          %v4663 = vadd.f32 %v4620, %v4662
          %v4664 = vpop.f32.mrf.mxu0
          %v4665 = vadd.f32 %v4622, %v4664
          %v4666 = vpop.f32.mrf.mxu0
          %v4667 = vadd.f32 %v4624, %v4666
          %v4668 = vpop.f32.mrf.mxu0
          %v4669 = vadd.f32 %v4626, %v4668
          %4670 = vdwg.mxu0
          %4671 = vmatprep.subr.bf16.mxu0 %v4189
          %4672 = vmatpush1.bf16.msra.mxu0 %v4188
          %4673 = vmatprep.subr.bf16.mxu0 %v4185
          %4674 = vmatpush1.bf16.msra.mxu0 %v4184
          %4675 = vmatprep.subr.bf16.mxu0 %v4181
          %4676 = vmatpush1.bf16.msra.mxu0 %v4180
          %4677 = vmatprep.subr.bf16.mxu0 %v4177
          %4678 = vmatpush1.bf16.msra.mxu0 %v4176
          %4679 = vmatprep.subr.bf16.mxu0 %v4173
          %4680 = vmatpush1.bf16.msra.mxu0 %v4172
          %4681 = vmatprep.subr.bf16.mxu0 %v4169
          %4682 = vmatpush1.bf16.msra.mxu0 %v4168
          %4683 = vmatprep.subr.bf16.mxu0 %v4165
          %4684 = vmatpush1.bf16.msra.mxu0 %v4164
          %4685 = vmatprep.subr.bf16.mxu0 %v4161
          %4686 = vmatpush1.bf16.msra.mxu0 %v4160
          %4687 = vmatprep.subr.bf16.mxu0 %v4221
          %4688 = vmatpush2.bf16.msra.mxu0 %v4220
          %4689 = vmatprep.subr.bf16.mxu0 %v4217
          %4690 = vmatpush2.bf16.msra.mxu0 %v4216
          %4691 = vmatprep.subr.bf16.mxu0 %v4213
          %4692 = vmatpush2.bf16.msra.mxu0 %v4212
          %4693 = vmatprep.subr.bf16.mxu0 %v4209
          %4694 = vmatpush2.bf16.msra.mxu0 %v4208
          %4695 = vmatprep.subr.bf16.mxu0 %v4205
          %4696 = vmatpush2.bf16.msra.mxu0 %v4204
          %4697 = vmatprep.subr.bf16.mxu0 %v4201
          %4698 = vmatpush2.bf16.msra.mxu0 %v4200
          %4699 = vmatprep.subr.bf16.mxu0 %v4197
          %4700 = vmatpush2.bf16.msra.mxu0 %v4196
          %4701 = vmatprep.subr.bf16.mxu0 %v4193
          %4702 = vmatpush2.bf16.msra.mxu0 %v4192
          %4703 = vmatprep.mubr.bf16.mxu0 %v3363
          %4704 = vmatmul.mubr.bf16.gmra.mxu0 %v3362
          %v4705 = vpop.f32.mrf.mxu0
          %v4706 = vadd.f32 %v3573, %v4705
          %v4707 = vpop.f32.mrf.mxu0
          %v4708 = vadd.f32 %v3577, %v4707
          %v4709 = vpop.f32.mrf.mxu0
          %v4710 = vadd.f32 %v3573, %v4709
          %v4711 = vpop.f32.mrf.mxu0
          %v4712 = vadd.f32 %v3577, %v4711
          %4713 = vdwg.mxu0
          %4714 = vmatprep.subr.bf16.mxu0 %v4253
          %4715 = vmatpush1.bf16.msra.mxu0 %v4252
          %4716 = vmatprep.subr.bf16.mxu0 %v4249
          %4717 = vmatpush1.bf16.msra.mxu0 %v4248
          %4718 = vmatprep.subr.bf16.mxu0 %v4245
          %4719 = vmatpush1.bf16.msra.mxu0 %v4244
          %4720 = vmatprep.subr.bf16.mxu0 %v4241
          %4721 = vmatpush1.bf16.msra.mxu0 %v4240
          %4722 = vmatprep.subr.bf16.mxu0 %v4237
          %4723 = vmatpush1.bf16.msra.mxu0 %v4236
          %4724 = vmatprep.subr.bf16.mxu0 %v4233
          %4725 = vmatpush1.bf16.msra.mxu0 %v4232
          %4726 = vmatprep.subr.bf16.mxu0 %v4229
          %4727 = vmatpush1.bf16.msra.mxu0 %v4228
          %4728 = vmatprep.subr.bf16.mxu0 %v4225
          %4729 = vmatpush1.bf16.msra.mxu0 %v4224
          %4730 = vmatprep.subr.bf16.mxu0 %v4285
          %4731 = vmatpush2.bf16.msra.mxu0 %v4284
          %4732 = vmatprep.subr.bf16.mxu0 %v4281
          %4733 = vmatpush2.bf16.msra.mxu0 %v4280
          %4734 = vmatprep.subr.bf16.mxu0 %v4277
          %4735 = vmatpush2.bf16.msra.mxu0 %v4276
          %4736 = vmatprep.subr.bf16.mxu0 %v4273
          %4737 = vmatpush2.bf16.msra.mxu0 %v4272
          %4738 = vmatprep.subr.bf16.mxu0 %v4269
          %4739 = vmatpush2.bf16.msra.mxu0 %v4268
          %4740 = vmatprep.subr.bf16.mxu0 %v4265
          %4741 = vmatpush2.bf16.msra.mxu0 %v4264
          %4742 = vmatprep.subr.bf16.mxu0 %v4261
          %4743 = vmatpush2.bf16.msra.mxu0 %v4260
          %4744 = vmatprep.subr.bf16.mxu0 %v4257
          %4745 = vmatpush2.bf16.msra.mxu0 %v4256
          %4746 = vmatprep.mubr.bf16.mxu0 %v3365
          %4747 = vmatmul.mubr.bf16.gmra.mxu0 %v3364
          %v4748 = vpop.f32.mrf.mxu0
          %v4749 = vadd.f32 %v4706, %v4748
          %v4750 = vpop.f32.mrf.mxu0
          %v4751 = vadd.f32 %v4708, %v4750
          %v4752 = vpop.f32.mrf.mxu0
          %v4753 = vadd.f32 %v4710, %v4752
          %v4754 = vpop.f32.mrf.mxu0
          %v4755 = vadd.f32 %v4712, %v4754
          %4756 = vdwg.mxu0
          %4757 = vmatprep.subr.bf16.mxu0 %v4317
          %4758 = vmatpush1.bf16.msra.mxu0 %v4316
          %4759 = vmatprep.subr.bf16.mxu0 %v4313
          %4760 = vmatpush1.bf16.msra.mxu0 %v4312
          %4761 = vmatprep.subr.bf16.mxu0 %v4309
          %4762 = vmatpush1.bf16.msra.mxu0 %v4308
          %4763 = vmatprep.subr.bf16.mxu0 %v4305
          %4764 = vmatpush1.bf16.msra.mxu0 %v4304
          %4765 = vmatprep.subr.bf16.mxu0 %v4301
          %4766 = vmatpush1.bf16.msra.mxu0 %v4300
          %4767 = vmatprep.subr.bf16.mxu0 %v4297
          %4768 = vmatpush1.bf16.msra.mxu0 %v4296
          %4769 = vmatprep.subr.bf16.mxu0 %v4293
          %4770 = vmatpush1.bf16.msra.mxu0 %v4292
          %4771 = vmatprep.subr.bf16.mxu0 %v4289
          %4772 = vmatpush1.bf16.msra.mxu0 %v4288
          %4773 = vmatprep.subr.bf16.mxu0 %v4349
          %4774 = vmatpush2.bf16.msra.mxu0 %v4348
          %4775 = vmatprep.subr.bf16.mxu0 %v4345
          %4776 = vmatpush2.bf16.msra.mxu0 %v4344
          %4777 = vmatprep.subr.bf16.mxu0 %v4341
          %4778 = vmatpush2.bf16.msra.mxu0 %v4340
          %4779 = vmatprep.subr.bf16.mxu0 %v4337
          %4780 = vmatpush2.bf16.msra.mxu0 %v4336
          %4781 = vmatprep.subr.bf16.mxu0 %v4333
          %4782 = vmatpush2.bf16.msra.mxu0 %v4332
          %4783 = vmatprep.subr.bf16.mxu0 %v4329
          %4784 = vmatpush2.bf16.msra.mxu0 %v4328
          %4785 = vmatprep.subr.bf16.mxu0 %v4325
          %4786 = vmatpush2.bf16.msra.mxu0 %v4324
          %4787 = vmatprep.subr.bf16.mxu0 %v4321
          %4788 = vmatpush2.bf16.msra.mxu0 %v4320
          %4789 = vmatprep.mubr.bf16.mxu0 %v3367
          %4790 = vmatmul.mubr.bf16.gmra.mxu0 %v3366
          %v4791 = vpop.f32.mrf.mxu0
          %v4792 = vadd.f32 %v4749, %v4791
          %v4793 = vpop.f32.mrf.mxu0
          %v4794 = vadd.f32 %v4751, %v4793
          %v4795 = vpop.f32.mrf.mxu0
          %v4796 = vadd.f32 %v4753, %v4795
          %v4797 = vpop.f32.mrf.mxu0
          %v4798 = vadd.f32 %v4755, %v4797
          %4799 = vdwg.mxu0
          %v4800 = vpack.c.bf16 %v4667, %v4663
          %v4801 = vpack.c.bf16 %v4669, %v4665
          %v4802 = vpack.c.bf16 %v4796, %v4792
          %v4803 = vpack.c.bf16 %v4798, %v4794
          %v4804 = vld [vmem:[#allocation21] sm:$0xff]
          %v4805 = vld [vmem:[#allocation21 + $0x8] sm:$0xff]
          %v4806 = vld [vmem:[#allocation21 + $0x10] sm:$0xff]
          %v4807 = vld [vmem:[#allocation21 + $0x18] sm:$0xff]
          %v4808 = vld [vmem:[#allocation21 + $0x20] sm:$0xff]
          %v4809 = vld [vmem:[#allocation21 + $0x28] sm:$0xff]
          %v4810 = vld [vmem:[#allocation21 + $0x30] sm:$0xff]
          %v4811 = vld [vmem:[#allocation21 + $0x38] sm:$0xff]
          %v4812 = vld [vmem:[#allocation21 + $0x40] sm:$0xff]
          %v4813 = vld [vmem:[#allocation21 + $0x48] sm:$0xff]
          %v4814 = vld [vmem:[#allocation21 + $0x50] sm:$0xff]
          %v4815 = vld [vmem:[#allocation21 + $0x58] sm:$0xff]
          %v4816 = vld [vmem:[#allocation21 + $0x60] sm:$0xff]
          %v4817 = vld [vmem:[#allocation21 + $0x68] sm:$0xff]
          %v4818 = vld [vmem:[#allocation21 + $0x70] sm:$0xff]
          %v4819 = vld [vmem:[#allocation21 + $0x78] sm:$0xff]
          %v4820 = vld [vmem:[#allocation21 + $0x80] sm:$0xff]
          %v4821 = vld [vmem:[#allocation21 + $0x88] sm:$0xff]
          %v4822 = vld [vmem:[#allocation21 + $0x90] sm:$0xff]
          %v4823 = vld [vmem:[#allocation21 + $0x98] sm:$0xff]
          %v4824 = vld [vmem:[#allocation21 + $0xa0] sm:$0xff]
          %v4825 = vld [vmem:[#allocation21 + $0xa8] sm:$0xff]
          %v4826 = vld [vmem:[#allocation21 + $0xb0] sm:$0xff]
          %v4827 = vld [vmem:[#allocation21 + $0xb8] sm:$0xff]
          %v4828 = vld [vmem:[#allocation21 + $0xc0] sm:$0xff]
          %v4829 = vld [vmem:[#allocation21 + $0xc8] sm:$0xff]
          %v4830 = vld [vmem:[#allocation21 + $0xd0] sm:$0xff]
          %v4831 = vld [vmem:[#allocation21 + $0xd8] sm:$0xff]
          %v4832 = vld [vmem:[#allocation21 + $0xe0] sm:$0xff]
          %v4833 = vld [vmem:[#allocation21 + $0xe8] sm:$0xff]
          %v4834 = vld [vmem:[#allocation21 + $0xf0] sm:$0xff]
          %v4835 = vld [vmem:[#allocation21 + $0xf8] sm:$0xff]
          %v4836 = vld [vmem:[#allocation21 + $0x100] sm:$0xff]
          %v4837 = vld [vmem:[#allocation21 + $0x108] sm:$0xff]
          %v4838 = vld [vmem:[#allocation21 + $0x110] sm:$0xff]
          %v4839 = vld [vmem:[#allocation21 + $0x118] sm:$0xff]
          %v4840 = vld [vmem:[#allocation21 + $0x120] sm:$0xff]
          %v4841 = vld [vmem:[#allocation21 + $0x128] sm:$0xff]
          %v4842 = vld [vmem:[#allocation21 + $0x130] sm:$0xff]
          %v4843 = vld [vmem:[#allocation21 + $0x138] sm:$0xff]
          %v4844 = vld [vmem:[#allocation21 + $0x140] sm:$0xff]
          %v4845 = vld [vmem:[#allocation21 + $0x148] sm:$0xff]
          %v4846 = vld [vmem:[#allocation21 + $0x150] sm:$0xff]
          %v4847 = vld [vmem:[#allocation21 + $0x158] sm:$0xff]
          %v4848 = vld [vmem:[#allocation21 + $0x160] sm:$0xff]
          %v4849 = vld [vmem:[#allocation21 + $0x168] sm:$0xff]
          %v4850 = vld [vmem:[#allocation21 + $0x170] sm:$0xff]
          %v4851 = vld [vmem:[#allocation21 + $0x178] sm:$0xff]
          %v4852 = vld [vmem:[#allocation21 + $0x180] sm:$0xff]
          %v4853 = vld [vmem:[#allocation21 + $0x188] sm:$0xff]
          %v4854 = vld [vmem:[#allocation21 + $0x190] sm:$0xff]
          %v4855 = vld [vmem:[#allocation21 + $0x198] sm:$0xff]
          %v4856 = vld [vmem:[#allocation21 + $0x1a0] sm:$0xff]
          %v4857 = vld [vmem:[#allocation21 + $0x1a8] sm:$0xff]
          %v4858 = vld [vmem:[#allocation21 + $0x1b0] sm:$0xff]
          %v4859 = vld [vmem:[#allocation21 + $0x1b8] sm:$0xff]
          %v4860 = vld [vmem:[#allocation21 + $0x1c0] sm:$0xff]
          %v4861 = vld [vmem:[#allocation21 + $0x1c8] sm:$0xff]
          %v4862 = vld [vmem:[#allocation21 + $0x1d0] sm:$0xff]
          %v4863 = vld [vmem:[#allocation21 + $0x1d8] sm:$0xff]
          %v4864 = vld [vmem:[#allocation21 + $0x1e0] sm:$0xff]
          %v4865 = vld [vmem:[#allocation21 + $0x1e8] sm:$0xff]
          %v4866 = vld [vmem:[#allocation21 + $0x1f0] sm:$0xff]
          %v4867 = vld [vmem:[#allocation21 + $0x1f8] sm:$0xff]
          %v4868 = vld [vmem:[#allocation23] sm:$0x3]
          %v4870 = vlaneseq
          %v4871 = vshrl.u32 %v4870, 7
          %v4872 = vsub.s32 0, %v4871
          %v4873 = vrot.slane %v4868, %v4872
          %v4874 = vlaneseq
          %v4875 = vshrl.u32 %v4874, 7
          %v4876 = vsub.s32 1, %v4875
          %v4877 = vrot.slane %v4868, %v4876
          %v4944 = vunpack.c.l.b16 %v4804
          %v4945 = vunpack.c.h.b16 %v4804
          %v4946 = vunpack.c.l.b16 %v4805
          %v4947 = vunpack.c.h.b16 %v4805
          %v4948 = vunpack.c.l.b16 %v4806
          %v4949 = vunpack.c.h.b16 %v4806
          %v4950 = vunpack.c.l.b16 %v4807
          %v4951 = vunpack.c.h.b16 %v4807
          %v4952 = vunpack.c.l.b16 %v4808
          %v4953 = vunpack.c.h.b16 %v4808
          %v4954 = vunpack.c.l.b16 %v4809
          %v4955 = vunpack.c.h.b16 %v4809
          %v4956 = vunpack.c.l.b16 %v4810
          %v4957 = vunpack.c.h.b16 %v4810
          %v4958 = vunpack.c.l.b16 %v4811
          %v4959 = vunpack.c.h.b16 %v4811
          %v4960 = vunpack.c.l.b16 %v4812
          %v4961 = vunpack.c.h.b16 %v4812
          %v4962 = vunpack.c.l.b16 %v4813
          %v4963 = vunpack.c.h.b16 %v4813
          %v4964 = vunpack.c.l.b16 %v4814
          %v4965 = vunpack.c.h.b16 %v4814
          %v4966 = vunpack.c.l.b16 %v4815
          %v4967 = vunpack.c.h.b16 %v4815
          %v4968 = vunpack.c.l.b16 %v4816
          %v4969 = vunpack.c.h.b16 %v4816
          %v4970 = vunpack.c.l.b16 %v4817
          %v4971 = vunpack.c.h.b16 %v4817
          %v4972 = vunpack.c.l.b16 %v4818
          %v4973 = vunpack.c.h.b16 %v4818
          %v4974 = vunpack.c.l.b16 %v4819
          %v4975 = vunpack.c.h.b16 %v4819
          %v4976 = vunpack.c.l.b16 %v4820
          %v4977 = vunpack.c.h.b16 %v4820
          %v4978 = vunpack.c.l.b16 %v4821
          %v4979 = vunpack.c.h.b16 %v4821
          %v4980 = vunpack.c.l.b16 %v4822
          %v4981 = vunpack.c.h.b16 %v4822
          %v4982 = vunpack.c.l.b16 %v4823
          %v4983 = vunpack.c.h.b16 %v4823
          %v4984 = vunpack.c.l.b16 %v4824
          %v4985 = vunpack.c.h.b16 %v4824
          %v4986 = vunpack.c.l.b16 %v4825
          %v4987 = vunpack.c.h.b16 %v4825
          %v4988 = vunpack.c.l.b16 %v4826
          %v4989 = vunpack.c.h.b16 %v4826
          %v4990 = vunpack.c.l.b16 %v4827
          %v4991 = vunpack.c.h.b16 %v4827
          %v4992 = vunpack.c.l.b16 %v4828
          %v4993 = vunpack.c.h.b16 %v4828
          %v4994 = vunpack.c.l.b16 %v4829
          %v4995 = vunpack.c.h.b16 %v4829
          %v4996 = vunpack.c.l.b16 %v4830
          %v4997 = vunpack.c.h.b16 %v4830
          %v4998 = vunpack.c.l.b16 %v4831
          %v4999 = vunpack.c.h.b16 %v4831
          %v5000 = vunpack.c.l.b16 %v4832
          %v5001 = vunpack.c.h.b16 %v4832
          %v5002 = vunpack.c.l.b16 %v4833
          %v5003 = vunpack.c.h.b16 %v4833
          %v5004 = vunpack.c.l.b16 %v4834
          %v5005 = vunpack.c.h.b16 %v4834
          %v5006 = vunpack.c.l.b16 %v4835
          %v5007 = vunpack.c.h.b16 %v4835
          %v5008 = vunpack.c.l.b16 %v4836
          %v5009 = vunpack.c.h.b16 %v4836
          %v5010 = vunpack.c.l.b16 %v4837
          %v5011 = vunpack.c.h.b16 %v4837
          %v5012 = vunpack.c.l.b16 %v4838
          %v5013 = vunpack.c.h.b16 %v4838
          %v5014 = vunpack.c.l.b16 %v4839
          %v5015 = vunpack.c.h.b16 %v4839
          %v5016 = vunpack.c.l.b16 %v4840
          %v5017 = vunpack.c.h.b16 %v4840
          %v5018 = vunpack.c.l.b16 %v4841
          %v5019 = vunpack.c.h.b16 %v4841
          %v5020 = vunpack.c.l.b16 %v4842
          %v5021 = vunpack.c.h.b16 %v4842
          %v5022 = vunpack.c.l.b16 %v4843
          %v5023 = vunpack.c.h.b16 %v4843
          %v5024 = vunpack.c.l.b16 %v4844
          %v5025 = vunpack.c.h.b16 %v4844
          %v5026 = vunpack.c.l.b16 %v4845
          %v5027 = vunpack.c.h.b16 %v4845
          %v5028 = vunpack.c.l.b16 %v4846
          %v5029 = vunpack.c.h.b16 %v4846
          %v5030 = vunpack.c.l.b16 %v4847
          %v5031 = vunpack.c.h.b16 %v4847
          %v5032 = vunpack.c.l.b16 %v4848
          %v5033 = vunpack.c.h.b16 %v4848
          %v5034 = vunpack.c.l.b16 %v4849
          %v5035 = vunpack.c.h.b16 %v4849
          %v5036 = vunpack.c.l.b16 %v4850
          %v5037 = vunpack.c.h.b16 %v4850
          %v5038 = vunpack.c.l.b16 %v4851
          %v5039 = vunpack.c.h.b16 %v4851
          %v5040 = vunpack.c.l.b16 %v4852
          %v5041 = vunpack.c.h.b16 %v4852
          %v5042 = vunpack.c.l.b16 %v4853
          %v5043 = vunpack.c.h.b16 %v4853
          %v5044 = vunpack.c.l.b16 %v4854
          %v5045 = vunpack.c.h.b16 %v4854
          %v5046 = vunpack.c.l.b16 %v4855
          %v5047 = vunpack.c.h.b16 %v4855
          %v5048 = vunpack.c.l.b16 %v4856
          %v5049 = vunpack.c.h.b16 %v4856
          %v5050 = vunpack.c.l.b16 %v4857
          %v5051 = vunpack.c.h.b16 %v4857
          %v5052 = vunpack.c.l.b16 %v4858
          %v5053 = vunpack.c.h.b16 %v4858
          %v5054 = vunpack.c.l.b16 %v4859
          %v5055 = vunpack.c.h.b16 %v4859
          %v5056 = vunpack.c.l.b16 %v4860
          %v5057 = vunpack.c.h.b16 %v4860
          %v5058 = vunpack.c.l.b16 %v4861
          %v5059 = vunpack.c.h.b16 %v4861
          %v5060 = vunpack.c.l.b16 %v4862
          %v5061 = vunpack.c.h.b16 %v4862
          %v5062 = vunpack.c.l.b16 %v4863
          %v5063 = vunpack.c.h.b16 %v4863
          %v5064 = vunpack.c.l.b16 %v4864
          %v5065 = vunpack.c.h.b16 %v4864
          %v5066 = vunpack.c.l.b16 %v4865
          %v5067 = vunpack.c.h.b16 %v4865
          %v5068 = vunpack.c.l.b16 %v4866
          %v5069 = vunpack.c.h.b16 %v4866
          %v5070 = vunpack.c.l.b16 %v4867
          %v5071 = vunpack.c.h.b16 %v4867
          %v5072 = vpack.c.b16 %v4946, %v4944
          %v5073 = vpack.c.b16 %v4947, %v4945
          %v5074 = vpack.c.b16 %v4950, %v4948
          %v5075 = vpack.c.b16 %v4951, %v4949
          %v5076 = vpack.c.b16 %v4954, %v4952
          %v5077 = vpack.c.b16 %v4955, %v4953
          %v5078 = vpack.c.b16 %v4958, %v4956
          %v5079 = vpack.c.b16 %v4959, %v4957
          %v5080 = vpack.c.b16 %v4962, %v4960
          %v5081 = vpack.c.b16 %v4963, %v4961
          %v5082 = vpack.c.b16 %v4966, %v4964
          %v5083 = vpack.c.b16 %v4967, %v4965
          %v5084 = vpack.c.b16 %v4970, %v4968
          %v5085 = vpack.c.b16 %v4971, %v4969
          %v5086 = vpack.c.b16 %v4974, %v4972
          %v5087 = vpack.c.b16 %v4975, %v4973
          %v5088 = vpack.c.b16 %v4978, %v4976
          %v5089 = vpack.c.b16 %v4979, %v4977
          %v5090 = vpack.c.b16 %v4982, %v4980
          %v5091 = vpack.c.b16 %v4983, %v4981
          %v5092 = vpack.c.b16 %v4986, %v4984
          %v5093 = vpack.c.b16 %v4987, %v4985
          %v5094 = vpack.c.b16 %v4990, %v4988
          %v5095 = vpack.c.b16 %v4991, %v4989
          %v5096 = vpack.c.b16 %v4994, %v4992
          %v5097 = vpack.c.b16 %v4995, %v4993
          %v5098 = vpack.c.b16 %v4998, %v4996
          %v5099 = vpack.c.b16 %v4999, %v4997
          %v5100 = vpack.c.b16 %v5002, %v5000
          %v5101 = vpack.c.b16 %v5003, %v5001
          %v5102 = vpack.c.b16 %v5006, %v5004
          %v5103 = vpack.c.b16 %v5007, %v5005
          %v5104 = vpack.c.b16 %v5010, %v5008
          %v5105 = vpack.c.b16 %v5011, %v5009
          %v5106 = vpack.c.b16 %v5014, %v5012
          %v5107 = vpack.c.b16 %v5015, %v5013
          %v5108 = vpack.c.b16 %v5018, %v5016
          %v5109 = vpack.c.b16 %v5019, %v5017
          %v5110 = vpack.c.b16 %v5022, %v5020
          %v5111 = vpack.c.b16 %v5023, %v5021
          %v5112 = vpack.c.b16 %v5026, %v5024
          %v5113 = vpack.c.b16 %v5027, %v5025
          %v5114 = vpack.c.b16 %v5030, %v5028
          %v5115 = vpack.c.b16 %v5031, %v5029
          %v5116 = vpack.c.b16 %v5034, %v5032
          %v5117 = vpack.c.b16 %v5035, %v5033
          %v5118 = vpack.c.b16 %v5038, %v5036
          %v5119 = vpack.c.b16 %v5039, %v5037
          %v5120 = vpack.c.b16 %v5042, %v5040
          %v5121 = vpack.c.b16 %v5043, %v5041
          %v5122 = vpack.c.b16 %v5046, %v5044
          %v5123 = vpack.c.b16 %v5047, %v5045
          %v5124 = vpack.c.b16 %v5050, %v5048
          %v5125 = vpack.c.b16 %v5051, %v5049
          %v5126 = vpack.c.b16 %v5054, %v5052
          %v5127 = vpack.c.b16 %v5055, %v5053
          %v5128 = vpack.c.b16 %v5058, %v5056
          %v5129 = vpack.c.b16 %v5059, %v5057
          %v5130 = vpack.c.b16 %v5062, %v5060
          %v5131 = vpack.c.b16 %v5063, %v5061
          %v5132 = vpack.c.b16 %v5066, %v5064
          %v5133 = vpack.c.b16 %v5067, %v5065
          %v5134 = vpack.c.b16 %v5070, %v5068
          %v5135 = vpack.c.b16 %v5071, %v5069
          %5200 = vmatprep.subr.bf16.mxu0 %v5087
          %5201 = vmatpush1.bf16.msra.mxu0 %v5086
          %5202 = vmatprep.subr.bf16.mxu0 %v5085
          %5203 = vmatpush1.bf16.msra.mxu0 %v5084
          %5204 = vmatprep.subr.bf16.mxu0 %v5083
          %5205 = vmatpush1.bf16.msra.mxu0 %v5082
          %5206 = vmatprep.subr.bf16.mxu0 %v5081
          %5207 = vmatpush1.bf16.msra.mxu0 %v5080
          %5208 = vmatprep.subr.bf16.mxu0 %v5079
          %5209 = vmatpush1.bf16.msra.mxu0 %v5078
          %5210 = vmatprep.subr.bf16.mxu0 %v5077
          %5211 = vmatpush1.bf16.msra.mxu0 %v5076
          %5212 = vmatprep.subr.bf16.mxu0 %v5075
          %5213 = vmatpush1.bf16.msra.mxu0 %v5074
          %5214 = vmatprep.subr.bf16.mxu0 %v5073
          %5215 = vmatpush1.bf16.msra.mxu0 %v5072
          %5216 = vmatprep.subr.bf16.mxu0 %v5103
          %5217 = vmatpush2.bf16.msra.mxu0 %v5102
          %5218 = vmatprep.subr.bf16.mxu0 %v5101
          %5219 = vmatpush2.bf16.msra.mxu0 %v5100
          %5220 = vmatprep.subr.bf16.mxu0 %v5099
          %5221 = vmatpush2.bf16.msra.mxu0 %v5098
          %5222 = vmatprep.subr.bf16.mxu0 %v5097
          %5223 = vmatpush2.bf16.msra.mxu0 %v5096
          %5224 = vmatprep.subr.bf16.mxu0 %v5095
          %5225 = vmatpush2.bf16.msra.mxu0 %v5094
          %5226 = vmatprep.subr.bf16.mxu0 %v5093
          %5227 = vmatpush2.bf16.msra.mxu0 %v5092
          %5228 = vmatprep.subr.bf16.mxu0 %v5091
          %5229 = vmatpush2.bf16.msra.mxu0 %v5090
          %5230 = vmatprep.subr.bf16.mxu0 %v5089
          %5231 = vmatpush2.bf16.msra.mxu0 %v5088
          %5232 = vmatprep.mubr.bf16.mxu0 %v4801
          %5233 = vmatmul.mubr.bf16.gmra.mxu0 %v4800
          %v5234 = vpop.f32.mrf.mxu0
          %v5235 = vadd.f32 %v4873, %v5234
          %v5236 = vpop.f32.mrf.mxu0
          %v5237 = vadd.f32 %v4877, %v5236
          %v5238 = vpop.f32.mrf.mxu0
          %v5239 = vadd.f32 %v4873, %v5238
          %v5240 = vpop.f32.mrf.mxu0
          %v5241 = vadd.f32 %v4877, %v5240
          %5242 = vdwg.mxu0
          %5243 = vmatprep.subr.bf16.mxu0 %v5119
          %5244 = vmatpush1.bf16.msra.mxu0 %v5118
          %5245 = vmatprep.subr.bf16.mxu0 %v5117
          %5246 = vmatpush1.bf16.msra.mxu0 %v5116
          %5247 = vmatprep.subr.bf16.mxu0 %v5115
          %5248 = vmatpush1.bf16.msra.mxu0 %v5114
          %5249 = vmatprep.subr.bf16.mxu0 %v5113
          %5250 = vmatpush1.bf16.msra.mxu0 %v5112
          %5251 = vmatprep.subr.bf16.mxu0 %v5111
          %5252 = vmatpush1.bf16.msra.mxu0 %v5110
          %5253 = vmatprep.subr.bf16.mxu0 %v5109
          %5254 = vmatpush1.bf16.msra.mxu0 %v5108
          %5255 = vmatprep.subr.bf16.mxu0 %v5107
          %5256 = vmatpush1.bf16.msra.mxu0 %v5106
          %5257 = vmatprep.subr.bf16.mxu0 %v5105
          %5258 = vmatpush1.bf16.msra.mxu0 %v5104
          %5259 = vmatprep.subr.bf16.mxu0 %v5135
          %5260 = vmatpush2.bf16.msra.mxu0 %v5134
          %5261 = vmatprep.subr.bf16.mxu0 %v5133
          %5262 = vmatpush2.bf16.msra.mxu0 %v5132
          %5263 = vmatprep.subr.bf16.mxu0 %v5131
          %5264 = vmatpush2.bf16.msra.mxu0 %v5130
          %5265 = vmatprep.subr.bf16.mxu0 %v5129
          %5266 = vmatpush2.bf16.msra.mxu0 %v5128
          %5267 = vmatprep.subr.bf16.mxu0 %v5127
          %5268 = vmatpush2.bf16.msra.mxu0 %v5126
          %5269 = vmatprep.subr.bf16.mxu0 %v5125
          %5270 = vmatpush2.bf16.msra.mxu0 %v5124
          %5271 = vmatprep.subr.bf16.mxu0 %v5123
          %5272 = vmatpush2.bf16.msra.mxu0 %v5122
          %5273 = vmatprep.subr.bf16.mxu0 %v5121
          %5274 = vmatpush2.bf16.msra.mxu0 %v5120
          %5275 = vmatprep.mubr.bf16.mxu0 %v4803
          %5276 = vmatmul.mubr.bf16.gmra.mxu0 %v4802
          %v5277 = vpop.f32.mrf.mxu0
          %v5278 = vadd.f32 %v5235, %v5277
          %v5279 = vpop.f32.mrf.mxu0
          %v5280 = vadd.f32 %v5237, %v5279
          %v5281 = vpop.f32.mrf.mxu0
          %v5282 = vadd.f32 %v5239, %v5281
          %v5283 = vpop.f32.mrf.mxu0
          %v5284 = vadd.f32 %v5241, %v5283
          %5285 = vdwg.mxu0
          %v5286 = vpack.c.bf16 %v5282, %v5278
          %v5287 = vpack.c.bf16 %v5284, %v5280
          %v5288 = vld [vmem:[#allocation24] sm:$0xf]
          %v5289 = vld [vmem:[#allocation24 + $0x4] sm:$0xf]
          %v5290 = vld [vmem:[#allocation24 + $0x8] sm:$0xf]
          %v5291 = vld [vmem:[#allocation24 + $0xc] sm:$0xf]
          %v5292 = vld [vmem:[#allocation24 + $0x10] sm:$0xf]
          %v5293 = vld [vmem:[#allocation24 + $0x14] sm:$0xf]
          %v5294 = vld [vmem:[#allocation24 + $0x18] sm:$0xf]
          %v5295 = vld [vmem:[#allocation24 + $0x1c] sm:$0xf]
          %v5296 = vld [vmem:[#allocation24 + $0x20] sm:$0xf]
          %v5297 = vld [vmem:[#allocation24 + $0x24] sm:$0xf]
          %v5298 = vld [vmem:[#allocation24 + $0x28] sm:$0xf]
          %v5299 = vld [vmem:[#allocation24 + $0x2c] sm:$0xf]
          %v5300 = vld [vmem:[#allocation24 + $0x30] sm:$0xf]
          %v5301 = vld [vmem:[#allocation24 + $0x34] sm:$0xf]
          %v5302 = vld [vmem:[#allocation24 + $0x38] sm:$0xf]
          %v5303 = vld [vmem:[#allocation24 + $0x3c] sm:$0xf]
          %v5304 = vld [vmem:[#allocation24 + $0x40] sm:$0xf]
          %v5305 = vld [vmem:[#allocation24 + $0x44] sm:$0xf]
          %v5306 = vld [vmem:[#allocation24 + $0x48] sm:$0xf]
          %v5307 = vld [vmem:[#allocation24 + $0x4c] sm:$0xf]
          %v5308 = vld [vmem:[#allocation24 + $0x50] sm:$0xf]
          %v5309 = vld [vmem:[#allocation24 + $0x54] sm:$0xf]
          %v5310 = vld [vmem:[#allocation24 + $0x58] sm:$0xf]
          %v5311 = vld [vmem:[#allocation24 + $0x5c] sm:$0xf]
          %v5312 = vld [vmem:[#allocation24 + $0x60] sm:$0xf]
          %v5313 = vld [vmem:[#allocation24 + $0x64] sm:$0xf]
          %v5314 = vld [vmem:[#allocation24 + $0x68] sm:$0xf]
          %v5315 = vld [vmem:[#allocation24 + $0x6c] sm:$0xf]
          %v5316 = vld [vmem:[#allocation24 + $0x70] sm:$0xf]
          %v5317 = vld [vmem:[#allocation24 + $0x74] sm:$0xf]
          %v5318 = vld [vmem:[#allocation24 + $0x78] sm:$0xf]
          %v5319 = vld [vmem:[#allocation24 + $0x7c] sm:$0xf]
          %v5320 = vld [vmem:[%s25] sm:$0x1]
          %v5322 = vlaneseq
          %v5323 = vshrl.u32 %v5322, 7
          %v5324 = vsub.s32 0, %v5323
          %v5325 = vrot.slane %v5320, %v5324
          %v5359 = vunpack.c.l.b16 %v5288
          %v5360 = vunpack.c.l.b16 %v5289
          %v5361 = vunpack.c.l.b16 %v5290
          %v5362 = vunpack.c.l.b16 %v5291
          %v5363 = vunpack.c.l.b16 %v5292
          %v5364 = vunpack.c.l.b16 %v5293
          %v5365 = vunpack.c.l.b16 %v5294
          %v5366 = vunpack.c.l.b16 %v5295
          %v5367 = vunpack.c.l.b16 %v5296
          %v5368 = vunpack.c.l.b16 %v5297
          %v5369 = vunpack.c.l.b16 %v5298
          %v5370 = vunpack.c.l.b16 %v5299
          %v5371 = vunpack.c.l.b16 %v5300
          %v5372 = vunpack.c.l.b16 %v5301
          %v5373 = vunpack.c.l.b16 %v5302
          %v5374 = vunpack.c.l.b16 %v5303
          %v5375 = vunpack.c.l.b16 %v5304
          %v5376 = vunpack.c.l.b16 %v5305
          %v5377 = vunpack.c.l.b16 %v5306
          %v5378 = vunpack.c.l.b16 %v5307
          %v5379 = vunpack.c.l.b16 %v5308
          %v5380 = vunpack.c.l.b16 %v5309
          %v5381 = vunpack.c.l.b16 %v5310
          %v5382 = vunpack.c.l.b16 %v5311
          %v5383 = vunpack.c.l.b16 %v5312
          %v5384 = vunpack.c.l.b16 %v5313
          %v5385 = vunpack.c.l.b16 %v5314
          %v5386 = vunpack.c.l.b16 %v5315
          %v5387 = vunpack.c.l.b16 %v5316
          %v5388 = vunpack.c.l.b16 %v5317
          %v5389 = vunpack.c.l.b16 %v5318
          %v5390 = vunpack.c.l.b16 %v5319
          %v5391 = vpack.c.b16 %v5360, %v5359
          %v5392 = vpack.c.b16 %v5362, %v5361
          %v5393 = vpack.c.b16 %v5364, %v5363
          %v5394 = vpack.c.b16 %v5366, %v5365
          %v5395 = vpack.c.b16 %v5368, %v5367
          %v5396 = vpack.c.b16 %v5370, %v5369
          %v5397 = vpack.c.b16 %v5372, %v5371
          %v5398 = vpack.c.b16 %v5374, %v5373
          %v5399 = vpack.c.b16 %v5376, %v5375
          %v5400 = vpack.c.b16 %v5378, %v5377
          %v5401 = vpack.c.b16 %v5380, %v5379
          %v5402 = vpack.c.b16 %v5382, %v5381
          %v5403 = vpack.c.b16 %v5384, %v5383
          %v5404 = vpack.c.b16 %v5386, %v5385
          %v5405 = vpack.c.b16 %v5388, %v5387
          %v5406 = vpack.c.b16 %v5390, %v5389
          %5423 = vmatprep.subr.bf16.mxu0 0
          %5424 = vmatpush1.bf16.msra.mxu0 %v5398
          %5425 = vmatprep.subr.bf16.mxu0 0
          %5426 = vmatpush1.bf16.msra.mxu0 %v5397
          %5427 = vmatprep.subr.bf16.mxu0 0
          %5428 = vmatpush1.bf16.msra.mxu0 %v5396
          %5429 = vmatprep.subr.bf16.mxu0 0
          %5430 = vmatpush1.bf16.msra.mxu0 %v5395
          %5431 = vmatprep.subr.bf16.mxu0 0
          %5432 = vmatpush1.bf16.msra.mxu0 %v5394
          %5433 = vmatprep.subr.bf16.mxu0 0
          %5434 = vmatpush1.bf16.msra.mxu0 %v5393
          %5435 = vmatprep.subr.bf16.mxu0 0
          %5436 = vmatpush1.bf16.msra.mxu0 %v5392
          %5437 = vmatprep.subr.bf16.mxu0 0
          %5438 = vmatpush1.bf16.msra.mxu0 %v5391
          %5439 = vmatprep.subr.bf16.mxu0 0
          %5440 = vmatpush2.bf16.msra.mxu0 %v5406
          %5441 = vmatprep.subr.bf16.mxu0 0
          %5442 = vmatpush2.bf16.msra.mxu0 %v5405
          %5443 = vmatprep.subr.bf16.mxu0 0
          %5444 = vmatpush2.bf16.msra.mxu0 %v5404
          %5445 = vmatprep.subr.bf16.mxu0 0
          %5446 = vmatpush2.bf16.msra.mxu0 %v5403
          %5447 = vmatprep.subr.bf16.mxu0 0
          %5448 = vmatpush2.bf16.msra.mxu0 %v5402
          %5449 = vmatprep.subr.bf16.mxu0 0
          %5450 = vmatpush2.bf16.msra.mxu0 %v5401
          %5451 = vmatprep.subr.bf16.mxu0 0
          %5452 = vmatpush2.bf16.msra.mxu0 %v5400
          %5453 = vmatprep.subr.bf16.mxu0 0
          %5454 = vmatpush2.bf16.msra.mxu0 %v5399
          %5455 = vmatprep.mubr.bf16.mxu0 %v5287
          %5456 = vmatmul.mubr.bf16.gmra.mxu0 %v5286
          %v5457 = vpop.f32.mrf.mxu0
          %v5458 = vadd.f32 %v5325, %v5457
          %v5459 = vpop.f32.mrf.mxu0
          %v5460 = vpop.f32.mrf.mxu0
          %v5461 = vadd.f32 %v5325, %v5460
          %v5462 = vpop.f32.mrf.mxu0
          %5463 = vdwg.mxu0
          %5464 = vmax.xlane.f32.xlu0 %v5458
          %v5465 = vpop.xlane.xlu0 %5464
          %5466 = vmax.xlane.f32.xlu0 %v5461
          %v5467 = vpop.xlane.xlu0 %5466
          %v5468 = vsub.f32 %v5458, %v5465
          %v5469 = vsub.f32 %v5461, %v5467
          %v5470 = vmul.f32 %v5468, 1.442695
          %v5471 = vpow.pop %v5470
          %v5472 = vmul.f32 %v5469, 1.442695
          %v5473 = vpow.pop %v5472
          %5474 = vadd.xlane.f32.xlu0 %v5471
          %v5475 = vpop.xlane.xlu0 %5474
          %5476 = vadd.xlane.f32.xlu0 %v5473
          %v5477 = vpop.xlane.xlu0 %5476
          %v5478 = vrcp.pop %v5475
          %v5479 = vmul.f32 %v5471, %v5478
          %v5480 = vrcp.pop %v5477
          %v5481 = vmul.f32 %v5473, %v5480
          %5482 = vst [vmem:[%s26] sm:$0xff] %v5479
          %5483 = vst [vmem:[%s26 + $0x8] sm:$0xff] %v5481
        $region204: #{sentiment_classifier_forward.1} parent=123 // pred_fallthru
          _
        // Predicated region
        $region205: #{sentiment_classifier_forward.1} parent=123 // pred_check
          %p5484 = pneg %p661
        $region206: #{sentiment_classifier_forward.1} parent=123 // pred_check_branch
          %5486 = sbr.rel (%p5484) target = $region208
        $region207: #{sentiment_classifier_forward.1} parent=123 // pred_region
          _
        $region208: #{sentiment_classifier_forward.1} parent=123 // pred_fallthru
          _
        // Predicated region
        $region209: #{sentiment_classifier_forward.1} parent=123 // pred_check
          %p5487 = pneg %p661
        $region210: #{sentiment_classifier_forward.1} parent=123 // pred_check_branch
          %5489 = sbr.rel (%p5487) target = $region212
        $region211: #{sentiment_classifier_forward.1} parent=123 // pred_region
          _
        $region212: #{sentiment_classifier_forward.1} parent=123 // pred_fallthru
          _
      $region124: #{sentiment_classifier_forward.1} parent=5 // pred_fallthru
        _
      %p5490 = scmp.le.s32.totalorder 2, %s37
      // Predicated region
      $region213: #{sentiment_classifier_forward.1} parent=5 // pred_check
        %p5491 = pneg %p5490
      $region214: #{sentiment_classifier_forward.1} parent=5 // pred_check_branch
        %5493 = sbr.rel (%p5491) target = $region216
      $region215: #{sentiment_classifier_forward.1} parent=5 // pred_region
        %s5494 = ssub.s32 %s37, 2
      $region216: #{sentiment_classifier_forward.1} parent=5 // pred_fallthru
        _
    $region6: #{sentiment_classifier_forward.1} parent=1 // loop_footer
      %s41 = sadd.s32 1, %s37
    $region7: #{sentiment_classifier_forward.1} parent=1 // loop_footer_branch
      %36 = sbr.rel target = $region3
    $region8: #{sentiment_classifier_forward.1} parent=1 // loop_exit
      _
    %5495 = vsyncpa [#allocation4], 1
    %s5496 = scalar_lea.sflag [#allocation4], 1
    %5497 = vsyncpa %s5496, 1
    %5498 = vsyncpa [#allocation6], 1
    %5499 = vsyncpa [#allocation19], 1
    %5500 = vsyncpa [#allocation22], 1
    %5501 = vsyncpa [#allocation25], 1

</llo_original>
